<compile_context>
chip_gen: v7x
topology: tpu7x:2x2x1
jax: 0.10.0
libtpu: 0.0.40
codegen_flags: <defaults>
</compile_context>

<pallas_src>
import functools

import jax
import jax.numpy as jnp
from jax import lax
from jax.experimental import pallas as pl
from jax.experimental.pallas import tpu as pltpu

_LANE = 128  # lane tile width == halo size, keeps all centre stores lane-aligned


def _round_up(x, m):
    return (x + m - 1) // m * m


def _bottleneck_fused_kernel(x_ref, w1_ref, b1_ref, w2_ref, b2_ref,
                             w3a_ref, w3b_ref, b3_ref, o_ref,
                             xpad_ref, acc3_ref, *, H, W, cin1, cin2):
    HW = H * W
    PAD = _LANE
    Cout = o_ref.shape[1]

    # Zero the halo strips every grid step (centre is rewritten per conv).
    # Do NOT guard with program_id==0: megacore shards the grid across cores.
    nrow = xpad_ref.shape[0]
    xpad_ref[:, 0:PAD] = jnp.zeros((nrow, PAD), jnp.float32)
    xpad_ref[:, PAD + HW:2 * PAD + HW] = jnp.zeros((nrow, PAD), jnp.float32)

    # Row-wrap masks for the horizontal taps (dw = -1 / +1): kill values that
    # would otherwise wrap to the previous/next image row. Kept in f32.
    col_w = lax.broadcasted_iota(jnp.int32, (1, HW), 1) % W
    mask_l = col_w >= 1          # reading column w-1 is valid
    mask_r = col_w <= W - 2      # reading column w+1 is valid

    tap_offs = [(dh * W + dw, dw) for dh in (-1, 0, 1) for dw in (-1, 0, 1)]

    def tap(cin, t):
        # Flat lane-offset view of the halo-padded activation for tap t.
        off, dw = tap_offs[t]
        v = xpad_ref[0:cin, PAD + off:PAD + off + HW]        # f32 view
        if dw == -1:
            v = jnp.where(mask_l, v, 0.0)
        elif dw == 1:
            v = jnp.where(mask_r, v, 0.0)
        return v.astype(jnp.bfloat16)                        # bf16 into the MXU

    def conv_acc(cin, w_ref, acc, w3_ref=None):
        """3x3 'same' conv as 9 accumulating bf16 MXU matmuls off the tap
        views (no im2col buffer).  Optionally also accumulates conv_3's
        contribution for the same input (concat-conv fusion)."""
        acc3 = jnp.zeros((Cout, HW), jnp.float32) if w3_ref is not None else None
        for t in range(9):
            v = tap(cin, t)
            acc = acc + jnp.dot(w_ref[:, t * cin:(t + 1) * cin], v,
                                preferred_element_type=jnp.float32)
            if w3_ref is not None:
                acc3 = acc3 + jnp.dot(w3_ref[:, t * cin:(t + 1) * cin], v,
                                      preferred_element_type=jnp.float32)
        return acc, acc3

    def store_act(y):
        # Store bias+ReLU result straight into the halo-scratch centre.
        xpad_ref[0:Cout, PAD:PAD + HW] = y

    # Bias broadcasts hoisted: one per conv weight (conv_2 is used 4x).
    b1_full = jnp.broadcast_to(b1_ref[...], (Cout, HW))
    b2_full = jnp.broadcast_to(b2_ref[...], (Cout, HW))
    b3_full = jnp.broadcast_to(b3_ref[...], (Cout, HW))

    # ---- the whole Bottleneck, all intermediates on-chip ---------------------
    xpad_ref[0:cin1, PAD:PAD + HW] = x_ref[0]

    y, _ = conv_acc(cin1, w1_ref, b1_full)               # conv_1 + ReLU
    store_act(jnp.maximum(y, 0.0))

    y, _ = conv_acc(cin2, w2_ref, b2_full)               # conv_2 + ReLU
    store_act(jnp.maximum(y, 0.0))                       # -> x1 (Dropout = id)

    # conv_2(x1) + ReLU, fused with conv_3's x1-half (cat([x1,x2]) never built).
    y, a3 = conv_acc(cin2, w2_ref, b2_full, w3_ref=w3a_ref)
    acc3_ref[...] = a3 + b3_full                         # park conv_3 partial
    store_act(jnp.maximum(y, 0.0))

    y, _ = conv_acc(cin2, w2_ref, b2_full)               # conv_2 + ReLU
    store_act(jnp.maximum(y, 0.0))                       # -> x2 (Dropout = id)

    y, _ = conv_acc(cin2, w3b_ref, acc3_ref[...])        # conv_3 (x2-half) + ReLU
    store_act(jnp.maximum(y, 0.0))

    y, _ = conv_acc(cin2, w2_ref, b2_full)               # conv_2 + ReLU
    o_ref[0] = jnp.maximum(y, 0.0).astype(o_ref.dtype)   # Dropout -> identity


def _pack_weight(w_oihw, cin_pad):
    """(Cout, Cin, 3, 3) torch layout -> (Cout, 9*cin_pad) bf16, columns ordered
    (kh, kw, ci) to match the kernel's tap ordering."""
    co, ci, kh, kw = w_oihw.shape
    w = jnp.transpose(w_oihw, (0, 2, 3, 1))              # (co, kh, kw, ci)
    if cin_pad > ci:
        w = jnp.pad(w, ((0, 0), (0, 0), (0, 0), (0, cin_pad - ci)))
    return w.reshape(co, kh * kw * cin_pad).astype(jnp.bfloat16)


def bottleneck_forward(params, x_nchw):
    """Bottleneck.forward (eval-mode dropout). NCHW in / NCHW out."""
    N, Cin, H, W = x_nchw.shape
    HW = H * W
    w1, b1 = params["conv_1"]
    w2, b2 = params["conv_2"]
    w3, b3 = params["conv_3"]
    Cout = w1.shape[0]
    cin1 = _round_up(Cin, 8)          # pad input channels to a sublane multiple
    cin2 = w2.shape[1]                # == Cout for this module

    assert HW % _LANE == 0, "H*W must be a multiple of 128 for lane-dense tiles"
    assert W + 1 <= _LANE, "halo must cover the largest tap offset"
    assert Cout % 8 == 0 and cin2 % 8 == 0 and cin2 == Cout
    assert w3.shape[1] == 2 * cin2

    # NCHW -> (N, C, H*W): channels on sublanes, flattened space on lanes.
    x_flat = x_nchw.reshape(N, Cin, HW).astype(jnp.float32)
    if cin1 > Cin:
        x_flat = jnp.pad(x_flat, ((0, 0), (0, cin1 - Cin), (0, 0)))

    w1p = _pack_weight(w1, cin1)
    w2p = _pack_weight(w2, cin2)
    w3ap = _pack_weight(w3[:, :cin2], cin2)      # conv_3, x1 half of the concat
    w3bp = _pack_weight(w3[:, cin2:], cin2)      # conv_3, x2 half of the concat
    b1p = b1.reshape(Cout, 1).astype(jnp.float32)
    b2p = b2.reshape(Cout, 1).astype(jnp.float32)
    b3p = b3.reshape(Cout, 1).astype(jnp.float32)

    nrow = max(cin1, cin2)
    kernel = functools.partial(_bottleneck_fused_kernel, H=H, W=W,
                               cin1=cin1, cin2=cin2)

    # Explicit VMEM budget: default scoped limit is only 16 MiB (v5e) /
    # 32 MiB (v6e, v7x); the pipeline double-buffers the constant operands.
    def _nb(a):
        return a.size * a.dtype.itemsize
    const_b = sum(_nb(a) for a in (w1p, w2p, w3ap, w3bp, b1p, b2p, b3p))
    io_b = cin1 * HW * 4 + Cout * HW * x_nchw.dtype.itemsize
    scratch_b = nrow * (2 * _LANE + HW) * 4 + Cout * HW * 4
    vmem_limit = int(min(2 * (const_b + io_b) + scratch_b + (4 << 20), 100 << 20))

    out_flat = pl.pallas_call(
        kernel,
        out_shape=jax.ShapeDtypeStruct((N, Cout, HW), x_nchw.dtype),
        grid_spec=pltpu.PrefetchScalarGridSpec(
            num_scalar_prefetch=0,
            grid=(N,),
            in_specs=[
                pl.BlockSpec((1, cin1, HW), lambda n: (n, 0, 0)),
                pl.BlockSpec((Cout, 9 * cin1), lambda n: (0, 0)),
                pl.BlockSpec((Cout, 1), lambda n: (0, 0)),
                pl.BlockSpec((Cout, 9 * cin2), lambda n: (0, 0)),
                pl.BlockSpec((Cout, 1), lambda n: (0, 0)),
                pl.BlockSpec((Cout, 9 * cin2), lambda n: (0, 0)),
                pl.BlockSpec((Cout, 9 * cin2), lambda n: (0, 0)),
                pl.BlockSpec((Cout, 1), lambda n: (0, 0)),
            ],
            out_specs=pl.BlockSpec((1, Cout, HW), lambda n: (n, 0, 0)),
            scratch_shapes=[
                pltpu.VMEM((nrow, 2 * _LANE + HW), jnp.float32),  # halo scratch
                pltpu.VMEM((Cout, HW), jnp.float32),              # conv_3 partial
            ],
        ),
        compiler_params=pltpu.CompilerParams(
            dimension_semantics=("parallel",),
            vmem_limit_bytes=vmem_limit),
    )(x_flat, w1p, b1p, w2p, b2p, w3ap, w3bp, b3p)

    return out_flat.reshape(N, Cout, H, W)


def init_bottleneck_params(key, filters=4):
    """Deterministic params in PyTorch layout: OIHW weights, (Cout,) bias."""
    in_ch = filters
    out_ch = filters * 2
    shapes = {
        "conv_1": (in_ch, out_ch),
        "conv_2": (out_ch, out_ch),
        "conv_3": (2 * out_ch, out_ch),
    }
    params = {}
    for i, (name, (ci, co)) in enumerate(shapes.items()):
        kw_key, kb_key = jax.random.split(jax.random.fold_in(key, i))
        w = jax.random.normal(kw_key, (co, ci, 3, 3), jnp.float32) * 0.1
        b = jax.random.normal(kb_key, (co,), jnp.float32) * 0.1
        params[name] = (w, b)
    return params


# ----------------------------- pure-JAX reference ----------------------------
def _conv_ref(x, w_oihw, b, relu=True):
    y = lax.conv_general_dilated(
        x, w_oihw, window_strides=(1, 1), padding="SAME",
        dimension_numbers=("NCHW", "OIHW", "NCHW"))
    y = y + b.reshape(1, -1, 1, 1)
    return jnp.maximum(y, 0.0) if relu else y


def bottleneck_ref(params, x_nchw):
    w1, b1 = params["conv_1"]
    w2, b2 = params["conv_2"]
    w3, b3 = params["conv_3"]
    x = _conv_ref(x_nchw, w1, b1)
    x = _conv_ref(x, w2, b2)
    x1 = x
    x = _conv_ref(x1, w2, b2)
    x = _conv_ref(x, w2, b2)
    x2 = x
    x = _conv_ref(jnp.concatenate([x1, x2], axis=1), w3, b3)
    x = _conv_ref(x, w2, b2)
    return x


if __name__ == "__main__":
    key = jax.random.PRNGKey(0)
    filters = 4          # small synthetic config (PyTorch default is 256)
    N, H, W = 2, 16, 16

    params = init_bottleneck_params(key, filters=filters)
    x = jax.random.normal(jax.random.fold_in(key, 100),
                          (N, filters, H, W), jnp.float32)   # NCHW like torch

    fwd = jax.jit(bottleneck_forward)
    out = jax.block_until_ready(fwd(params, x))

    ref = jax.block_until_ready(bottleneck_ref(params, x))
    assert out.shape == (N, 2 * filters, H, W), out.shape
    # bf16 MXU path -> loosened tolerance vs. the f32 reference.
    err = float(jnp.max(jnp.abs(out - ref)))
    assert bool(jnp.allclose(out, ref, atol=5e-2, rtol=5e-2)), f"max|err|={err}"
    print("KERNEL_OK")
</pallas_src>

<mosaic_0001>
module attributes {stable_mosaic.version = 11 : i64} {
  func.func @_bottleneck_fused_kernel(%arg0: i32, %arg1: memref<1x8x256xf32, #tpu.memory_space<vmem>>, %arg2: memref<8x72xbf16, #tpu.memory_space<vmem>>, %arg3: memref<8x1xf32, #tpu.memory_space<vmem>>, %arg4: memref<8x72xbf16, #tpu.memory_space<vmem>>, %arg5: memref<8x1xf32, #tpu.memory_space<vmem>>, %arg6: memref<8x72xbf16, #tpu.memory_space<vmem>>, %arg7: memref<8x72xbf16, #tpu.memory_space<vmem>>, %arg8: memref<8x1xf32, #tpu.memory_space<vmem>>, %arg9: memref<1x8x256xf32, #tpu.memory_space<vmem>>, %arg10: memref<8x512xf32, #tpu.memory_space<vmem>>, %arg11: memref<8x256xf32, #tpu.memory_space<vmem>>) attributes {dimension_semantics = [#tpu.dimension_semantics<parallel>], iteration_bounds = array<i64: 2>, scalar_prefetch = 0 : i64, scratch_operands = 2 : i64, tpu.core_type = #tpu.core_type<tc>, window_params = [{transform_indices = @transform_0, window_bounds = array<i64: 1, 8, 256>}, {pipeline_mode = #tpu.pipeline_mode<synchronous>, transform_indices = @transform_1, window_bounds = array<i64: 8, 72>}, {pipeline_mode = #tpu.pipeline_mode<synchronous>, transform_indices = @transform_2, window_bounds = array<i64: 8, 1>}, {pipeline_mode = #tpu.pipeline_mode<synchronous>, transform_indices = @transform_3, window_bounds = array<i64: 8, 72>}, {pipeline_mode = #tpu.pipeline_mode<synchronous>, transform_indices = @transform_4, window_bounds = array<i64: 8, 1>}, {pipeline_mode = #tpu.pipeline_mode<synchronous>, transform_indices = @transform_5, window_bounds = array<i64: 8, 72>}, {pipeline_mode = #tpu.pipeline_mode<synchronous>, transform_indices = @transform_6, window_bounds = array<i64: 8, 72>}, {pipeline_mode = #tpu.pipeline_mode<synchronous>, transform_indices = @transform_7, window_bounds = array<i64: 8, 1>}, {transform_indices = @transform_8, window_bounds = array<i64: 1, 8, 256>}]} {
    %cst = arith.constant 0.000000e+00 : f32
    %0 = vector.broadcast %cst : f32 to vector<8x128xf32>
    %c0 = arith.constant 0 : index
    %c0_0 = arith.constant 0 : index
    %1 = vector.load %arg10[%c0, %c0_0] : memref<8x512xf32, #tpu.memory_space<vmem>>, vector<8x128xf32>
    tpu.vector_store %arg10[%c0, %c0_0], %0 {strides = array<i32>} : memref<8x512xf32, #tpu.memory_space<vmem>>, vector<8x128xf32>,
    %cst_1 = arith.constant 0.000000e+00 : f32
    %2 = vector.broadcast %cst_1 : f32 to vector<8x128xf32>
    %c0_2 = arith.constant 0 : index
    %c384 = arith.constant 384 : index
    %3 = vector.load %arg10[%c0_2, %c384] : memref<8x512xf32, #tpu.memory_space<vmem>>, vector<8x128xf32>
    tpu.vector_store %arg10[%c0_2, %c384], %2 {strides = array<i32>} : memref<8x512xf32, #tpu.memory_space<vmem>>, vector<8x128xf32>,
    %4 = tpu.iota {dimensions = array<i32: 1>} : vector<1x256xi32>
    %c16_i32 = arith.constant 16 : i32
    %c0_i32 = arith.constant 0 : i32
    %5 = arith.cmpi eq, %c16_i32, %c0_i32 : i32
    %c1_i32 = arith.constant 1 : i32
    %6 = arith.select %5, %c1_i32, %c16_i32 : i32
    %7 = vector.broadcast %6 : i32 to vector<1x256xi32>
    %8 = arith.remsi %4, %7 : vector<1x256xi32>
    %c0_i32_3 = arith.constant 0 : i32
    %9 = vector.broadcast %c0_i32_3 : i32 to vector<1x256xi32>
    %10 = arith.cmpi ne, %8, %9 : vector<1x256xi32>
    %c0_i32_4 = arith.constant 0 : i32
    %11 = vector.broadcast %c0_i32_4 : i32 to vector<1x256xi32>
    %12 = arith.cmpi slt, %8, %11 : vector<1x256xi32>
    %c0_i32_5 = arith.constant 0 : i32
    %13 = arith.cmpi slt, %6, %c0_i32_5 : i32
    %14 = vector.broadcast %13 : i1 to vector<1x256xi1>
    %15 = vector.broadcast %14 : vector<1x256xi1> to vector<1x256xi1>
    %16 = arith.xori %12, %15 : vector<1x256xi1>
    %17 = arith.andi %16, %10 : vector<1x256xi1>
    %18 = vector.broadcast %6 : i32 to vector<1x256xi32>
    %19 = arith.addi %8, %18 : vector<1x256xi32>
    %20 = arith.select %17, %19, %8 : vector<1x256xi1>, vector<1x256xi32>
    %c1_i32_6 = arith.constant 1 : i32
    %21 = vector.broadcast %c1_i32_6 : i32 to vector<1x256xi32>
    %22 = arith.cmpi sge, %20, %21 : vector<1x256xi32>
    %c14_i32 = arith.constant 14 : i32
    %23 = vector.broadcast %c14_i32 : i32 to vector<1x256xi32>
    %24 = arith.cmpi sle, %20, %23 : vector<1x256xi32>
    %c0_7 = arith.constant 0 : index
    %c0_8 = arith.constant 0 : index
    %25 = vector.load %arg3[%c0_7, %c0_8] : memref<8x1xf32, #tpu.memory_space<vmem>>, vector<8x1xf32>
    %26 = vector.shape_cast %25 : vector<8x1xf32> to vector<8x1xf32>
    %27 = vector.broadcast %26 : vector<8x1xf32> to vector<8x256xf32>
    %c0_9 = arith.constant 0 : index
    %c0_10 = arith.constant 0 : index
    %28 = vector.load %arg5[%c0_9, %c0_10] : memref<8x1xf32, #tpu.memory_space<vmem>>, vector<8x1xf32>
    %29 = vector.shape_cast %28 : vector<8x1xf32> to vector<8x1xf32>
    %30 = vector.broadcast %29 : vector<8x1xf32> to vector<8x256xf32>
    %c0_11 = arith.constant 0 : index
    %c0_12 = arith.constant 0 : index
    %31 = vector.load %arg8[%c0_11, %c0_12] : memref<8x1xf32, #tpu.memory_space<vmem>>, vector<8x1xf32>
    %32 = vector.shape_cast %31 : vector<8x1xf32> to vector<8x1xf32>
    %33 = vector.broadcast %32 : vector<8x1xf32> to vector<8x256xf32>
    %c0_13 = arith.constant 0 : index
    %c0_14 = arith.constant 0 : index
    %c0_15 = arith.constant 0 : index
    %34 = vector.load %arg1[%c0_13, %c0_14, %c0_15] : memref<1x8x256xf32, #tpu.memory_space<vmem>>, vector<1x8x256xf32>
    %35 = vector.shape_cast %34 : vector<1x8x256xf32> to vector<8x256xf32>
    %c0_16 = arith.constant 0 : index
    %c128 = arith.constant 128 : index
    %36 = vector.load %arg10[%c0_16, %c128] : memref<8x512xf32, #tpu.memory_space<vmem>>, vector<8x256xf32>
    tpu.vector_store %arg10[%c0_16, %c128], %35 {strides = array<i32>} : memref<8x512xf32, #tpu.memory_space<vmem>>, vector<8x256xf32>,
    %c0_17 = arith.constant 0 : index
    %c111 = arith.constant 111 : index
    %37 = vector.load %arg10[%c0_17, %c111] : memref<8x512xf32, #tpu.memory_space<vmem>>, vector<8x256xf32>
    %cst_18 = arith.constant 0.000000e+00 : f32
    %38 = vector.shape_cast %22 : vector<1x256xi1> to vector<1x256xi1>
    %39 = vector.broadcast %38 : vector<1x256xi1> to vector<8x256xi1>
    %40 = vector.broadcast %cst_18 : f32 to vector<8x256xf32>
    %41 = arith.select %39, %37, %40 : vector<8x256xi1>, vector<8x256xf32>
    %42 = arith.truncf %41 : vector<8x256xf32> to vector<8x256xbf16>
    %c0_19 = arith.constant 0 : index
    %c0_20 = arith.constant 0 : index
    %43 = vector.load %arg2[%c0_19, %c0_20] : memref<8x72xbf16, #tpu.memory_space<vmem>>, vector<8x8xbf16>
    %cst_21 = arith.constant dense<0.000000e+00> : vector<8x256xf32>
    %44 = tpu.matmul %43, %42, %cst_21 {dimension_numbers = #tpu.dot_dimension_numbers<[1], [0], [0], [1], [0, 0, 1, 1], [], []>} : vector<8x8xbf16>, vector<8x256xbf16>, vector<8x256xf32> -> vector<8x256xf32>
    %45 = arith.addf %27, %44 : vector<8x256xf32>
    %c0_22 = arith.constant 0 : index
    %c112 = arith.constant 112 : index
    %46 = vector.load %arg10[%c0_22, %c112] : memref<8x512xf32, #tpu.memory_space<vmem>>, vector<8x256xf32>
    %47 = arith.truncf %46 : vector<8x256xf32> to vector<8x256xbf16>
    %c0_23 = arith.constant 0 : index
    %c8 = arith.constant 8 : index
    %48 = vector.load %arg2[%c0_23, %c8] : memref<8x72xbf16, #tpu.memory_space<vmem>>, vector<8x8xbf16>
    %cst_24 = arith.constant dense<0.000000e+00> : vector<8x256xf32>
    %49 = tpu.matmul %48, %47, %cst_24 {dimension_numbers = #tpu.dot_dimension_numbers<[1], [0], [0], [1], [0, 0, 1, 1], [], []>} : vector<8x8xbf16>, vector<8x256xbf16>, vector<8x256xf32> -> vector<8x256xf32>
    %50 = arith.addf %45, %49 : vector<8x256xf32>
    %c0_25 = arith.constant 0 : index
    %c113 = arith.constant 113 : index
    %51 = vector.load %arg10[%c0_25, %c113] : memref<8x512xf32, #tpu.memory_space<vmem>>, vector<8x256xf32>
    %cst_26 = arith.constant 0.000000e+00 : f32
    %52 = vector.shape_cast %24 : vector<1x256xi1> to vector<1x256xi1>
    %53 = vector.broadcast %52 : vector<1x256xi1> to vector<8x256xi1>
    %54 = vector.broadcast %cst_26 : f32 to vector<8x256xf32>
    %55 = arith.select %53, %51, %54 : vector<8x256xi1>, vector<8x256xf32>
    %56 = arith.truncf %55 : vector<8x256xf32> to vector<8x256xbf16>
    %c0_27 = arith.constant 0 : index
    %c16 = arith.constant 16 : index
    %57 = vector.load %arg2[%c0_27, %c16] : memref<8x72xbf16, #tpu.memory_space<vmem>>, vector<8x8xbf16>
    %cst_28 = arith.constant dense<0.000000e+00> : vector<8x256xf32>
    %58 = tpu.matmul %57, %56, %cst_28 {dimension_numbers = #tpu.dot_dimension_numbers<[1], [0], [0], [1], [0, 0, 1, 1], [], []>} : vector<8x8xbf16>, vector<8x256xbf16>, vector<8x256xf32> -> vector<8x256xf32>
    %59 = arith.addf %50, %58 : vector<8x256xf32>
    %c0_29 = arith.constant 0 : index
    %c127 = arith.constant 127 : index
    %60 = vector.load %arg10[%c0_29, %c127] : memref<8x512xf32, #tpu.memory_space<vmem>>, vector<8x256xf32>
    %cst_30 = arith.constant 0.000000e+00 : f32
    %61 = vector.shape_cast %22 : vector<1x256xi1> to vector<1x256xi1>
    %62 = vector.broadcast %61 : vector<1x256xi1> to vector<8x256xi1>
    %63 = vector.broadcast %cst_30 : f32 to vector<8x256xf32>
    %64 = arith.select %62, %60, %63 : vector<8x256xi1>, vector<8x256xf32>
    %65 = arith.truncf %64 : vector<8x256xf32> to vector<8x256xbf16>
    %c0_31 = arith.constant 0 : index
    %c24 = arith.constant 24 : index
    %66 = vector.load %arg2[%c0_31, %c24] : memref<8x72xbf16, #tpu.memory_space<vmem>>, vector<8x8xbf16>
    %cst_32 = arith.constant dense<0.000000e+00> : vector<8x256xf32>
    %67 = tpu.matmul %66, %65, %cst_32 {dimension_numbers = #tpu.dot_dimension_numbers<[1], [0], [0], [1], [0, 0, 1, 1], [], []>} : vector<8x8xbf16>, vector<8x256xbf16>, vector<8x256xf32> -> vector<8x256xf32>
    %68 = arith.addf %59, %67 : vector<8x256xf32>
    %c0_33 = arith.constant 0 : index
    %c128_34 = arith.constant 128 : index
    %69 = vector.load %arg10[%c0_33, %c128_34] : memref<8x512xf32, #tpu.memory_space<vmem>>, vector<8x256xf32>
    %70 = arith.truncf %69 : vector<8x256xf32> to vector<8x256xbf16>
    %c0_35 = arith.constant 0 : index
    %c32 = arith.constant 32 : index
    %71 = vector.load %arg2[%c0_35, %c32] : memref<8x72xbf16, #tpu.memory_space<vmem>>, vector<8x8xbf16>
    %cst_36 = arith.constant dense<0.000000e+00> : vector<8x256xf32>
    %72 = tpu.matmul %71, %70, %cst_36 {dimension_numbers = #tpu.dot_dimension_numbers<[1], [0], [0], [1], [0, 0, 1, 1], [], []>} : vector<8x8xbf16>, vector<8x256xbf16>, vector<8x256xf32> -> vector<8x256xf32>
    %73 = arith.addf %68, %72 : vector<8x256xf32>
    %c0_37 = arith.constant 0 : index
    %c129 = arith.constant 129 : index
    %74 = vector.load %arg10[%c0_37, %c129] : memref<8x512xf32, #tpu.memory_space<vmem>>, vector<8x256xf32>
    %cst_38 = arith.constant 0.000000e+00 : f32
    %75 = vector.shape_cast %24 : vector<1x256xi1> to vector<1x256xi1>
    %76 = vector.broadcast %75 : vector<1x256xi1> to vector<8x256xi1>
    %77 = vector.broadcast %cst_38 : f32 to vector<8x256xf32>
    %78 = arith.select %76, %74, %77 : vector<8x256xi1>, vector<8x256xf32>
    %79 = arith.truncf %78 : vector<8x256xf32> to vector<8x256xbf16>
    %c0_39 = arith.constant 0 : index
    %c40 = arith.constant 40 : index
    %80 = vector.load %arg2[%c0_39, %c40] : memref<8x72xbf16, #tpu.memory_space<vmem>>, vector<8x8xbf16>
    %cst_40 = arith.constant dense<0.000000e+00> : vector<8x256xf32>
    %81 = tpu.matmul %80, %79, %cst_40 {dimension_numbers = #tpu.dot_dimension_numbers<[1], [0], [0], [1], [0, 0, 1, 1], [], []>} : vector<8x8xbf16>, vector<8x256xbf16>, vector<8x256xf32> -> vector<8x256xf32>
    %82 = arith.addf %73, %81 : vector<8x256xf32>
    %c0_41 = arith.constant 0 : index
    %c143 = arith.constant 143 : index
    %83 = vector.load %arg10[%c0_41, %c143] : memref<8x512xf32, #tpu.memory_space<vmem>>, vector<8x256xf32>
    %cst_42 = arith.constant 0.000000e+00 : f32
    %84 = vector.shape_cast %22 : vector<1x256xi1> to vector<1x256xi1>
    %85 = vector.broadcast %84 : vector<1x256xi1> to vector<8x256xi1>
    %86 = vector.broadcast %cst_42 : f32 to vector<8x256xf32>
    %87 = arith.select %85, %83, %86 : vector<8x256xi1>, vector<8x256xf32>
    %88 = arith.truncf %87 : vector<8x256xf32> to vector<8x256xbf16>
    %c0_43 = arith.constant 0 : index
    %c48 = arith.constant 48 : index
    %89 = vector.load %arg2[%c0_43, %c48] : memref<8x72xbf16, #tpu.memory_space<vmem>>, vector<8x8xbf16>
    %cst_44 = arith.constant dense<0.000000e+00> : vector<8x256xf32>
    %90 = tpu.matmul %89, %88, %cst_44 {dimension_numbers = #tpu.dot_dimension_numbers<[1], [0], [0], [1], [0, 0, 1, 1], [], []>} : vector<8x8xbf16>, vector<8x256xbf16>, vector<8x256xf32> -> vector<8x256xf32>
    %91 = arith.addf %82, %90 : vector<8x256xf32>
    %c0_45 = arith.constant 0 : index
    %c144 = arith.constant 144 : index
    %92 = vector.load %arg10[%c0_45, %c144] : memref<8x512xf32, #tpu.memory_space<vmem>>, vector<8x256xf32>
    %93 = arith.truncf %92 : vector<8x256xf32> to vector<8x256xbf16>
    %c0_46 = arith.constant 0 : index
    %c56 = arith.constant 56 : index
    %94 = vector.load %arg2[%c0_46, %c56] : memref<8x72xbf16, #tpu.memory_space<vmem>>, vector<8x8xbf16>
    %cst_47 = arith.constant dense<0.000000e+00> : vector<8x256xf32>
    %95 = tpu.matmul %94, %93, %cst_47 {dimension_numbers = #tpu.dot_dimension_numbers<[1], [0], [0], [1], [0, 0, 1, 1], [], []>} : vector<8x8xbf16>, vector<8x256xbf16>, vector<8x256xf32> -> vector<8x256xf32>
    %96 = arith.addf %91, %95 : vector<8x256xf32>
    %c0_48 = arith.constant 0 : index
    %c145 = arith.constant 145 : index
    %97 = vector.load %arg10[%c0_48, %c145] : memref<8x512xf32, #tpu.memory_space<vmem>>, vector<8x256xf32>
    %cst_49 = arith.constant 0.000000e+00 : f32
    %98 = vector.shape_cast %24 : vector<1x256xi1> to vector<1x256xi1>
    %99 = vector.broadcast %98 : vector<1x256xi1> to vector<8x256xi1>
    %100 = vector.broadcast %cst_49 : f32 to vector<8x256xf32>
    %101 = arith.select %99, %97, %100 : vector<8x256xi1>, vector<8x256xf32>
    %102 = arith.truncf %101 : vector<8x256xf32> to vector<8x256xbf16>
    %c0_50 = arith.constant 0 : index
    %c64 = arith.constant 64 : index
    %103 = vector.load %arg2[%c0_50, %c64] : memref<8x72xbf16, #tpu.memory_space<vmem>>, vector<8x8xbf16>
    %cst_51 = arith.constant dense<0.000000e+00> : vector<8x256xf32>
    %104 = tpu.matmul %103, %102, %cst_51 {dimension_numbers = #tpu.dot_dimension_numbers<[1], [0], [0], [1], [0, 0, 1, 1], [], []>} : vector<8x8xbf16>, vector<8x256xbf16>, vector<8x256xf32> -> vector<8x256xf32>
    %105 = arith.addf %96, %104 : vector<8x256xf32>
    %cst_52 = arith.constant 0.000000e+00 : f32
    %106 = vector.broadcast %cst_52 : f32 to vector<8x256xf32>
    %107 = arith.maximumf %105, %106 : vector<8x256xf32>
    %c0_53 = arith.constant 0 : index
    %c128_54 = arith.constant 128 : index
    %108 = vector.load %arg10[%c0_53, %c128_54] : memref<8x512xf32, #tpu.memory_space<vmem>>, vector<8x256xf32>
    tpu.vector_store %arg10[%c0_53, %c128_54], %107 {strides = array<i32>} : memref<8x512xf32, #tpu.memory_space<vmem>>, vector<8x256xf32>,
    %c0_55 = arith.constant 0 : index
    %c111_56 = arith.constant 111 : index
    %109 = vector.load %arg10[%c0_55, %c111_56] : memref<8x512xf32, #tpu.memory_space<vmem>>, vector<8x256xf32>
    %cst_57 = arith.constant 0.000000e+00 : f32
    %110 = vector.shape_cast %22 : vector<1x256xi1> to vector<1x256xi1>
    %111 = vector.broadcast %110 : vector<1x256xi1> to vector<8x256xi1>
    %112 = vector.broadcast %cst_57 : f32 to vector<8x256xf32>
    %113 = arith.select %111, %109, %112 : vector<8x256xi1>, vector<8x256xf32>
    %114 = arith.truncf %113 : vector<8x256xf32> to vector<8x256xbf16>
    %c0_58 = arith.constant 0 : index
    %c0_59 = arith.constant 0 : index
    %115 = vector.load %arg4[%c0_58, %c0_59] : memref<8x72xbf16, #tpu.memory_space<vmem>>, vector<8x8xbf16>
    %cst_60 = arith.constant dense<0.000000e+00> : vector<8x256xf32>
    %116 = tpu.matmul %115, %114, %cst_60 {dimension_numbers = #tpu.dot_dimension_numbers<[1], [0], [0], [1], [0, 0, 1, 1], [], []>} : vector<8x8xbf16>, vector<8x256xbf16>, vector<8x256xf32> -> vector<8x256xf32>
    %117 = arith.addf %30, %116 : vector<8x256xf32>
    %c0_61 = arith.constant 0 : index
    %c112_62 = arith.constant 112 : index
    %118 = vector.load %arg10[%c0_61, %c112_62] : memref<8x512xf32, #tpu.memory_space<vmem>>, vector<8x256xf32>
    %119 = arith.truncf %118 : vector<8x256xf32> to vector<8x256xbf16>
    %c0_63 = arith.constant 0 : index
    %c8_64 = arith.constant 8 : index
    %120 = vector.load %arg4[%c0_63, %c8_64] : memref<8x72xbf16, #tpu.memory_space<vmem>>, vector<8x8xbf16>
    %cst_65 = arith.constant dense<0.000000e+00> : vector<8x256xf32>
    %121 = tpu.matmul %120, %119, %cst_65 {dimension_numbers = #tpu.dot_dimension_numbers<[1], [0], [0], [1], [0, 0, 1, 1], [], []>} : vector<8x8xbf16>, vector<8x256xbf16>, vector<8x256xf32> -> vector<8x256xf32>
    %122 = arith.addf %117, %121 : vector<8x256xf32>
    %c0_66 = arith.constant 0 : index
    %c113_67 = arith.constant 113 : index
    %123 = vector.load %arg10[%c0_66, %c113_67] : memref<8x512xf32, #tpu.memory_space<vmem>>, vector<8x256xf32>
    %cst_68 = arith.constant 0.000000e+00 : f32
    %124 = vector.shape_cast %24 : vector<1x256xi1> to vector<1x256xi1>
    %125 = vector.broadcast %124 : vector<1x256xi1> to vector<8x256xi1>
    %126 = vector.broadcast %cst_68 : f32 to vector<8x256xf32>
    %127 = arith.select %125, %123, %126 : vector<8x256xi1>, vector<8x256xf32>
    %128 = arith.truncf %127 : vector<8x256xf32> to vector<8x256xbf16>
    %c0_69 = arith.constant 0 : index
    %c16_70 = arith.constant 16 : index
    %129 = vector.load %arg4[%c0_69, %c16_70] : memref<8x72xbf16, #tpu.memory_space<vmem>>, vector<8x8xbf16>
    %cst_71 = arith.constant dense<0.000000e+00> : vector<8x256xf32>
    %130 = tpu.matmul %129, %128, %cst_71 {dimension_numbers = #tpu.dot_dimension_numbers<[1], [0], [0], [1], [0, 0, 1, 1], [], []>} : vector<8x8xbf16>, vector<8x256xbf16>, vector<8x256xf32> -> vector<8x256xf32>
    %131 = arith.addf %122, %130 : vector<8x256xf32>
    %c0_72 = arith.constant 0 : index
    %c127_73 = arith.constant 127 : index
    %132 = vector.load %arg10[%c0_72, %c127_73] : memref<8x512xf32, #tpu.memory_space<vmem>>, vector<8x256xf32>
    %cst_74 = arith.constant 0.000000e+00 : f32
    %133 = vector.shape_cast %22 : vector<1x256xi1> to vector<1x256xi1>
    %134 = vector.broadcast %133 : vector<1x256xi1> to vector<8x256xi1>
    %135 = vector.broadcast %cst_74 : f32 to vector<8x256xf32>
    %136 = arith.select %134, %132, %135 : vector<8x256xi1>, vector<8x256xf32>
    %137 = arith.truncf %136 : vector<8x256xf32> to vector<8x256xbf16>
    %c0_75 = arith.constant 0 : index
    %c24_76 = arith.constant 24 : index
    %138 = vector.load %arg4[%c0_75, %c24_76] : memref<8x72xbf16, #tpu.memory_space<vmem>>, vector<8x8xbf16>
    %cst_77 = arith.constant dense<0.000000e+00> : vector<8x256xf32>
    %139 = tpu.matmul %138, %137, %cst_77 {dimension_numbers = #tpu.dot_dimension_numbers<[1], [0], [0], [1], [0, 0, 1, 1], [], []>} : vector<8x8xbf16>, vector<8x256xbf16>, vector<8x256xf32> -> vector<8x256xf32>
    %140 = arith.addf %131, %139 : vector<8x256xf32>
    %c0_78 = arith.constant 0 : index
    %c128_79 = arith.constant 128 : index
    %141 = vector.load %arg10[%c0_78, %c128_79] : memref<8x512xf32, #tpu.memory_space<vmem>>, vector<8x256xf32>
    %142 = arith.truncf %141 : vector<8x256xf32> to vector<8x256xbf16>
    %c0_80 = arith.constant 0 : index
    %c32_81 = arith.constant 32 : index
    %143 = vector.load %arg4[%c0_80, %c32_81] : memref<8x72xbf16, #tpu.memory_space<vmem>>, vector<8x8xbf16>
    %cst_82 = arith.constant dense<0.000000e+00> : vector<8x256xf32>
    %144 = tpu.matmul %143, %142, %cst_82 {dimension_numbers = #tpu.dot_dimension_numbers<[1], [0], [0], [1], [0, 0, 1, 1], [], []>} : vector<8x8xbf16>, vector<8x256xbf16>, vector<8x256xf32> -> vector<8x256xf32>
    %145 = arith.addf %140, %144 : vector<8x256xf32>
    %c0_83 = arith.constant 0 : index
    %c129_84 = arith.constant 129 : index
    %146 = vector.load %arg10[%c0_83, %c129_84] : memref<8x512xf32, #tpu.memory_space<vmem>>, vector<8x256xf32>
    %cst_85 = arith.constant 0.000000e+00 : f32
    %147 = vector.shape_cast %24 : vector<1x256xi1> to vector<1x256xi1>
    %148 = vector.broadcast %147 : vector<1x256xi1> to vector<8x256xi1>
    %149 = vector.broadcast %cst_85 : f32 to vector<8x256xf32>
    %150 = arith.select %148, %146, %149 : vector<8x256xi1>, vector<8x256xf32>
    %151 = arith.truncf %150 : vector<8x256xf32> to vector<8x256xbf16>
    %c0_86 = arith.constant 0 : index
    %c40_87 = arith.constant 40 : index
    %152 = vector.load %arg4[%c0_86, %c40_87] : memref<8x72xbf16, #tpu.memory_space<vmem>>, vector<8x8xbf16>
    %cst_88 = arith.constant dense<0.000000e+00> : vector<8x256xf32>
    %153 = tpu.matmul %152, %151, %cst_88 {dimension_numbers = #tpu.dot_dimension_numbers<[1], [0], [0], [1], [0, 0, 1, 1], [], []>} : vector<8x8xbf16>, vector<8x256xbf16>, vector<8x256xf32> -> vector<8x256xf32>
    %154 = arith.addf %145, %153 : vector<8x256xf32>
    %c0_89 = arith.constant 0 : index
    %c143_90 = arith.constant 143 : index
    %155 = vector.load %arg10[%c0_89, %c143_90] : memref<8x512xf32, #tpu.memory_space<vmem>>, vector<8x256xf32>
    %cst_91 = arith.constant 0.000000e+00 : f32
    %156 = vector.shape_cast %22 : vector<1x256xi1> to vector<1x256xi1>
    %157 = vector.broadcast %156 : vector<1x256xi1> to vector<8x256xi1>
    %158 = vector.broadcast %cst_91 : f32 to vector<8x256xf32>
    %159 = arith.select %157, %155, %158 : vector<8x256xi1>, vector<8x256xf32>
    %160 = arith.truncf %159 : vector<8x256xf32> to vector<8x256xbf16>
    %c0_92 = arith.constant 0 : index
    %c48_93 = arith.constant 48 : index
    %161 = vector.load %arg4[%c0_92, %c48_93] : memref<8x72xbf16, #tpu.memory_space<vmem>>, vector<8x8xbf16>
    %cst_94 = arith.constant dense<0.000000e+00> : vector<8x256xf32>
    %162 = tpu.matmul %161, %160, %cst_94 {dimension_numbers = #tpu.dot_dimension_numbers<[1], [0], [0], [1], [0, 0, 1, 1], [], []>} : vector<8x8xbf16>, vector<8x256xbf16>, vector<8x256xf32> -> vector<8x256xf32>
    %163 = arith.addf %154, %162 : vector<8x256xf32>
    %c0_95 = arith.constant 0 : index
    %c144_96 = arith.constant 144 : index
    %164 = vector.load %arg10[%c0_95, %c144_96] : memref<8x512xf32, #tpu.memory_space<vmem>>, vector<8x256xf32>
    %165 = arith.truncf %164 : vector<8x256xf32> to vector<8x256xbf16>
    %c0_97 = arith.constant 0 : index
    %c56_98 = arith.constant 56 : index
    %166 = vector.load %arg4[%c0_97, %c56_98] : memref<8x72xbf16, #tpu.memory_space<vmem>>, vector<8x8xbf16>
    %cst_99 = arith.constant dense<0.000000e+00> : vector<8x256xf32>
    %167 = tpu.matmul %166, %165, %cst_99 {dimension_numbers = #tpu.dot_dimension_numbers<[1], [0], [0], [1], [0, 0, 1, 1], [], []>} : vector<8x8xbf16>, vector<8x256xbf16>, vector<8x256xf32> -> vector<8x256xf32>
    %168 = arith.addf %163, %167 : vector<8x256xf32>
    %c0_100 = arith.constant 0 : index
    %c145_101 = arith.constant 145 : index
    %169 = vector.load %arg10[%c0_100, %c145_101] : memref<8x512xf32, #tpu.memory_space<vmem>>, vector<8x256xf32>
    %cst_102 = arith.constant 0.000000e+00 : f32
    %170 = vector.shape_cast %24 : vector<1x256xi1> to vector<1x256xi1>
    %171 = vector.broadcast %170 : vector<1x256xi1> to vector<8x256xi1>
    %172 = vector.broadcast %cst_102 : f32 to vector<8x256xf32>
    %173 = arith.select %171, %169, %172 : vector<8x256xi1>, vector<8x256xf32>
    %174 = arith.truncf %173 : vector<8x256xf32> to vector<8x256xbf16>
    %c0_103 = arith.constant 0 : index
    %c64_104 = arith.constant 64 : index
    %175 = vector.load %arg4[%c0_103, %c64_104] : memref<8x72xbf16, #tpu.memory_space<vmem>>, vector<8x8xbf16>
    %cst_105 = arith.constant dense<0.000000e+00> : vector<8x256xf32>
    %176 = tpu.matmul %175, %174, %cst_105 {dimension_numbers = #tpu.dot_dimension_numbers<[1], [0], [0], [1], [0, 0, 1, 1], [], []>} : vector<8x8xbf16>, vector<8x256xbf16>, vector<8x256xf32> -> vector<8x256xf32>
    %177 = arith.addf %168, %176 : vector<8x256xf32>
    %cst_106 = arith.constant 0.000000e+00 : f32
    %178 = vector.broadcast %cst_106 : f32 to vector<8x256xf32>
    %179 = arith.maximumf %177, %178 : vector<8x256xf32>
    %c0_107 = arith.constant 0 : index
    %c128_108 = arith.constant 128 : index
    %180 = vector.load %arg10[%c0_107, %c128_108] : memref<8x512xf32, #tpu.memory_space<vmem>>, vector<8x256xf32>
    tpu.vector_store %arg10[%c0_107, %c128_108], %179 {strides = array<i32>} : memref<8x512xf32, #tpu.memory_space<vmem>>, vector<8x256xf32>,
    %cst_109 = arith.constant 0.000000e+00 : f32
    %181 = vector.broadcast %cst_109 : f32 to vector<8x256xf32>
    %c0_110 = arith.constant 0 : index
    %c111_111 = arith.constant 111 : index
    %182 = vector.load %arg10[%c0_110, %c111_111] : memref<8x512xf32, #tpu.memory_space<vmem>>, vector<8x256xf32>
    %cst_112 = arith.constant 0.000000e+00 : f32
    %183 = vector.shape_cast %22 : vector<1x256xi1> to vector<1x256xi1>
    %184 = vector.broadcast %183 : vector<1x256xi1> to vector<8x256xi1>
    %185 = vector.broadcast %cst_112 : f32 to vector<8x256xf32>
    %186 = arith.select %184, %182, %185 : vector<8x256xi1>, vector<8x256xf32>
    %187 = arith.truncf %186 : vector<8x256xf32> to vector<8x256xbf16>
    %c0_113 = arith.constant 0 : index
    %c0_114 = arith.constant 0 : index
    %188 = vector.load %arg4[%c0_113, %c0_114] : memref<8x72xbf16, #tpu.memory_space<vmem>>, vector<8x8xbf16>
    %cst_115 = arith.constant dense<0.000000e+00> : vector<8x256xf32>
    %189 = tpu.matmul %188, %187, %cst_115 {dimension_numbers = #tpu.dot_dimension_numbers<[1], [0], [0], [1], [0, 0, 1, 1], [], []>} : vector<8x8xbf16>, vector<8x256xbf16>, vector<8x256xf32> -> vector<8x256xf32>
    %190 = arith.addf %30, %189 : vector<8x256xf32>
    %c0_116 = arith.constant 0 : index
    %c0_117 = arith.constant 0 : index
    %191 = vector.load %arg6[%c0_116, %c0_117] : memref<8x72xbf16, #tpu.memory_space<vmem>>, vector<8x8xbf16>
    %cst_118 = arith.constant dense<0.000000e+00> : vector<8x256xf32>
    %192 = tpu.matmul %191, %187, %cst_118 {dimension_numbers = #tpu.dot_dimension_numbers<[1], [0], [0], [1], [0, 0, 1, 1], [], []>} : vector<8x8xbf16>, vector<8x256xbf16>, vector<8x256xf32> -> vector<8x256xf32>
    %193 = arith.addf %181, %192 : vector<8x256xf32>
    %c0_119 = arith.constant 0 : index
    %c112_120 = arith.constant 112 : index
    %194 = vector.load %arg10[%c0_119, %c112_120] : memref<8x512xf32, #tpu.memory_space<vmem>>, vector<8x256xf32>
    %195 = arith.truncf %194 : vector<8x256xf32> to vector<8x256xbf16>
    %c0_121 = arith.constant 0 : index
    %c8_122 = arith.constant 8 : index
    %196 = vector.load %arg4[%c0_121, %c8_122] : memref<8x72xbf16, #tpu.memory_space<vmem>>, vector<8x8xbf16>
    %cst_123 = arith.constant dense<0.000000e+00> : vector<8x256xf32>
    %197 = tpu.matmul %196, %195, %cst_123 {dimension_numbers = #tpu.dot_dimension_numbers<[1], [0], [0], [1], [0, 0, 1, 1], [], []>} : vector<8x8xbf16>, vector<8x256xbf16>, vector<8x256xf32> -> vector<8x256xf32>
    %198 = arith.addf %190, %197 : vector<8x256xf32>
    %c0_124 = arith.constant 0 : index
    %c8_125 = arith.constant 8 : index
    %199 = vector.load %arg6[%c0_124, %c8_125] : memref<8x72xbf16, #tpu.memory_space<vmem>>, vector<8x8xbf16>
    %cst_126 = arith.constant dense<0.000000e+00> : vector<8x256xf32>
    %200 = tpu.matmul %199, %195, %cst_126 {dimension_numbers = #tpu.dot_dimension_numbers<[1], [0], [0], [1], [0, 0, 1, 1], [], []>} : vector<8x8xbf16>, vector<8x256xbf16>, vector<8x256xf32> -> vector<8x256xf32>
    %201 = arith.addf %193, %200 : vector<8x256xf32>
    %c0_127 = arith.constant 0 : index
    %c113_128 = arith.constant 113 : index
    %202 = vector.load %arg10[%c0_127, %c113_128] : memref<8x512xf32, #tpu.memory_space<vmem>>, vector<8x256xf32>
    %cst_129 = arith.constant 0.000000e+00 : f32
    %203 = vector.shape_cast %24 : vector<1x256xi1> to vector<1x256xi1>
    %204 = vector.broadcast %203 : vector<1x256xi1> to vector<8x256xi1>
    %205 = vector.broadcast %cst_129 : f32 to vector<8x256xf32>
    %206 = arith.select %204, %202, %205 : vector<8x256xi1>, vector<8x256xf32>
    %207 = arith.truncf %206 : vector<8x256xf32> to vector<8x256xbf16>
    %c0_130 = arith.constant 0 : index
    %c16_131 = arith.constant 16 : index
    %208 = vector.load %arg4[%c0_130, %c16_131] : memref<8x72xbf16, #tpu.memory_space<vmem>>, vector<8x8xbf16>
    %cst_132 = arith.constant dense<0.000000e+00> : vector<8x256xf32>
    %209 = tpu.matmul %208, %207, %cst_132 {dimension_numbers = #tpu.dot_dimension_numbers<[1], [0], [0], [1], [0, 0, 1, 1], [], []>} : vector<8x8xbf16>, vector<8x256xbf16>, vector<8x256xf32> -> vector<8x256xf32>
    %210 = arith.addf %198, %209 : vector<8x256xf32>
    %c0_133 = arith.constant 0 : index
    %c16_134 = arith.constant 16 : index
    %211 = vector.load %arg6[%c0_133, %c16_134] : memref<8x72xbf16, #tpu.memory_space<vmem>>, vector<8x8xbf16>
    %cst_135 = arith.constant dense<0.000000e+00> : vector<8x256xf32>
    %212 = tpu.matmul %211, %207, %cst_135 {dimension_numbers = #tpu.dot_dimension_numbers<[1], [0], [0], [1], [0, 0, 1, 1], [], []>} : vector<8x8xbf16>, vector<8x256xbf16>, vector<8x256xf32> -> vector<8x256xf32>
    %213 = arith.addf %201, %212 : vector<8x256xf32>
    %c0_136 = arith.constant 0 : index
    %c127_137 = arith.constant 127 : index
    %214 = vector.load %arg10[%c0_136, %c127_137] : memref<8x512xf32, #tpu.memory_space<vmem>>, vector<8x256xf32>
    %cst_138 = arith.constant 0.000000e+00 : f32
    %215 = vector.shape_cast %22 : vector<1x256xi1> to vector<1x256xi1>
    %216 = vector.broadcast %215 : vector<1x256xi1> to vector<8x256xi1>
    %217 = vector.broadcast %cst_138 : f32 to vector<8x256xf32>
    %218 = arith.select %216, %214, %217 : vector<8x256xi1>, vector<8x256xf32>
    %219 = arith.truncf %218 : vector<8x256xf32> to vector<8x256xbf16>
    %c0_139 = arith.constant 0 : index
    %c24_140 = arith.constant 24 : index
    %220 = vector.load %arg4[%c0_139, %c24_140] : memref<8x72xbf16, #tpu.memory_space<vmem>>, vector<8x8xbf16>
    %cst_141 = arith.constant dense<0.000000e+00> : vector<8x256xf32>
    %221 = tpu.matmul %220, %219, %cst_141 {dimension_numbers = #tpu.dot_dimension_numbers<[1], [0], [0], [1], [0, 0, 1, 1], [], []>} : vector<8x8xbf16>, vector<8x256xbf16>, vector<8x256xf32> -> vector<8x256xf32>
    %222 = arith.addf %210, %221 : vector<8x256xf32>
    %c0_142 = arith.constant 0 : index
    %c24_143 = arith.constant 24 : index
    %223 = vector.load %arg6[%c0_142, %c24_143] : memref<8x72xbf16, #tpu.memory_space<vmem>>, vector<8x8xbf16>
    %cst_144 = arith.constant dense<0.000000e+00> : vector<8x256xf32>
    %224 = tpu.matmul %223, %219, %cst_144 {dimension_numbers = #tpu.dot_dimension_numbers<[1], [0], [0], [1], [0, 0, 1, 1], [], []>} : vector<8x8xbf16>, vector<8x256xbf16>, vector<8x256xf32> -> vector<8x256xf32>
    %225 = arith.addf %213, %224 : vector<8x256xf32>
    %c0_145 = arith.constant 0 : index
    %c128_146 = arith.constant 128 : index
    %226 = vector.load %arg10[%c0_145, %c128_146] : memref<8x512xf32, #tpu.memory_space<vmem>>, vector<8x256xf32>
    %227 = arith.truncf %226 : vector<8x256xf32> to vector<8x256xbf16>
    %c0_147 = arith.constant 0 : index
    %c32_148 = arith.constant 32 : index
    %228 = vector.load %arg4[%c0_147, %c32_148] : memref<8x72xbf16, #tpu.memory_space<vmem>>, vector<8x8xbf16>
    %cst_149 = arith.constant dense<0.000000e+00> : vector<8x256xf32>
    %229 = tpu.matmul %228, %227, %cst_149 {dimension_numbers = #tpu.dot_dimension_numbers<[1], [0], [0], [1], [0, 0, 1, 1], [], []>} : vector<8x8xbf16>, vector<8x256xbf16>, vector<8x256xf32> -> vector<8x256xf32>
    %230 = arith.addf %222, %229 : vector<8x256xf32>
    %c0_150 = arith.constant 0 : index
    %c32_151 = arith.constant 32 : index
    %231 = vector.load %arg6[%c0_150, %c32_151] : memref<8x72xbf16, #tpu.memory_space<vmem>>, vector<8x8xbf16>
    %cst_152 = arith.constant dense<0.000000e+00> : vector<8x256xf32>
    %232 = tpu.matmul %231, %227, %cst_152 {dimension_numbers = #tpu.dot_dimension_numbers<[1], [0], [0], [1], [0, 0, 1, 1], [], []>} : vector<8x8xbf16>, vector<8x256xbf16>, vector<8x256xf32> -> vector<8x256xf32>
    %233 = arith.addf %225, %232 : vector<8x256xf32>
    %c0_153 = arith.constant 0 : index
    %c129_154 = arith.constant 129 : index
    %234 = vector.load %arg10[%c0_153, %c129_154] : memref<8x512xf32, #tpu.memory_space<vmem>>, vector<8x256xf32>
    %cst_155 = arith.constant 0.000000e+00 : f32
    %235 = vector.shape_cast %24 : vector<1x256xi1> to vector<1x256xi1>
    %236 = vector.broadcast %235 : vector<1x256xi1> to vector<8x256xi1>
    %237 = vector.broadcast %cst_155 : f32 to vector<8x256xf32>
    %238 = arith.select %236, %234, %237 : vector<8x256xi1>, vector<8x256xf32>
    %239 = arith.truncf %238 : vector<8x256xf32> to vector<8x256xbf16>
    %c0_156 = arith.constant 0 : index
    %c40_157 = arith.constant 40 : index
    %240 = vector.load %arg4[%c0_156, %c40_157] : memref<8x72xbf16, #tpu.memory_space<vmem>>, vector<8x8xbf16>
    %cst_158 = arith.constant dense<0.000000e+00> : vector<8x256xf32>
    %241 = tpu.matmul %240, %239, %cst_158 {dimension_numbers = #tpu.dot_dimension_numbers<[1], [0], [0], [1], [0, 0, 1, 1], [], []>} : vector<8x8xbf16>, vector<8x256xbf16>, vector<8x256xf32> -> vector<8x256xf32>
    %242 = arith.addf %230, %241 : vector<8x256xf32>
    %c0_159 = arith.constant 0 : index
    %c40_160 = arith.constant 40 : index
    %243 = vector.load %arg6[%c0_159, %c40_160] : memref<8x72xbf16, #tpu.memory_space<vmem>>, vector<8x8xbf16>
    %cst_161 = arith.constant dense<0.000000e+00> : vector<8x256xf32>
    %244 = tpu.matmul %243, %239, %cst_161 {dimension_numbers = #tpu.dot_dimension_numbers<[1], [0], [0], [1], [0, 0, 1, 1], [], []>} : vector<8x8xbf16>, vector<8x256xbf16>, vector<8x256xf32> -> vector<8x256xf32>
    %245 = arith.addf %233, %244 : vector<8x256xf32>
    %c0_162 = arith.constant 0 : index
    %c143_163 = arith.constant 143 : index
    %246 = vector.load %arg10[%c0_162, %c143_163] : memref<8x512xf32, #tpu.memory_space<vmem>>, vector<8x256xf32>
    %cst_164 = arith.constant 0.000000e+00 : f32
    %247 = vector.shape_cast %22 : vector<1x256xi1> to vector<1x256xi1>
    %248 = vector.broadcast %247 : vector<1x256xi1> to vector<8x256xi1>
    %249 = vector.broadcast %cst_164 : f32 to vector<8x256xf32>
    %250 = arith.select %248, %246, %249 : vector<8x256xi1>, vector<8x256xf32>
    %251 = arith.truncf %250 : vector<8x256xf32> to vector<8x256xbf16>
    %c0_165 = arith.constant 0 : index
    %c48_166 = arith.constant 48 : index
    %252 = vector.load %arg4[%c0_165, %c48_166] : memref<8x72xbf16, #tpu.memory_space<vmem>>, vector<8x8xbf16>
    %cst_167 = arith.constant dense<0.000000e+00> : vector<8x256xf32>
    %253 = tpu.matmul %252, %251, %cst_167 {dimension_numbers = #tpu.dot_dimension_numbers<[1], [0], [0], [1], [0, 0, 1, 1], [], []>} : vector<8x8xbf16>, vector<8x256xbf16>, vector<8x256xf32> -> vector<8x256xf32>
    %254 = arith.addf %242, %253 : vector<8x256xf32>
    %c0_168 = arith.constant 0 : index
    %c48_169 = arith.constant 48 : index
    %255 = vector.load %arg6[%c0_168, %c48_169] : memref<8x72xbf16, #tpu.memory_space<vmem>>, vector<8x8xbf16>
    %cst_170 = arith.constant dense<0.000000e+00> : vector<8x256xf32>
    %256 = tpu.matmul %255, %251, %cst_170 {dimension_numbers = #tpu.dot_dimension_numbers<[1], [0], [0], [1], [0, 0, 1, 1], [], []>} : vector<8x8xbf16>, vector<8x256xbf16>, vector<8x256xf32> -> vector<8x256xf32>
    %257 = arith.addf %245, %256 : vector<8x256xf32>
    %c0_171 = arith.constant 0 : index
    %c144_172 = arith.constant 144 : index
    %258 = vector.load %arg10[%c0_171, %c144_172] : memref<8x512xf32, #tpu.memory_space<vmem>>, vector<8x256xf32>
    %259 = arith.truncf %258 : vector<8x256xf32> to vector<8x256xbf16>
    %c0_173 = arith.constant 0 : index
    %c56_174 = arith.constant 56 : index
    %260 = vector.load %arg4[%c0_173, %c56_174] : memref<8x72xbf16, #tpu.memory_space<vmem>>, vector<8x8xbf16>
    %cst_175 = arith.constant dense<0.000000e+00> : vector<8x256xf32>
    %261 = tpu.matmul %260, %259, %cst_175 {dimension_numbers = #tpu.dot_dimension_numbers<[1], [0], [0], [1], [0, 0, 1, 1], [], []>} : vector<8x8xbf16>, vector<8x256xbf16>, vector<8x256xf32> -> vector<8x256xf32>
    %262 = arith.addf %254, %261 : vector<8x256xf32>
    %c0_176 = arith.constant 0 : index
    %c56_177 = arith.constant 56 : index
    %263 = vector.load %arg6[%c0_176, %c56_177] : memref<8x72xbf16, #tpu.memory_space<vmem>>, vector<8x8xbf16>
    %cst_178 = arith.constant dense<0.000000e+00> : vector<8x256xf32>
    %264 = tpu.matmul %263, %259, %cst_178 {dimension_numbers = #tpu.dot_dimension_numbers<[1], [0], [0], [1], [0, 0, 1, 1], [], []>} : vector<8x8xbf16>, vector<8x256xbf16>, vector<8x256xf32> -> vector<8x256xf32>
    %265 = arith.addf %257, %264 : vector<8x256xf32>
    %c0_179 = arith.constant 0 : index
    %c145_180 = arith.constant 145 : index
    %266 = vector.load %arg10[%c0_179, %c145_180] : memref<8x512xf32, #tpu.memory_space<vmem>>, vector<8x256xf32>
    %cst_181 = arith.constant 0.000000e+00 : f32
    %267 = vector.shape_cast %24 : vector<1x256xi1> to vector<1x256xi1>
    %268 = vector.broadcast %267 : vector<1x256xi1> to vector<8x256xi1>
    %269 = vector.broadcast %cst_181 : f32 to vector<8x256xf32>
    %270 = arith.select %268, %266, %269 : vector<8x256xi1>, vector<8x256xf32>
    %271 = arith.truncf %270 : vector<8x256xf32> to vector<8x256xbf16>
    %c0_182 = arith.constant 0 : index
    %c64_183 = arith.constant 64 : index
    %272 = vector.load %arg4[%c0_182, %c64_183] : memref<8x72xbf16, #tpu.memory_space<vmem>>, vector<8x8xbf16>
    %cst_184 = arith.constant dense<0.000000e+00> : vector<8x256xf32>
    %273 = tpu.matmul %272, %271, %cst_184 {dimension_numbers = #tpu.dot_dimension_numbers<[1], [0], [0], [1], [0, 0, 1, 1], [], []>} : vector<8x8xbf16>, vector<8x256xbf16>, vector<8x256xf32> -> vector<8x256xf32>
    %274 = arith.addf %262, %273 : vector<8x256xf32>
    %c0_185 = arith.constant 0 : index
    %c64_186 = arith.constant 64 : index
    %275 = vector.load %arg6[%c0_185, %c64_186] : memref<8x72xbf16, #tpu.memory_space<vmem>>, vector<8x8xbf16>
    %cst_187 = arith.constant dense<0.000000e+00> : vector<8x256xf32>
    %276 = tpu.matmul %275, %271, %cst_187 {dimension_numbers = #tpu.dot_dimension_numbers<[1], [0], [0], [1], [0, 0, 1, 1], [], []>} : vector<8x8xbf16>, vector<8x256xbf16>, vector<8x256xf32> -> vector<8x256xf32>
    %277 = arith.addf %265, %276 : vector<8x256xf32>
    %278 = arith.addf %277, %33 : vector<8x256xf32>
    %c0_188 = arith.constant 0 : index
    %c0_189 = arith.constant 0 : index
    %279 = vector.load %arg11[%c0_188, %c0_189] : memref<8x256xf32, #tpu.memory_space<vmem>>, vector<8x256xf32>
    tpu.vector_store %arg11[%c0_188, %c0_189], %278 {strides = array<i32>} : memref<8x256xf32, #tpu.memory_space<vmem>>, vector<8x256xf32>,
    %cst_190 = arith.constant 0.000000e+00 : f32
    %280 = vector.broadcast %cst_190 : f32 to vector<8x256xf32>
    %281 = arith.maximumf %274, %280 : vector<8x256xf32>
    %c0_191 = arith.constant 0 : index
    %c128_192 = arith.constant 128 : index
    %282 = vector.load %arg10[%c0_191, %c128_192] : memref<8x512xf32, #tpu.memory_space<vmem>>, vector<8x256xf32>
    tpu.vector_store %arg10[%c0_191, %c128_192], %281 {strides = array<i32>} : memref<8x512xf32, #tpu.memory_space<vmem>>, vector<8x256xf32>,
    %c0_193 = arith.constant 0 : index
    %c111_194 = arith.constant 111 : index
    %283 = vector.load %arg10[%c0_193, %c111_194] : memref<8x512xf32, #tpu.memory_space<vmem>>, vector<8x256xf32>
    %cst_195 = arith.constant 0.000000e+00 : f32
    %284 = vector.shape_cast %22 : vector<1x256xi1> to vector<1x256xi1>
    %285 = vector.broadcast %284 : vector<1x256xi1> to vector<8x256xi1>
    %286 = vector.broadcast %cst_195 : f32 to vector<8x256xf32>
    %287 = arith.select %285, %283, %286 : vector<8x256xi1>, vector<8x256xf32>
    %288 = arith.truncf %287 : vector<8x256xf32> to vector<8x256xbf16>
    %c0_196 = arith.constant 0 : index
    %c0_197 = arith.constant 0 : index
    %289 = vector.load %arg4[%c0_196, %c0_197] : memref<8x72xbf16, #tpu.memory_space<vmem>>, vector<8x8xbf16>
    %cst_198 = arith.constant dense<0.000000e+00> : vector<8x256xf32>
    %290 = tpu.matmul %289, %288, %cst_198 {dimension_numbers = #tpu.dot_dimension_numbers<[1], [0], [0], [1], [0, 0, 1, 1], [], []>} : vector<8x8xbf16>, vector<8x256xbf16>, vector<8x256xf32> -> vector<8x256xf32>
    %291 = arith.addf %30, %290 : vector<8x256xf32>
    %c0_199 = arith.constant 0 : index
    %c112_200 = arith.constant 112 : index
    %292 = vector.load %arg10[%c0_199, %c112_200] : memref<8x512xf32, #tpu.memory_space<vmem>>, vector<8x256xf32>
    %293 = arith.truncf %292 : vector<8x256xf32> to vector<8x256xbf16>
    %c0_201 = arith.constant 0 : index
    %c8_202 = arith.constant 8 : index
    %294 = vector.load %arg4[%c0_201, %c8_202] : memref<8x72xbf16, #tpu.memory_space<vmem>>, vector<8x8xbf16>
    %cst_203 = arith.constant dense<0.000000e+00> : vector<8x256xf32>
    %295 = tpu.matmul %294, %293, %cst_203 {dimension_numbers = #tpu.dot_dimension_numbers<[1], [0], [0], [1], [0, 0, 1, 1], [], []>} : vector<8x8xbf16>, vector<8x256xbf16>, vector<8x256xf32> -> vector<8x256xf32>
    %296 = arith.addf %291, %295 : vector<8x256xf32>
    %c0_204 = arith.constant 0 : index
    %c113_205 = arith.constant 113 : index
    %297 = vector.load %arg10[%c0_204, %c113_205] : memref<8x512xf32, #tpu.memory_space<vmem>>, vector<8x256xf32>
    %cst_206 = arith.constant 0.000000e+00 : f32
    %298 = vector.shape_cast %24 : vector<1x256xi1> to vector<1x256xi1>
    %299 = vector.broadcast %298 : vector<1x256xi1> to vector<8x256xi1>
    %300 = vector.broadcast %cst_206 : f32 to vector<8x256xf32>
    %301 = arith.select %299, %297, %300 : vector<8x256xi1>, vector<8x256xf32>
    %302 = arith.truncf %301 : vector<8x256xf32> to vector<8x256xbf16>
    %c0_207 = arith.constant 0 : index
    %c16_208 = arith.constant 16 : index
    %303 = vector.load %arg4[%c0_207, %c16_208] : memref<8x72xbf16, #tpu.memory_space<vmem>>, vector<8x8xbf16>
    %cst_209 = arith.constant dense<0.000000e+00> : vector<8x256xf32>
    %304 = tpu.matmul %303, %302, %cst_209 {dimension_numbers = #tpu.dot_dimension_numbers<[1], [0], [0], [1], [0, 0, 1, 1], [], []>} : vector<8x8xbf16>, vector<8x256xbf16>, vector<8x256xf32> -> vector<8x256xf32>
    %305 = arith.addf %296, %304 : vector<8x256xf32>
    %c0_210 = arith.constant 0 : index
    %c127_211 = arith.constant 127 : index
    %306 = vector.load %arg10[%c0_210, %c127_211] : memref<8x512xf32, #tpu.memory_space<vmem>>, vector<8x256xf32>
    %cst_212 = arith.constant 0.000000e+00 : f32
    %307 = vector.shape_cast %22 : vector<1x256xi1> to vector<1x256xi1>
    %308 = vector.broadcast %307 : vector<1x256xi1> to vector<8x256xi1>
    %309 = vector.broadcast %cst_212 : f32 to vector<8x256xf32>
    %310 = arith.select %308, %306, %309 : vector<8x256xi1>, vector<8x256xf32>
    %311 = arith.truncf %310 : vector<8x256xf32> to vector<8x256xbf16>
    %c0_213 = arith.constant 0 : index
    %c24_214 = arith.constant 24 : index
    %312 = vector.load %arg4[%c0_213, %c24_214] : memref<8x72xbf16, #tpu.memory_space<vmem>>, vector<8x8xbf16>
    %cst_215 = arith.constant dense<0.000000e+00> : vector<8x256xf32>
    %313 = tpu.matmul %312, %311, %cst_215 {dimension_numbers = #tpu.dot_dimension_numbers<[1], [0], [0], [1], [0, 0, 1, 1], [], []>} : vector<8x8xbf16>, vector<8x256xbf16>, vector<8x256xf32> -> vector<8x256xf32>
    %314 = arith.addf %305, %313 : vector<8x256xf32>
    %c0_216 = arith.constant 0 : index
    %c128_217 = arith.constant 128 : index
    %315 = vector.load %arg10[%c0_216, %c128_217] : memref<8x512xf32, #tpu.memory_space<vmem>>, vector<8x256xf32>
    %316 = arith.truncf %315 : vector<8x256xf32> to vector<8x256xbf16>
    %c0_218 = arith.constant 0 : index
    %c32_219 = arith.constant 32 : index
    %317 = vector.load %arg4[%c0_218, %c32_219] : memref<8x72xbf16, #tpu.memory_space<vmem>>, vector<8x8xbf16>
    %cst_220 = arith.constant dense<0.000000e+00> : vector<8x256xf32>
    %318 = tpu.matmul %317, %316, %cst_220 {dimension_numbers = #tpu.dot_dimension_numbers<[1], [0], [0], [1], [0, 0, 1, 1], [], []>} : vector<8x8xbf16>, vector<8x256xbf16>, vector<8x256xf32> -> vector<8x256xf32>
    %319 = arith.addf %314, %318 : vector<8x256xf32>
    %c0_221 = arith.constant 0 : index
    %c129_222 = arith.constant 129 : index
    %320 = vector.load %arg10[%c0_221, %c129_222] : memref<8x512xf32, #tpu.memory_space<vmem>>, vector<8x256xf32>
    %cst_223 = arith.constant 0.000000e+00 : f32
    %321 = vector.shape_cast %24 : vector<1x256xi1> to vector<1x256xi1>
    %322 = vector.broadcast %321 : vector<1x256xi1> to vector<8x256xi1>
    %323 = vector.broadcast %cst_223 : f32 to vector<8x256xf32>
    %324 = arith.select %322, %320, %323 : vector<8x256xi1>, vector<8x256xf32>
    %325 = arith.truncf %324 : vector<8x256xf32> to vector<8x256xbf16>
    %c0_224 = arith.constant 0 : index
    %c40_225 = arith.constant 40 : index
    %326 = vector.load %arg4[%c0_224, %c40_225] : memref<8x72xbf16, #tpu.memory_space<vmem>>, vector<8x8xbf16>
    %cst_226 = arith.constant dense<0.000000e+00> : vector<8x256xf32>
    %327 = tpu.matmul %326, %325, %cst_226 {dimension_numbers = #tpu.dot_dimension_numbers<[1], [0], [0], [1], [0, 0, 1, 1], [], []>} : vector<8x8xbf16>, vector<8x256xbf16>, vector<8x256xf32> -> vector<8x256xf32>
    %328 = arith.addf %319, %327 : vector<8x256xf32>
    %c0_227 = arith.constant 0 : index
    %c143_228 = arith.constant 143 : index
    %329 = vector.load %arg10[%c0_227, %c143_228] : memref<8x512xf32, #tpu.memory_space<vmem>>, vector<8x256xf32>
    %cst_229 = arith.constant 0.000000e+00 : f32
    %330 = vector.shape_cast %22 : vector<1x256xi1> to vector<1x256xi1>
    %331 = vector.broadcast %330 : vector<1x256xi1> to vector<8x256xi1>
    %332 = vector.broadcast %cst_229 : f32 to vector<8x256xf32>
    %333 = arith.select %331, %329, %332 : vector<8x256xi1>, vector<8x256xf32>
    %334 = arith.truncf %333 : vector<8x256xf32> to vector<8x256xbf16>
    %c0_230 = arith.constant 0 : index
    %c48_231 = arith.constant 48 : index
    %335 = vector.load %arg4[%c0_230, %c48_231] : memref<8x72xbf16, #tpu.memory_space<vmem>>, vector<8x8xbf16>
    %cst_232 = arith.constant dense<0.000000e+00> : vector<8x256xf32>
    %336 = tpu.matmul %335, %334, %cst_232 {dimension_numbers = #tpu.dot_dimension_numbers<[1], [0], [0], [1], [0, 0, 1, 1], [], []>} : vector<8x8xbf16>, vector<8x256xbf16>, vector<8x256xf32> -> vector<8x256xf32>
    %337 = arith.addf %328, %336 : vector<8x256xf32>
    %c0_233 = arith.constant 0 : index
    %c144_234 = arith.constant 144 : index
    %338 = vector.load %arg10[%c0_233, %c144_234] : memref<8x512xf32, #tpu.memory_space<vmem>>, vector<8x256xf32>
    %339 = arith.truncf %338 : vector<8x256xf32> to vector<8x256xbf16>
    %c0_235 = arith.constant 0 : index
    %c56_236 = arith.constant 56 : index
    %340 = vector.load %arg4[%c0_235, %c56_236] : memref<8x72xbf16, #tpu.memory_space<vmem>>, vector<8x8xbf16>
    %cst_237 = arith.constant dense<0.000000e+00> : vector<8x256xf32>
    %341 = tpu.matmul %340, %339, %cst_237 {dimension_numbers = #tpu.dot_dimension_numbers<[1], [0], [0], [1], [0, 0, 1, 1], [], []>} : vector<8x8xbf16>, vector<8x256xbf16>, vector<8x256xf32> -> vector<8x256xf32>
    %342 = arith.addf %337, %341 : vector<8x256xf32>
    %c0_238 = arith.constant 0 : index
    %c145_239 = arith.constant 145 : index
    %343 = vector.load %arg10[%c0_238, %c145_239] : memref<8x512xf32, #tpu.memory_space<vmem>>, vector<8x256xf32>
    %cst_240 = arith.constant 0.000000e+00 : f32
    %344 = vector.shape_cast %24 : vector<1x256xi1> to vector<1x256xi1>
    %345 = vector.broadcast %344 : vector<1x256xi1> to vector<8x256xi1>
    %346 = vector.broadcast %cst_240 : f32 to vector<8x256xf32>
    %347 = arith.select %345, %343, %346 : vector<8x256xi1>, vector<8x256xf32>
    %348 = arith.truncf %347 : vector<8x256xf32> to vector<8x256xbf16>
    %c0_241 = arith.constant 0 : index
    %c64_242 = arith.constant 64 : index
    %349 = vector.load %arg4[%c0_241, %c64_242] : memref<8x72xbf16, #tpu.memory_space<vmem>>, vector<8x8xbf16>
    %cst_243 = arith.constant dense<0.000000e+00> : vector<8x256xf32>
    %350 = tpu.matmul %349, %348, %cst_243 {dimension_numbers = #tpu.dot_dimension_numbers<[1], [0], [0], [1], [0, 0, 1, 1], [], []>} : vector<8x8xbf16>, vector<8x256xbf16>, vector<8x256xf32> -> vector<8x256xf32>
    %351 = arith.addf %342, %350 : vector<8x256xf32>
    %cst_244 = arith.constant 0.000000e+00 : f32
    %352 = vector.broadcast %cst_244 : f32 to vector<8x256xf32>
    %353 = arith.maximumf %351, %352 : vector<8x256xf32>
    %c0_245 = arith.constant 0 : index
    %c128_246 = arith.constant 128 : index
    %354 = vector.load %arg10[%c0_245, %c128_246] : memref<8x512xf32, #tpu.memory_space<vmem>>, vector<8x256xf32>
    tpu.vector_store %arg10[%c0_245, %c128_246], %353 {strides = array<i32>} : memref<8x512xf32, #tpu.memory_space<vmem>>, vector<8x256xf32>,
    %c0_247 = arith.constant 0 : index
    %c0_248 = arith.constant 0 : index
    %355 = vector.load %arg11[%c0_247, %c0_248] : memref<8x256xf32, #tpu.memory_space<vmem>>, vector<8x256xf32>
    %c0_249 = arith.constant 0 : index
    %c111_250 = arith.constant 111 : index
    %356 = vector.load %arg10[%c0_249, %c111_250] : memref<8x512xf32, #tpu.memory_space<vmem>>, vector<8x256xf32>
    %cst_251 = arith.constant 0.000000e+00 : f32
    %357 = vector.shape_cast %22 : vector<1x256xi1> to vector<1x256xi1>
    %358 = vector.broadcast %357 : vector<1x256xi1> to vector<8x256xi1>
    %359 = vector.broadcast %cst_251 : f32 to vector<8x256xf32>
    %360 = arith.select %358, %356, %359 : vector<8x256xi1>, vector<8x256xf32>
    %361 = arith.truncf %360 : vector<8x256xf32> to vector<8x256xbf16>
    %c0_252 = arith.constant 0 : index
    %c0_253 = arith.constant 0 : index
    %362 = vector.load %arg7[%c0_252, %c0_253] : memref<8x72xbf16, #tpu.memory_space<vmem>>, vector<8x8xbf16>
    %cst_254 = arith.constant dense<0.000000e+00> : vector<8x256xf32>
    %363 = tpu.matmul %362, %361, %cst_254 {dimension_numbers = #tpu.dot_dimension_numbers<[1], [0], [0], [1], [0, 0, 1, 1], [], []>} : vector<8x8xbf16>, vector<8x256xbf16>, vector<8x256xf32> -> vector<8x256xf32>
    %364 = arith.addf %355, %363 : vector<8x256xf32>
    %c0_255 = arith.constant 0 : index
    %c112_256 = arith.constant 112 : index
    %365 = vector.load %arg10[%c0_255, %c112_256] : memref<8x512xf32, #tpu.memory_space<vmem>>, vector<8x256xf32>
    %366 = arith.truncf %365 : vector<8x256xf32> to vector<8x256xbf16>
    %c0_257 = arith.constant 0 : index
    %c8_258 = arith.constant 8 : index
    %367 = vector.load %arg7[%c0_257, %c8_258] : memref<8x72xbf16, #tpu.memory_space<vmem>>, vector<8x8xbf16>
    %cst_259 = arith.constant dense<0.000000e+00> : vector<8x256xf32>
    %368 = tpu.matmul %367, %366, %cst_259 {dimension_numbers = #tpu.dot_dimension_numbers<[1], [0], [0], [1], [0, 0, 1, 1], [], []>} : vector<8x8xbf16>, vector<8x256xbf16>, vector<8x256xf32> -> vector<8x256xf32>
    %369 = arith.addf %364, %368 : vector<8x256xf32>
    %c0_260 = arith.constant 0 : index
    %c113_261 = arith.constant 113 : index
    %370 = vector.load %arg10[%c0_260, %c113_261] : memref<8x512xf32, #tpu.memory_space<vmem>>, vector<8x256xf32>
    %cst_262 = arith.constant 0.000000e+00 : f32
    %371 = vector.shape_cast %24 : vector<1x256xi1> to vector<1x256xi1>
    %372 = vector.broadcast %371 : vector<1x256xi1> to vector<8x256xi1>
    %373 = vector.broadcast %cst_262 : f32 to vector<8x256xf32>
    %374 = arith.select %372, %370, %373 : vector<8x256xi1>, vector<8x256xf32>
    %375 = arith.truncf %374 : vector<8x256xf32> to vector<8x256xbf16>
    %c0_263 = arith.constant 0 : index
    %c16_264 = arith.constant 16 : index
    %376 = vector.load %arg7[%c0_263, %c16_264] : memref<8x72xbf16, #tpu.memory_space<vmem>>, vector<8x8xbf16>
    %cst_265 = arith.constant dense<0.000000e+00> : vector<8x256xf32>
    %377 = tpu.matmul %376, %375, %cst_265 {dimension_numbers = #tpu.dot_dimension_numbers<[1], [0], [0], [1], [0, 0, 1, 1], [], []>} : vector<8x8xbf16>, vector<8x256xbf16>, vector<8x256xf32> -> vector<8x256xf32>
    %378 = arith.addf %369, %377 : vector<8x256xf32>
    %c0_266 = arith.constant 0 : index
    %c127_267 = arith.constant 127 : index
    %379 = vector.load %arg10[%c0_266, %c127_267] : memref<8x512xf32, #tpu.memory_space<vmem>>, vector<8x256xf32>
    %cst_268 = arith.constant 0.000000e+00 : f32
    %380 = vector.shape_cast %22 : vector<1x256xi1> to vector<1x256xi1>
    %381 = vector.broadcast %380 : vector<1x256xi1> to vector<8x256xi1>
    %382 = vector.broadcast %cst_268 : f32 to vector<8x256xf32>
    %383 = arith.select %381, %379, %382 : vector<8x256xi1>, vector<8x256xf32>
    %384 = arith.truncf %383 : vector<8x256xf32> to vector<8x256xbf16>
    %c0_269 = arith.constant 0 : index
    %c24_270 = arith.constant 24 : index
    %385 = vector.load %arg7[%c0_269, %c24_270] : memref<8x72xbf16, #tpu.memory_space<vmem>>, vector<8x8xbf16>
    %cst_271 = arith.constant dense<0.000000e+00> : vector<8x256xf32>
    %386 = tpu.matmul %385, %384, %cst_271 {dimension_numbers = #tpu.dot_dimension_numbers<[1], [0], [0], [1], [0, 0, 1, 1], [], []>} : vector<8x8xbf16>, vector<8x256xbf16>, vector<8x256xf32> -> vector<8x256xf32>
    %387 = arith.addf %378, %386 : vector<8x256xf32>
    %c0_272 = arith.constant 0 : index
    %c128_273 = arith.constant 128 : index
    %388 = vector.load %arg10[%c0_272, %c128_273] : memref<8x512xf32, #tpu.memory_space<vmem>>, vector<8x256xf32>
    %389 = arith.truncf %388 : vector<8x256xf32> to vector<8x256xbf16>
    %c0_274 = arith.constant 0 : index
    %c32_275 = arith.constant 32 : index
    %390 = vector.load %arg7[%c0_274, %c32_275] : memref<8x72xbf16, #tpu.memory_space<vmem>>, vector<8x8xbf16>
    %cst_276 = arith.constant dense<0.000000e+00> : vector<8x256xf32>
    %391 = tpu.matmul %390, %389, %cst_276 {dimension_numbers = #tpu.dot_dimension_numbers<[1], [0], [0], [1], [0, 0, 1, 1], [], []>} : vector<8x8xbf16>, vector<8x256xbf16>, vector<8x256xf32> -> vector<8x256xf32>
    %392 = arith.addf %387, %391 : vector<8x256xf32>
    %c0_277 = arith.constant 0 : index
    %c129_278 = arith.constant 129 : index
    %393 = vector.load %arg10[%c0_277, %c129_278] : memref<8x512xf32, #tpu.memory_space<vmem>>, vector<8x256xf32>
    %cst_279 = arith.constant 0.000000e+00 : f32
    %394 = vector.shape_cast %24 : vector<1x256xi1> to vector<1x256xi1>
    %395 = vector.broadcast %394 : vector<1x256xi1> to vector<8x256xi1>
    %396 = vector.broadcast %cst_279 : f32 to vector<8x256xf32>
    %397 = arith.select %395, %393, %396 : vector<8x256xi1>, vector<8x256xf32>
    %398 = arith.truncf %397 : vector<8x256xf32> to vector<8x256xbf16>
    %c0_280 = arith.constant 0 : index
    %c40_281 = arith.constant 40 : index
    %399 = vector.load %arg7[%c0_280, %c40_281] : memref<8x72xbf16, #tpu.memory_space<vmem>>, vector<8x8xbf16>
    %cst_282 = arith.constant dense<0.000000e+00> : vector<8x256xf32>
    %400 = tpu.matmul %399, %398, %cst_282 {dimension_numbers = #tpu.dot_dimension_numbers<[1], [0], [0], [1], [0, 0, 1, 1], [], []>} : vector<8x8xbf16>, vector<8x256xbf16>, vector<8x256xf32> -> vector<8x256xf32>
    %401 = arith.addf %392, %400 : vector<8x256xf32>
    %c0_283 = arith.constant 0 : index
    %c143_284 = arith.constant 143 : index
    %402 = vector.load %arg10[%c0_283, %c143_284] : memref<8x512xf32, #tpu.memory_space<vmem>>, vector<8x256xf32>
    %cst_285 = arith.constant 0.000000e+00 : f32
    %403 = vector.shape_cast %22 : vector<1x256xi1> to vector<1x256xi1>
    %404 = vector.broadcast %403 : vector<1x256xi1> to vector<8x256xi1>
    %405 = vector.broadcast %cst_285 : f32 to vector<8x256xf32>
    %406 = arith.select %404, %402, %405 : vector<8x256xi1>, vector<8x256xf32>
    %407 = arith.truncf %406 : vector<8x256xf32> to vector<8x256xbf16>
    %c0_286 = arith.constant 0 : index
    %c48_287 = arith.constant 48 : index
    %408 = vector.load %arg7[%c0_286, %c48_287] : memref<8x72xbf16, #tpu.memory_space<vmem>>, vector<8x8xbf16>
    %cst_288 = arith.constant dense<0.000000e+00> : vector<8x256xf32>
    %409 = tpu.matmul %408, %407, %cst_288 {dimension_numbers = #tpu.dot_dimension_numbers<[1], [0], [0], [1], [0, 0, 1, 1], [], []>} : vector<8x8xbf16>, vector<8x256xbf16>, vector<8x256xf32> -> vector<8x256xf32>
    %410 = arith.addf %401, %409 : vector<8x256xf32>
    %c0_289 = arith.constant 0 : index
    %c144_290 = arith.constant 144 : index
    %411 = vector.load %arg10[%c0_289, %c144_290] : memref<8x512xf32, #tpu.memory_space<vmem>>, vector<8x256xf32>
    %412 = arith.truncf %411 : vector<8x256xf32> to vector<8x256xbf16>
    %c0_291 = arith.constant 0 : index
    %c56_292 = arith.constant 56 : index
    %413 = vector.load %arg7[%c0_291, %c56_292] : memref<8x72xbf16, #tpu.memory_space<vmem>>, vector<8x8xbf16>
    %cst_293 = arith.constant dense<0.000000e+00> : vector<8x256xf32>
    %414 = tpu.matmul %413, %412, %cst_293 {dimension_numbers = #tpu.dot_dimension_numbers<[1], [0], [0], [1], [0, 0, 1, 1], [], []>} : vector<8x8xbf16>, vector<8x256xbf16>, vector<8x256xf32> -> vector<8x256xf32>
    %415 = arith.addf %410, %414 : vector<8x256xf32>
    %c0_294 = arith.constant 0 : index
    %c145_295 = arith.constant 145 : index
    %416 = vector.load %arg10[%c0_294, %c145_295] : memref<8x512xf32, #tpu.memory_space<vmem>>, vector<8x256xf32>
    %cst_296 = arith.constant 0.000000e+00 : f32
    %417 = vector.shape_cast %24 : vector<1x256xi1> to vector<1x256xi1>
    %418 = vector.broadcast %417 : vector<1x256xi1> to vector<8x256xi1>
    %419 = vector.broadcast %cst_296 : f32 to vector<8x256xf32>
    %420 = arith.select %418, %416, %419 : vector<8x256xi1>, vector<8x256xf32>
    %421 = arith.truncf %420 : vector<8x256xf32> to vector<8x256xbf16>
    %c0_297 = arith.constant 0 : index
    %c64_298 = arith.constant 64 : index
    %422 = vector.load %arg7[%c0_297, %c64_298] : memref<8x72xbf16, #tpu.memory_space<vmem>>, vector<8x8xbf16>
    %cst_299 = arith.constant dense<0.000000e+00> : vector<8x256xf32>
    %423 = tpu.matmul %422, %421, %cst_299 {dimension_numbers = #tpu.dot_dimension_numbers<[1], [0], [0], [1], [0, 0, 1, 1], [], []>} : vector<8x8xbf16>, vector<8x256xbf16>, vector<8x256xf32> -> vector<8x256xf32>
    %424 = arith.addf %415, %423 : vector<8x256xf32>
    %cst_300 = arith.constant 0.000000e+00 : f32
    %425 = vector.broadcast %cst_300 : f32 to vector<8x256xf32>
    %426 = arith.maximumf %424, %425 : vector<8x256xf32>
    %c0_301 = arith.constant 0 : index
    %c128_302 = arith.constant 128 : index
    %427 = vector.load %arg10[%c0_301, %c128_302] : memref<8x512xf32, #tpu.memory_space<vmem>>, vector<8x256xf32>
    tpu.vector_store %arg10[%c0_301, %c128_302], %426 {strides = array<i32>} : memref<8x512xf32, #tpu.memory_space<vmem>>, vector<8x256xf32>,
    %c0_303 = arith.constant 0 : index
    %c111_304 = arith.constant 111 : index
    %428 = vector.load %arg10[%c0_303, %c111_304] : memref<8x512xf32, #tpu.memory_space<vmem>>, vector<8x256xf32>
    %cst_305 = arith.constant 0.000000e+00 : f32
    %429 = vector.shape_cast %22 : vector<1x256xi1> to vector<1x256xi1>
    %430 = vector.broadcast %429 : vector<1x256xi1> to vector<8x256xi1>
    %431 = vector.broadcast %cst_305 : f32 to vector<8x256xf32>
    %432 = arith.select %430, %428, %431 : vector<8x256xi1>, vector<8x256xf32>
    %433 = arith.truncf %432 : vector<8x256xf32> to vector<8x256xbf16>
    %c0_306 = arith.constant 0 : index
    %c0_307 = arith.constant 0 : index
    %434 = vector.load %arg4[%c0_306, %c0_307] : memref<8x72xbf16, #tpu.memory_space<vmem>>, vector<8x8xbf16>
    %cst_308 = arith.constant dense<0.000000e+00> : vector<8x256xf32>
    %435 = tpu.matmul %434, %433, %cst_308 {dimension_numbers = #tpu.dot_dimension_numbers<[1], [0], [0], [1], [0, 0, 1, 1], [], []>} : vector<8x8xbf16>, vector<8x256xbf16>, vector<8x256xf32> -> vector<8x256xf32>
    %436 = arith.addf %30, %435 : vector<8x256xf32>
    %c0_309 = arith.constant 0 : index
    %c112_310 = arith.constant 112 : index
    %437 = vector.load %arg10[%c0_309, %c112_310] : memref<8x512xf32, #tpu.memory_space<vmem>>, vector<8x256xf32>
    %438 = arith.truncf %437 : vector<8x256xf32> to vector<8x256xbf16>
    %c0_311 = arith.constant 0 : index
    %c8_312 = arith.constant 8 : index
    %439 = vector.load %arg4[%c0_311, %c8_312] : memref<8x72xbf16, #tpu.memory_space<vmem>>, vector<8x8xbf16>
    %cst_313 = arith.constant dense<0.000000e+00> : vector<8x256xf32>
    %440 = tpu.matmul %439, %438, %cst_313 {dimension_numbers = #tpu.dot_dimension_numbers<[1], [0], [0], [1], [0, 0, 1, 1], [], []>} : vector<8x8xbf16>, vector<8x256xbf16>, vector<8x256xf32> -> vector<8x256xf32>
    %441 = arith.addf %436, %440 : vector<8x256xf32>
    %c0_314 = arith.constant 0 : index
    %c113_315 = arith.constant 113 : index
    %442 = vector.load %arg10[%c0_314, %c113_315] : memref<8x512xf32, #tpu.memory_space<vmem>>, vector<8x256xf32>
    %cst_316 = arith.constant 0.000000e+00 : f32
    %443 = vector.shape_cast %24 : vector<1x256xi1> to vector<1x256xi1>
    %444 = vector.broadcast %443 : vector<1x256xi1> to vector<8x256xi1>
    %445 = vector.broadcast %cst_316 : f32 to vector<8x256xf32>
    %446 = arith.select %444, %442, %445 : vector<8x256xi1>, vector<8x256xf32>
    %447 = arith.truncf %446 : vector<8x256xf32> to vector<8x256xbf16>
    %c0_317 = arith.constant 0 : index
    %c16_318 = arith.constant 16 : index
    %448 = vector.load %arg4[%c0_317, %c16_318] : memref<8x72xbf16, #tpu.memory_space<vmem>>, vector<8x8xbf16>
    %cst_319 = arith.constant dense<0.000000e+00> : vector<8x256xf32>
    %449 = tpu.matmul %448, %447, %cst_319 {dimension_numbers = #tpu.dot_dimension_numbers<[1], [0], [0], [1], [0, 0, 1, 1], [], []>} : vector<8x8xbf16>, vector<8x256xbf16>, vector<8x256xf32> -> vector<8x256xf32>
    %450 = arith.addf %441, %449 : vector<8x256xf32>
    %c0_320 = arith.constant 0 : index
    %c127_321 = arith.constant 127 : index
    %451 = vector.load %arg10[%c0_320, %c127_321] : memref<8x512xf32, #tpu.memory_space<vmem>>, vector<8x256xf32>
    %cst_322 = arith.constant 0.000000e+00 : f32
    %452 = vector.shape_cast %22 : vector<1x256xi1> to vector<1x256xi1>
    %453 = vector.broadcast %452 : vector<1x256xi1> to vector<8x256xi1>
    %454 = vector.broadcast %cst_322 : f32 to vector<8x256xf32>
    %455 = arith.select %453, %451, %454 : vector<8x256xi1>, vector<8x256xf32>
    %456 = arith.truncf %455 : vector<8x256xf32> to vector<8x256xbf16>
    %c0_323 = arith.constant 0 : index
    %c24_324 = arith.constant 24 : index
    %457 = vector.load %arg4[%c0_323, %c24_324] : memref<8x72xbf16, #tpu.memory_space<vmem>>, vector<8x8xbf16>
    %cst_325 = arith.constant dense<0.000000e+00> : vector<8x256xf32>
    %458 = tpu.matmul %457, %456, %cst_325 {dimension_numbers = #tpu.dot_dimension_numbers<[1], [0], [0], [1], [0, 0, 1, 1], [], []>} : vector<8x8xbf16>, vector<8x256xbf16>, vector<8x256xf32> -> vector<8x256xf32>
    %459 = arith.addf %450, %458 : vector<8x256xf32>
    %c0_326 = arith.constant 0 : index
    %c128_327 = arith.constant 128 : index
    %460 = vector.load %arg10[%c0_326, %c128_327] : memref<8x512xf32, #tpu.memory_space<vmem>>, vector<8x256xf32>
    %461 = arith.truncf %460 : vector<8x256xf32> to vector<8x256xbf16>
    %c0_328 = arith.constant 0 : index
    %c32_329 = arith.constant 32 : index
    %462 = vector.load %arg4[%c0_328, %c32_329] : memref<8x72xbf16, #tpu.memory_space<vmem>>, vector<8x8xbf16>
    %cst_330 = arith.constant dense<0.000000e+00> : vector<8x256xf32>
    %463 = tpu.matmul %462, %461, %cst_330 {dimension_numbers = #tpu.dot_dimension_numbers<[1], [0], [0], [1], [0, 0, 1, 1], [], []>} : vector<8x8xbf16>, vector<8x256xbf16>, vector<8x256xf32> -> vector<8x256xf32>
    %464 = arith.addf %459, %463 : vector<8x256xf32>
    %c0_331 = arith.constant 0 : index
    %c129_332 = arith.constant 129 : index
    %465 = vector.load %arg10[%c0_331, %c129_332] : memref<8x512xf32, #tpu.memory_space<vmem>>, vector<8x256xf32>
    %cst_333 = arith.constant 0.000000e+00 : f32
    %466 = vector.shape_cast %24 : vector<1x256xi1> to vector<1x256xi1>
    %467 = vector.broadcast %466 : vector<1x256xi1> to vector<8x256xi1>
    %468 = vector.broadcast %cst_333 : f32 to vector<8x256xf32>
    %469 = arith.select %467, %465, %468 : vector<8x256xi1>, vector<8x256xf32>
    %470 = arith.truncf %469 : vector<8x256xf32> to vector<8x256xbf16>
    %c0_334 = arith.constant 0 : index
    %c40_335 = arith.constant 40 : index
    %471 = vector.load %arg4[%c0_334, %c40_335] : memref<8x72xbf16, #tpu.memory_space<vmem>>, vector<8x8xbf16>
    %cst_336 = arith.constant dense<0.000000e+00> : vector<8x256xf32>
    %472 = tpu.matmul %471, %470, %cst_336 {dimension_numbers = #tpu.dot_dimension_numbers<[1], [0], [0], [1], [0, 0, 1, 1], [], []>} : vector<8x8xbf16>, vector<8x256xbf16>, vector<8x256xf32> -> vector<8x256xf32>
    %473 = arith.addf %464, %472 : vector<8x256xf32>
    %c0_337 = arith.constant 0 : index
    %c143_338 = arith.constant 143 : index
    %474 = vector.load %arg10[%c0_337, %c143_338] : memref<8x512xf32, #tpu.memory_space<vmem>>, vector<8x256xf32>
    %cst_339 = arith.constant 0.000000e+00 : f32
    %475 = vector.shape_cast %22 : vector<1x256xi1> to vector<1x256xi1>
    %476 = vector.broadcast %475 : vector<1x256xi1> to vector<8x256xi1>
    %477 = vector.broadcast %cst_339 : f32 to vector<8x256xf32>
    %478 = arith.select %476, %474, %477 : vector<8x256xi1>, vector<8x256xf32>
    %479 = arith.truncf %478 : vector<8x256xf32> to vector<8x256xbf16>
    %c0_340 = arith.constant 0 : index
    %c48_341 = arith.constant 48 : index
    %480 = vector.load %arg4[%c0_340, %c48_341] : memref<8x72xbf16, #tpu.memory_space<vmem>>, vector<8x8xbf16>
    %cst_342 = arith.constant dense<0.000000e+00> : vector<8x256xf32>
    %481 = tpu.matmul %480, %479, %cst_342 {dimension_numbers = #tpu.dot_dimension_numbers<[1], [0], [0], [1], [0, 0, 1, 1], [], []>} : vector<8x8xbf16>, vector<8x256xbf16>, vector<8x256xf32> -> vector<8x256xf32>
    %482 = arith.addf %473, %481 : vector<8x256xf32>
    %c0_343 = arith.constant 0 : index
    %c144_344 = arith.constant 144 : index
    %483 = vector.load %arg10[%c0_343, %c144_344] : memref<8x512xf32, #tpu.memory_space<vmem>>, vector<8x256xf32>
    %484 = arith.truncf %483 : vector<8x256xf32> to vector<8x256xbf16>
    %c0_345 = arith.constant 0 : index
    %c56_346 = arith.constant 56 : index
    %485 = vector.load %arg4[%c0_345, %c56_346] : memref<8x72xbf16, #tpu.memory_space<vmem>>, vector<8x8xbf16>
    %cst_347 = arith.constant dense<0.000000e+00> : vector<8x256xf32>
    %486 = tpu.matmul %485, %484, %cst_347 {dimension_numbers = #tpu.dot_dimension_numbers<[1], [0], [0], [1], [0, 0, 1, 1], [], []>} : vector<8x8xbf16>, vector<8x256xbf16>, vector<8x256xf32> -> vector<8x256xf32>
    %487 = arith.addf %482, %486 : vector<8x256xf32>
    %c0_348 = arith.constant 0 : index
    %c145_349 = arith.constant 145 : index
    %488 = vector.load %arg10[%c0_348, %c145_349] : memref<8x512xf32, #tpu.memory_space<vmem>>, vector<8x256xf32>
    %cst_350 = arith.constant 0.000000e+00 : f32
    %489 = vector.shape_cast %24 : vector<1x256xi1> to vector<1x256xi1>
    %490 = vector.broadcast %489 : vector<1x256xi1> to vector<8x256xi1>
    %491 = vector.broadcast %cst_350 : f32 to vector<8x256xf32>
    %492 = arith.select %490, %488, %491 : vector<8x256xi1>, vector<8x256xf32>
    %493 = arith.truncf %492 : vector<8x256xf32> to vector<8x256xbf16>
    %c0_351 = arith.constant 0 : index
    %c64_352 = arith.constant 64 : index
    %494 = vector.load %arg4[%c0_351, %c64_352] : memref<8x72xbf16, #tpu.memory_space<vmem>>, vector<8x8xbf16>
    %cst_353 = arith.constant dense<0.000000e+00> : vector<8x256xf32>
    %495 = tpu.matmul %494, %493, %cst_353 {dimension_numbers = #tpu.dot_dimension_numbers<[1], [0], [0], [1], [0, 0, 1, 1], [], []>} : vector<8x8xbf16>, vector<8x256xbf16>, vector<8x256xf32> -> vector<8x256xf32>
    %496 = arith.addf %487, %495 : vector<8x256xf32>
    %cst_354 = arith.constant 0.000000e+00 : f32
    %497 = vector.broadcast %cst_354 : f32 to vector<8x256xf32>
    %498 = arith.maximumf %496, %497 : vector<8x256xf32>
    %c0_355 = arith.constant 0 : index
    %c0_356 = arith.constant 0 : index
    %c0_357 = arith.constant 0 : index
    %499 = vector.load %arg9[%c0_355, %c0_356, %c0_357] : memref<1x8x256xf32, #tpu.memory_space<vmem>>, vector<1x8x256xf32>
    %500 = vector.shape_cast %499 : vector<1x8x256xf32> to vector<8x256xf32>
    %501 = vector.shape_cast %498 : vector<8x256xf32> to vector<1x8x256xf32>
    tpu.vector_store %arg9[%c0_355, %c0_356, %c0_357], %501 {strides = array<i32>} : memref<1x8x256xf32, #tpu.memory_space<vmem>>, vector<1x8x256xf32>,
    return
  }
  func.func @transform_0(%arg0: i32) -> (i32, i32, i32) {
    %c0_i32 = arith.constant 0 : i32
    %c0_i32_0 = arith.constant 0 : i32
    %c0_i32_1 = arith.constant 0 : i32
    return %arg0, %c0_i32, %c0_i32_0 : i32, i32, i32
  }
  func.func @transform_1(%arg0: i32) -> (i32, i32) {
    %c0_i32 = arith.constant 0 : i32
    %c0_i32_0 = arith.constant 0 : i32
    %c0_i32_1 = arith.constant 0 : i32
    return %c0_i32, %c0_i32_0 : i32, i32
  }
  func.func @transform_2(%arg0: i32) -> (i32, i32) {
    %c0_i32 = arith.constant 0 : i32
    %c0_i32_0 = arith.constant 0 : i32
    %c0_i32_1 = arith.constant 0 : i32
    return %c0_i32, %c0_i32_0 : i32, i32
  }
  func.func @transform_3(%arg0: i32) -> (i32, i32) {
    %c0_i32 = arith.constant 0 : i32
    %c0_i32_0 = arith.constant 0 : i32
    %c0_i32_1 = arith.constant 0 : i32
    return %c0_i32, %c0_i32_0 : i32, i32
  }
  func.func @transform_4(%arg0: i32) -> (i32, i32) {
    %c0_i32 = arith.constant 0 : i32
    %c0_i32_0 = arith.constant 0 : i32
    %c0_i32_1 = arith.constant 0 : i32
    return %c0_i32, %c0_i32_0 : i32, i32
  }
  func.func @transform_5(%arg0: i32) -> (i32, i32) {
    %c0_i32 = arith.constant 0 : i32
    %c0_i32_0 = arith.constant 0 : i32
    %c0_i32_1 = arith.constant 0 : i32
    return %c0_i32, %c0_i32_0 : i32, i32
  }
  func.func @transform_6(%arg0: i32) -> (i32, i32) {
    %c0_i32 = arith.constant 0 : i32
    %c0_i32_0 = arith.constant 0 : i32
    %c0_i32_1 = arith.constant 0 : i32
    return %c0_i32, %c0_i32_0 : i32, i32
  }
  func.func @transform_7(%arg0: i32) -> (i32, i32) {
    %c0_i32 = arith.constant 0 : i32
    %c0_i32_0 = arith.constant 0 : i32
    %c0_i32_1 = arith.constant 0 : i32
    return %c0_i32, %c0_i32_0 : i32, i32
  }
  func.func @transform_8(%arg0: i32) -> (i32, i32, i32) {
    %c0_i32 = arith.constant 0 : i32
    %c0_i32_0 = arith.constant 0 : i32
    %c0_i32_1 = arith.constant 0 : i32
    return %arg0, %c0_i32, %c0_i32_0 : i32, i32, i32
  }
}

</mosaic_0001>

<llo_original>
// kernel: bottleneck_forward.1
$region0: #{bottleneck_forward.1}
  #allocation0 [shape = 'u32[]', space=smem, size = 0x4, offset = 0x4, fixed_abs, tag = 'smem constant byte address 0x4 - core index']
  #allocation1 [shape = 'u32[144,128]{1,0:T(1,128)}', space=vmem, size = 0x12000, scoped, tag = 'internal scratch']
  #allocation2 [shape = 'f32[8,512]{1,0:T(8,128)}', space=vmem, size = 0x4000, scoped, tag = 'scratch operand']
  #allocation3 [shape = 'f32[8,256]{1,0:T(8,128)}', space=vmem, size = 0x2000, scoped, tag = 'scratch operand']
  %s0 = inlined_call_operand.vmem [shape: f32[2,8,256], index: 0, kind: input, shape index: {}]
  %s1 = inlined_call_operand.vmem [shape: bf16[8,72], index: 1, kind: input, shape index: {}]
  %s2 = inlined_call_operand.vmem [shape: f32[8,1], index: 2, kind: input, shape index: {}]
  %s3 = inlined_call_operand.vmem [shape: bf16[8,72], index: 3, kind: input, shape index: {}]
  %s4 = inlined_call_operand.vmem [shape: f32[8,1], index: 4, kind: input, shape index: {}]
  %s5 = inlined_call_operand.vmem [shape: bf16[8,72], index: 5, kind: input, shape index: {}]
  %s6 = inlined_call_operand.vmem [shape: bf16[8,72], index: 6, kind: input, shape index: {}]
  %s7 = inlined_call_operand.vmem [shape: f32[8,1], index: 7, kind: input, shape index: {}]
  %s8 = inlined_call_operand.vmem [shape: f32[2,8,256], index: 8, kind: output, shape index: {}]
  %s9 = sld [smem:[#allocation0]]
  $region65: #{bottleneck_forward.1} parent=0
    _
  %s11 = ssub.s32 1, %s9
  %s12 = scalar_select 0, %s11, %s9
  loop: start=0, step=1, limit=4
  $region2: #{bottleneck_forward.1} parent=0 // loop_pre_header
    _
  $region3: #{bottleneck_forward.1} parent=0 // loop_header
    %s14 = sphi 0, %s18
    %p15 = scmp.ge.s32.totalorder %s14, 4
    %s24 = sphi 0, %s26
    %s27 = sphi 0, %s24
    %s28 = sphi 0, %s27
    %s44 = sphi 0, %s28
    %s48 = sphi 0, %s48
    %s50 = sphi 0, %s48
    %s51 = sphi 0, %s50
    %s65 = sphi 0, %s51
    %s69 = sphi 0, %s69
    %s71 = sphi 0, %s69
    %s72 = sphi 0, %s71
    %s86 = sphi 0, %s72
    %s90 = sphi 0, %s90
    %s92 = sphi 0, %s90
    %s93 = sphi 0, %s92
    %s107 = sphi 0, %s93
    %s111 = sphi 0, %s111
    %s113 = sphi 0, %s111
    %s114 = sphi 0, %s113
    %s128 = sphi 0, %s114
    %s132 = sphi 0, %s132
    %s134 = sphi 0, %s132
    %s135 = sphi 0, %s134
    %s149 = sphi 0, %s135
    %s153 = sphi 0, %s153
    %s155 = sphi 0, %s153
    %s156 = sphi 0, %s155
    %s170 = sphi 0, %s156
    %s174 = sphi 0, %s174
    %s176 = sphi 0, %s174
    %s177 = sphi 0, %s176
    %s191 = sphi 0, %s177
    %s197 = sphi 0, %s199
    %s200 = sphi 0, %s197
    %s201 = sphi 0, %s200
    %s217 = sphi 0, %s201
  $region4: #{bottleneck_forward.1} parent=0 // loop_header_branch
    %17 = sbr.rel (%p15) target = $region8
  $region5: #{bottleneck_forward.1} parent=0 // loop_body
    %s19 = ssub.s32 %s14, 1
    %s20 = ssub.s32 %s14, 2
    %s21 = sadd.s32 %s14, 1
    %s22 = ssub.s32 %s14, %s21
    %p23 = scmp.eq.s32.totalorder %s22, 0
    %s25 = sadd.s32 %s24, 1
    %s26 = scalar_select %p23, %s24, %s25
    %p29 = pneg %p23
    %p30 = scmp.eq.s32.totalorder %s14, 1
    %p31 = por %p29, %p30
    %p32 = scmp.ne.s32.totalorder %s24, %s27
    %p33 = scmp.eq.s32.totalorder %s14, 0
    %p34 = por %p32, %p33
    %p35 = scmp.ne.s32.totalorder %s24, %s27
    %p36 = scmp.eq.s32.totalorder %s19, 1
    %p37 = por %p35, %p36
    %p38 = scmp.ne.s32.totalorder %s27, %s28
    %p39 = scmp.eq.s32.totalorder %s19, 0
    %p40 = por %p38, %p39
    %p41 = scmp.ne.s32.totalorder %s27, %s28
    %p42 = scmp.eq.s32.totalorder %s20, 1
    %p43 = por %p41, %p42
    %p45 = scmp.ne.s32.totalorder %s28, %s44
    %p46 = scmp.eq.s32.totalorder %s20, 0
    %p47 = por %p45, %p46
    %s49 = sadd.s32 %s48, 1
    %p52 = scmp.eq.s32.totalorder %s14, 1
    %p53 = scmp.ne.s32.totalorder %s48, %s50
    %p54 = scmp.eq.s32.totalorder %s14, 0
    %p55 = por %p53, %p54
    %p56 = scmp.ne.s32.totalorder %s48, %s50
    %p57 = scmp.eq.s32.totalorder %s19, 1
    %p58 = por %p56, %p57
    %p59 = scmp.ne.s32.totalorder %s50, %s51
    %p60 = scmp.eq.s32.totalorder %s19, 0
    %p61 = por %p59, %p60
    %p62 = scmp.ne.s32.totalorder %s50, %s51
    %p63 = scmp.eq.s32.totalorder %s20, 1
    %p64 = por %p62, %p63
    %p66 = scmp.ne.s32.totalorder %s51, %s65
    %p67 = scmp.eq.s32.totalorder %s20, 0
    %p68 = por %p66, %p67
    %s70 = sadd.s32 %s69, 1
    %p73 = scmp.eq.s32.totalorder %s14, 1
    %p74 = scmp.ne.s32.totalorder %s69, %s71
    %p75 = scmp.eq.s32.totalorder %s14, 0
    %p76 = por %p74, %p75
    %p77 = scmp.ne.s32.totalorder %s69, %s71
    %p78 = scmp.eq.s32.totalorder %s19, 1
    %p79 = por %p77, %p78
    %p80 = scmp.ne.s32.totalorder %s71, %s72
    %p81 = scmp.eq.s32.totalorder %s19, 0
    %p82 = por %p80, %p81
    %p83 = scmp.ne.s32.totalorder %s71, %s72
    %p84 = scmp.eq.s32.totalorder %s20, 1
    %p85 = por %p83, %p84
    %p87 = scmp.ne.s32.totalorder %s72, %s86
    %p88 = scmp.eq.s32.totalorder %s20, 0
    %p89 = por %p87, %p88
    %s91 = sadd.s32 %s90, 1
    %p94 = scmp.eq.s32.totalorder %s14, 1
    %p95 = scmp.ne.s32.totalorder %s90, %s92
    %p96 = scmp.eq.s32.totalorder %s14, 0
    %p97 = por %p95, %p96
    %p98 = scmp.ne.s32.totalorder %s90, %s92
    %p99 = scmp.eq.s32.totalorder %s19, 1
    %p100 = por %p98, %p99
    %p101 = scmp.ne.s32.totalorder %s92, %s93
    %p102 = scmp.eq.s32.totalorder %s19, 0
    %p103 = por %p101, %p102
    %p104 = scmp.ne.s32.totalorder %s92, %s93
    %p105 = scmp.eq.s32.totalorder %s20, 1
    %p106 = por %p104, %p105
    %p108 = scmp.ne.s32.totalorder %s93, %s107
    %p109 = scmp.eq.s32.totalorder %s20, 0
    %p110 = por %p108, %p109
    %s112 = sadd.s32 %s111, 1
    %p115 = scmp.eq.s32.totalorder %s14, 1
    %p116 = scmp.ne.s32.totalorder %s111, %s113
    %p117 = scmp.eq.s32.totalorder %s14, 0
    %p118 = por %p116, %p117
    %p119 = scmp.ne.s32.totalorder %s111, %s113
    %p120 = scmp.eq.s32.totalorder %s19, 1
    %p121 = por %p119, %p120
    %p122 = scmp.ne.s32.totalorder %s113, %s114
    %p123 = scmp.eq.s32.totalorder %s19, 0
    %p124 = por %p122, %p123
    %p125 = scmp.ne.s32.totalorder %s113, %s114
    %p126 = scmp.eq.s32.totalorder %s20, 1
    %p127 = por %p125, %p126
    %p129 = scmp.ne.s32.totalorder %s114, %s128
    %p130 = scmp.eq.s32.totalorder %s20, 0
    %p131 = por %p129, %p130
    %s133 = sadd.s32 %s132, 1
    %p136 = scmp.eq.s32.totalorder %s14, 1
    %p137 = scmp.ne.s32.totalorder %s132, %s134
    %p138 = scmp.eq.s32.totalorder %s14, 0
    %p139 = por %p137, %p138
    %p140 = scmp.ne.s32.totalorder %s132, %s134
    %p141 = scmp.eq.s32.totalorder %s19, 1
    %p142 = por %p140, %p141
    %p143 = scmp.ne.s32.totalorder %s134, %s135
    %p144 = scmp.eq.s32.totalorder %s19, 0
    %p145 = por %p143, %p144
    %p146 = scmp.ne.s32.totalorder %s134, %s135
    %p147 = scmp.eq.s32.totalorder %s20, 1
    %p148 = por %p146, %p147
    %p150 = scmp.ne.s32.totalorder %s135, %s149
    %p151 = scmp.eq.s32.totalorder %s20, 0
    %p152 = por %p150, %p151
    %s154 = sadd.s32 %s153, 1
    %p157 = scmp.eq.s32.totalorder %s14, 1
    %p158 = scmp.ne.s32.totalorder %s153, %s155
    %p159 = scmp.eq.s32.totalorder %s14, 0
    %p160 = por %p158, %p159
    %p161 = scmp.ne.s32.totalorder %s153, %s155
    %p162 = scmp.eq.s32.totalorder %s19, 1
    %p163 = por %p161, %p162
    %p164 = scmp.ne.s32.totalorder %s155, %s156
    %p165 = scmp.eq.s32.totalorder %s19, 0
    %p166 = por %p164, %p165
    %p167 = scmp.ne.s32.totalorder %s155, %s156
    %p168 = scmp.eq.s32.totalorder %s20, 1
    %p169 = por %p167, %p168
    %p171 = scmp.ne.s32.totalorder %s156, %s170
    %p172 = scmp.eq.s32.totalorder %s20, 0
    %p173 = por %p171, %p172
    %s175 = sadd.s32 %s174, 1
    %p178 = scmp.eq.s32.totalorder %s14, 1
    %p179 = scmp.ne.s32.totalorder %s174, %s176
    %p180 = scmp.eq.s32.totalorder %s14, 0
    %p181 = por %p179, %p180
    %p182 = scmp.ne.s32.totalorder %s174, %s176
    %p183 = scmp.eq.s32.totalorder %s19, 1
    %p184 = por %p182, %p183
    %p185 = scmp.ne.s32.totalorder %s176, %s177
    %p186 = scmp.eq.s32.totalorder %s19, 0
    %p187 = por %p185, %p186
    %p188 = scmp.ne.s32.totalorder %s176, %s177
    %p189 = scmp.eq.s32.totalorder %s20, 1
    %p190 = por %p188, %p189
    %p192 = scmp.ne.s32.totalorder %s177, %s191
    %p193 = scmp.eq.s32.totalorder %s20, 0
    %p194 = por %p192, %p193
    %s195 = ssub.s32 %s14, %s21
    %p196 = scmp.eq.s32.totalorder %s195, 0
    %s198 = sadd.s32 %s197, 1
    %s199 = scalar_select %p196, %s197, %s198
    %p202 = pneg %p196
    %p203 = scmp.eq.s32.totalorder %s14, 1
    %p204 = por %p202, %p203
    %p205 = scmp.ne.s32.totalorder %s197, %s200
    %p206 = scmp.eq.s32.totalorder %s14, 0
    %p207 = por %p205, %p206
    %p208 = scmp.ne.s32.totalorder %s197, %s200
    %p209 = scmp.eq.s32.totalorder %s19, 1
    %p210 = por %p208, %p209
    %p211 = scmp.ne.s32.totalorder %s200, %s201
    %p212 = scmp.eq.s32.totalorder %s19, 0
    %p213 = por %p211, %p212
    %p214 = scmp.ne.s32.totalorder %s200, %s201
    %p215 = scmp.eq.s32.totalorder %s20, 1
    %p216 = por %p214, %p215
    %p218 = scmp.ne.s32.totalorder %s201, %s217
    %p219 = scmp.eq.s32.totalorder %s20, 0
    %p220 = por %p218, %p219
    %p221 = scmp.le.s32.totalorder 1, %s14
    %p222 = scmp.lt.s32.totalorder %s14, 3
    %p223 = pnand %p221, %p222
    %p224 = pneg %p223
    // Predicated region
    $region9: #{bottleneck_forward.1} parent=5 // pred_check
      _
    $region10: #{bottleneck_forward.1} parent=5 // pred_check_branch
      %226 = sbr.rel (%p223) target = $region12
    $region11: #{bottleneck_forward.1} parent=5 // pred_region
      %s227 = ssub.s32 %s14, 1
      // Predicated region
      $region13: #{bottleneck_forward.1} parent=11 // pred_check
        %p228 = pneg %p61
      $region14: #{bottleneck_forward.1} parent=11 // pred_check_branch
        %230 = sbr.rel (%p228) target = $region16
      $region15: #{bottleneck_forward.1} parent=11 // pred_region
        _
      $region16: #{bottleneck_forward.1} parent=11 // pred_fallthru
        _
      // Predicated region
      $region17: #{bottleneck_forward.1} parent=11 // pred_check
        %p231 = pneg %p82
      $region18: #{bottleneck_forward.1} parent=11 // pred_check_branch
        %233 = sbr.rel (%p231) target = $region20
      $region19: #{bottleneck_forward.1} parent=11 // pred_region
        _
      $region20: #{bottleneck_forward.1} parent=11 // pred_fallthru
        _
      // Predicated region
      $region21: #{bottleneck_forward.1} parent=11 // pred_check
        %p234 = pneg %p103
      $region22: #{bottleneck_forward.1} parent=11 // pred_check_branch
        %236 = sbr.rel (%p234) target = $region24
      $region23: #{bottleneck_forward.1} parent=11 // pred_region
        _
      $region24: #{bottleneck_forward.1} parent=11 // pred_fallthru
        _
      // Predicated region
      $region25: #{bottleneck_forward.1} parent=11 // pred_check
        %p237 = pneg %p124
      $region26: #{bottleneck_forward.1} parent=11 // pred_check_branch
        %239 = sbr.rel (%p237) target = $region28
      $region27: #{bottleneck_forward.1} parent=11 // pred_region
        _
      $region28: #{bottleneck_forward.1} parent=11 // pred_fallthru
        _
      // Predicated region
      $region29: #{bottleneck_forward.1} parent=11 // pred_check
        %p240 = pneg %p145
      $region30: #{bottleneck_forward.1} parent=11 // pred_check_branch
        %242 = sbr.rel (%p240) target = $region32
      $region31: #{bottleneck_forward.1} parent=11 // pred_region
        _
      $region32: #{bottleneck_forward.1} parent=11 // pred_fallthru
        _
      // Predicated region
      $region33: #{bottleneck_forward.1} parent=11 // pred_check
        %p243 = pneg %p166
      $region34: #{bottleneck_forward.1} parent=11 // pred_check_branch
        %245 = sbr.rel (%p243) target = $region36
      $region35: #{bottleneck_forward.1} parent=11 // pred_region
        _
      $region36: #{bottleneck_forward.1} parent=11 // pred_fallthru
        _
      // Predicated region
      $region37: #{bottleneck_forward.1} parent=11 // pred_check
        %p246 = pneg %p187
      $region38: #{bottleneck_forward.1} parent=11 // pred_check_branch
        %248 = sbr.rel (%p246) target = $region40
      $region39: #{bottleneck_forward.1} parent=11 // pred_region
        _
      $region40: #{bottleneck_forward.1} parent=11 // pred_fallthru
        _
    $region12: #{bottleneck_forward.1} parent=5 // pred_fallthru
      _
    %p249 = scmp.lt.s32.totalorder %s14, 2
    // Predicated region
    $region41: #{bottleneck_forward.1} parent=5 // pred_check
      %p250 = pneg %p249
    $region42: #{bottleneck_forward.1} parent=5 // pred_check_branch
      %252 = sbr.rel (%p250) target = $region44
    $region43: #{bottleneck_forward.1} parent=5 // pred_region
      // Predicated region
      $region45: #{bottleneck_forward.1} parent=43 // pred_check
        %p253 = pneg %p34
      $region46: #{bottleneck_forward.1} parent=43 // pred_check_branch
        %255 = sbr.rel (%p253) target = $region48
      $region47: #{bottleneck_forward.1} parent=43 // pred_region
        %p256 = scmp.lt.s32.totalorder %s14, 1
        %s257 = scalar_select %p256, %s14, 1
        %s258 = smul.addr %s257, 2
        %s259 = smul.addr %s258, 8
        %s260 = scalar_lea.vmem %s0, %s259
      $region48: #{bottleneck_forward.1} parent=43 // pred_fallthru
        _
    $region44: #{bottleneck_forward.1} parent=5 // pred_fallthru
      _
    %p261 = scmp.le.s32.totalorder 1, %s14
    %p262 = scmp.lt.s32.totalorder %s14, 3
    %p263 = pnand %p261, %p262
    %p264 = pneg %p263
    // Predicated region
    $region49: #{bottleneck_forward.1} parent=5 // pred_check
      _
    $region50: #{bottleneck_forward.1} parent=5 // pred_check_branch
      %266 = sbr.rel (%p263) target = $region52
    $region51: #{bottleneck_forward.1} parent=5 // pred_region
      %s267 = ssub.s32 %s14, 1
      %p268 = scmp.lt.s32.totalorder %s19, 1
      %s269 = scalar_select %p268, %s19, 1
      %s270 = smul.addr %s269, 2
      %s271 = smul.addr %s270, 8
      %s272 = scalar_lea.vmem %s0, %s271
      %p273 = pneg %p40
      %p274 = pneg %p37
      %p275 = pneg %p61
      %p276 = pneg %p58
      %p277 = pneg %p82
      %p278 = pneg %p79
      %p279 = pneg %p103
      %p280 = pneg %p100
      %p281 = pneg %p124
      %p282 = pneg %p121
      %p283 = pneg %p145
      %p284 = pneg %p142
      %p285 = pneg %p166
      %p286 = pneg %p163
      %p287 = pneg %p187
      %p288 = pneg %p184
      %p289 = pneg %p213
      %p290 = pneg %p210
      %p291 = scmp.lt.s32.totalorder %s19, 1
      %s292 = scalar_select %p291, %s19, 1
      %s293 = smul.addr %s292, 2
      %s294 = smul.addr %s293, 8
      %s295 = scalar_lea.vmem %s8, %s294
      %p296 = scmp.lt.s32.totalorder %s19, 1
      %s297 = scalar_select %p296, %s19, 1
      %s298 = smul.addr %s297, 2
      %s299 = smul.addr %s298, 8
      %s300 = scalar_lea.vmem %s0, %s299
      %p301 = scmp.lt.s32.totalorder %s19, 1
      %s302 = scalar_select %p301, %s19, 1
      %s303 = smul.addr %s302, 2
      %s304 = smul.addr %s303, 8
      %s305 = scalar_lea.vmem %s8, %s304
      %307 = vst [vmem:[#allocation2] sm:$0xff] 0.0
      %308 = vst [vmem:[#allocation2 + $0x18] sm:$0xff] 0.0
      %v309 = vlaneseq
      %v310 = vand.u32 %v309, 127
      %v311 = vadd.s32 %v310, 128
      %vm312 = vcmp.lt.s32.totalorder %v310, 0
      %v313 = vsub.s32 0, %v310
      %v314 = vsel %vm312, %v313, %v310
      %v315 = vshrl.u32 %v314, 4
      %v316 = vand.u32 %v314, 15
      %v317 = vsub.s32 0, %v316
      %v318 = vsel %vm312, %v317, %v316
      %vm319 = vcmp.lt.s32.totalorder %v311, 0
      %v320 = vsub.s32 0, %v311
      %v321 = vsel %vm319, %v320, %v311
      %v322 = vshrl.u32 %v321, 4
      %v323 = vand.u32 %v321, 15
      %v324 = vsub.s32 0, %v323
      %v325 = vsel %vm319, %v324, %v323
      %vm326 = vcmp.ne.s32.totalorder %v318, 0
      %vm327 = vcmp.ne.s32.totalorder %v325, 0
      %vm328 = vcmp.lt.s32.totalorder %v318, 0
      %vm329 = vcmp.lt.s32.totalorder %v325, 0
      %vm330 = vmand %vm328, %vm326
      %vm331 = vmand %vm329, %vm327
      %v332 = vadd.s32 %v318, 16
      %v333 = vadd.s32 %v325, 16
      %v334 = vsel %vm330, %v332, %v318
      %v335 = vsel %vm331, %v333, %v325
      %vm336 = vcmp.ge.s32.totalorder %v334, 1
      %vm337 = vcmp.ge.s32.totalorder %v335, 1
      %vm338 = vcmp.le.s32.totalorder %v334, 14
      %vm339 = vcmp.le.s32.totalorder %v335, 14
      %v340 = vld [vmem:[%s2] sm:$0xff]
      %342 = vset.pattern.permute.xlu0 0
      %343 = vperm.xlu0 %342, %v340
      %v344 = vpop.permute.xlu0 %343
      %v346 = vld [vmem:[%s4] sm:$0xff]
      %348 = vset.pattern.permute.xlu0 0
      %349 = vperm.xlu0 %348, %v346
      %v350 = vpop.permute.xlu0 %349
      %v352 = vld [vmem:[%s7] sm:$0xff]
      %354 = vset.pattern.permute.xlu0 0
      %355 = vperm.xlu0 %354, %v352
      %v356 = vpop.permute.xlu0 %355
      %v358 = vld [vmem:[%s300] sm:$0xff]
      %v359 = vld [vmem:[%s300 + $0x8] sm:$0xff]
      %360 = vst [vmem:[#allocation2 + $0x8] sm:$0xff] %v358
      %361 = vst [vmem:[#allocation2 + $0x10] sm:$0xff] %v359
      %v362 = vld [vmem:[#allocation2] sm:$0xff]
      %v363 = vld [vmem:[#allocation2 + $0x8] sm:$0xff]
      %v364 = vld [vmem:[#allocation2 + $0x10] sm:$0xff]
      %v365 = vsel %vm336, 1, 0
      %v366 = vsel %vm337, 1, 0
      %vm367 = vcmp.eq.s32.totalorder %v365, 1
      %vm368 = vcmp.eq.s32.totalorder %v366, 1
      %372 = vrot.lane.b32.xlu0 %v362, 17
      %v373 = vpop.permute.xlu0 %372
      %374 = vrot.lane.b32.xlu0 %v363, 17
      %v375 = vpop.permute.xlu0 %374
      %376 = vrot.lane.b32.xlu0 %v364, 17
      %v377 = vpop.permute.xlu0 %376
      %vm378 = vcmask 138240
      %v379 = vsel %vm378, %v373, %v375
      %v380 = vsel %vm378, %v375, %v377
      %v383 = vsel %vm367, %v379, 0.0
      %v384 = vsel %vm368, %v380, 0.0
      %v385 = vpack.c.bf16 %v383, %v383
      %v386 = vpack.c.bf16 %v384, %v384
      %v387 = vld [vmem:[%s1] sm:$0xf]
      %vm388 = vcmask 64512
      %v390 = vsel %vm388, %v387, 0
      %vm392 = vcmask 1043456
      %v394 = vsel %vm392, %v385, 0
      %v397 = vsel %vm392, %v386, 0
      %399 = vmatprep.subr.bf16.mxu0 %v397
      %400 = vmatpush1.bf16.msra.mxu0 %v394
      %401 = vmatprep.subr.bf16.mxu0 0
      %402 = vmatpush1.bf16.msra.mxu0 0
      %403 = vmatprep.subr.bf16.mxu0 0
      %404 = vmatpush1.bf16.msra.mxu0 0
      %405 = vmatprep.subr.bf16.mxu0 0
      %406 = vmatpush1.bf16.msra.mxu0 0
      %407 = vmatprep.subr.bf16.mxu0 0
      %408 = vmatpush1.bf16.msra.mxu0 0
      %409 = vmatprep.subr.bf16.mxu0 0
      %410 = vmatpush1.bf16.msra.mxu0 0
      %411 = vmatprep.subr.bf16.mxu0 0
      %412 = vmatpush1.bf16.msra.mxu0 0
      %413 = vmatprep.subr.bf16.mxu0 0
      %414 = vmatpush1.bf16.msra.mxu0 0
      %415 = vmatprep.subr.bf16.mxu0 0
      %416 = vmatpush1.bf16.msra.mxu0 0
      %417 = vmatprep.subr.bf16.mxu0 0
      %418 = vmatpush1.bf16.msra.mxu0 0
      %419 = vmatprep.subr.bf16.mxu0 0
      %420 = vmatpush1.bf16.msra.mxu0 0
      %421 = vmatprep.subr.bf16.mxu0 0
      %422 = vmatpush1.bf16.msra.mxu0 0
      %423 = vmatprep.subr.bf16.mxu0 0
      %424 = vmatpush1.bf16.msra.mxu0 0
      %425 = vmatprep.subr.bf16.mxu0 0
      %426 = vmatpush1.bf16.msra.mxu0 0
      %427 = vmatprep.subr.bf16.mxu0 0
      %428 = vmatpush1.bf16.msra.mxu0 0
      %429 = vmatprep.subr.bf16.mxu0 0
      %430 = vmatpush1.bf16.msra.mxu0 0
      %431 = vmatprep.mubr.bf16.mxu0 0
      %432 = vmatmul.mubr.bf16.gmra.mrb[0].mxu0 %v390
      %v433 = vpop.f32.mrb[0].mxu0
      %v434 = vadd.f32 0.0, %v433
      %v435 = vpop.f32.mrb[0].mxu0
      %v436 = vadd.f32 0.0, %v435
      %v437 = vpop.f32.mrb[0].mxu0
      %v438 = vpop.f32.mrb[0].mxu0
      %439 = vdwg.mxu0
      %v440 = vadd.f32 %v344, %v434
      %v441 = vadd.f32 %v344, %v436
      %v442 = vpack.c.bf16 %v362, %v362
      %v443 = vpack.c.bf16 %v363, %v363
      %v444 = vpack.c.bf16 %v364, %v364
      %v446 = vunpack.c.l.b16 %v387
      %v447 = vpack.c.b16 %v446, %v446
      %448 = vrot.lane.b32.xlu0 %v447, 120
      %v449 = vpop.permute.xlu0 %448
      %453 = vrot.lane.b32.xlu0 %v442, 16
      %v454 = vpop.permute.xlu0 %453
      %455 = vrot.lane.b32.xlu0 %v443, 16
      %v456 = vpop.permute.xlu0 %455
      %457 = vrot.lane.b32.xlu0 %v444, 16
      %v458 = vpop.permute.xlu0 %457
      %vm459 = vcmask 130048
      %v460 = vsel %vm459, %v454, %v456
      %v461 = vsel %vm459, %v456, %v458
      %v463 = vsel %vm388, %v449, 0
      %v466 = vsel %vm392, %v460, 0
      %v469 = vsel %vm392, %v461, 0
      %471 = vmatprep.subr.bf16.mxu0 %v469
      %472 = vmatpush1.bf16.msra.mxu0 %v466
      %473 = vmatprep.subr.bf16.mxu0 0
      %474 = vmatpush1.bf16.msra.mxu0 0
      %475 = vmatprep.subr.bf16.mxu0 0
      %476 = vmatpush1.bf16.msra.mxu0 0
      %477 = vmatprep.subr.bf16.mxu0 0
      %478 = vmatpush1.bf16.msra.mxu0 0
      %479 = vmatprep.subr.bf16.mxu0 0
      %480 = vmatpush1.bf16.msra.mxu0 0
      %481 = vmatprep.subr.bf16.mxu0 0
      %482 = vmatpush1.bf16.msra.mxu0 0
      %483 = vmatprep.subr.bf16.mxu0 0
      %484 = vmatpush1.bf16.msra.mxu0 0
      %485 = vmatprep.subr.bf16.mxu0 0
      %486 = vmatpush1.bf16.msra.mxu0 0
      %487 = vmatprep.subr.bf16.mxu0 0
      %488 = vmatpush1.bf16.msra.mxu0 0
      %489 = vmatprep.subr.bf16.mxu0 0
      %490 = vmatpush1.bf16.msra.mxu0 0
      %491 = vmatprep.subr.bf16.mxu0 0
      %492 = vmatpush1.bf16.msra.mxu0 0
      %493 = vmatprep.subr.bf16.mxu0 0
      %494 = vmatpush1.bf16.msra.mxu0 0
      %495 = vmatprep.subr.bf16.mxu0 0
      %496 = vmatpush1.bf16.msra.mxu0 0
      %497 = vmatprep.subr.bf16.mxu0 0
      %498 = vmatpush1.bf16.msra.mxu0 0
      %499 = vmatprep.subr.bf16.mxu0 0
      %500 = vmatpush1.bf16.msra.mxu0 0
      %501 = vmatprep.subr.bf16.mxu0 0
      %502 = vmatpush1.bf16.msra.mxu0 0
      %503 = vmatprep.mubr.bf16.mxu0 0
      %504 = vmatmul.mubr.bf16.gmra.mrb[0].mxu0 %v463
      %v505 = vpop.f32.mrb[0].mxu0
      %v506 = vadd.f32 0.0, %v505
      %v507 = vpop.f32.mrb[0].mxu0
      %v508 = vadd.f32 0.0, %v507
      %v509 = vpop.f32.mrb[0].mxu0
      %v510 = vpop.f32.mrb[0].mxu0
      %511 = vdwg.mxu0
      %v512 = vadd.f32 %v440, %v506
      %v513 = vadd.f32 %v441, %v508
      %v514 = vsel %vm338, 1, 0
      %v515 = vsel %vm339, 1, 0
      %vm516 = vcmp.eq.s32.totalorder %v514, 1
      %vm517 = vcmp.eq.s32.totalorder %v515, 1
      %518 = vrot.lane.b32.xlu0 %v362, 15
      %v519 = vpop.permute.xlu0 %518
      %520 = vrot.lane.b32.xlu0 %v363, 15
      %v521 = vpop.permute.xlu0 %520
      %522 = vrot.lane.b32.xlu0 %v364, 15
      %v523 = vpop.permute.xlu0 %522
      %vm524 = vcmask 121856
      %v525 = vsel %vm524, %v519, %v521
      %v526 = vsel %vm524, %v521, %v523
      %v529 = vsel %vm516, %v525, 0.0
      %v530 = vsel %vm517, %v526, 0.0
      %v531 = vpack.c.bf16 %v529, %v529
      %v532 = vpack.c.bf16 %v530, %v530
      %533 = vrot.lane.b32.xlu0 %v447, 112
      %v534 = vpop.permute.xlu0 %533
      %v536 = vsel %vm388, %v534, 0
      %v539 = vsel %vm392, %v531, 0
      %v542 = vsel %vm392, %v532, 0
      %544 = vmatprep.subr.bf16.mxu0 %v542
      %545 = vmatpush1.bf16.msra.mxu0 %v539
      %546 = vmatprep.subr.bf16.mxu0 0
      %547 = vmatpush1.bf16.msra.mxu0 0
      %548 = vmatprep.subr.bf16.mxu0 0
      %549 = vmatpush1.bf16.msra.mxu0 0
      %550 = vmatprep.subr.bf16.mxu0 0
      %551 = vmatpush1.bf16.msra.mxu0 0
      %552 = vmatprep.subr.bf16.mxu0 0
      %553 = vmatpush1.bf16.msra.mxu0 0
      %554 = vmatprep.subr.bf16.mxu0 0
      %555 = vmatpush1.bf16.msra.mxu0 0
      %556 = vmatprep.subr.bf16.mxu0 0
      %557 = vmatpush1.bf16.msra.mxu0 0
      %558 = vmatprep.subr.bf16.mxu0 0
      %559 = vmatpush1.bf16.msra.mxu0 0
      %560 = vmatprep.subr.bf16.mxu0 0
      %561 = vmatpush1.bf16.msra.mxu0 0
      %562 = vmatprep.subr.bf16.mxu0 0
      %563 = vmatpush1.bf16.msra.mxu0 0
      %564 = vmatprep.subr.bf16.mxu0 0
      %565 = vmatpush1.bf16.msra.mxu0 0
      %566 = vmatprep.subr.bf16.mxu0 0
      %567 = vmatpush1.bf16.msra.mxu0 0
      %568 = vmatprep.subr.bf16.mxu0 0
      %569 = vmatpush1.bf16.msra.mxu0 0
      %570 = vmatprep.subr.bf16.mxu0 0
      %571 = vmatpush1.bf16.msra.mxu0 0
      %572 = vmatprep.subr.bf16.mxu0 0
      %573 = vmatpush1.bf16.msra.mxu0 0
      %574 = vmatprep.subr.bf16.mxu0 0
      %575 = vmatpush1.bf16.msra.mxu0 0
      %576 = vmatprep.mubr.bf16.mxu0 0
      %577 = vmatmul.mubr.bf16.gmra.mrb[0].mxu0 %v536
      %v578 = vpop.f32.mrb[0].mxu0
      %v579 = vadd.f32 0.0, %v578
      %v580 = vpop.f32.mrb[0].mxu0
      %v581 = vadd.f32 0.0, %v580
      %v582 = vpop.f32.mrb[0].mxu0
      %v583 = vpop.f32.mrb[0].mxu0
      %584 = vdwg.mxu0
      %v585 = vadd.f32 %v512, %v579
      %v586 = vadd.f32 %v513, %v581
      %587 = vrot.lane.b32.xlu0 %v362, 1
      %v588 = vpop.permute.xlu0 %587
      %589 = vrot.lane.b32.xlu0 %v363, 1
      %v590 = vpop.permute.xlu0 %589
      %591 = vrot.lane.b32.xlu0 %v364, 1
      %v592 = vpop.permute.xlu0 %591
      %vm593 = vcmask 7168
      %v594 = vsel %vm593, %v588, %v590
      %v595 = vsel %vm593, %v590, %v592
      %v598 = vsel %vm367, %v594, 0.0
      %v599 = vsel %vm368, %v595, 0.0
      %v600 = vpack.c.bf16 %v598, %v598
      %v601 = vpack.c.bf16 %v599, %v599
      %602 = vrot.lane.b32.xlu0 %v447, 104
      %v603 = vpop.permute.xlu0 %602
      %v605 = vsel %vm388, %v603, 0
      %v608 = vsel %vm392, %v600, 0
      %v611 = vsel %vm392, %v601, 0
      %613 = vmatprep.subr.bf16.mxu0 %v611
      %614 = vmatpush1.bf16.msra.mxu0 %v608
      %615 = vmatprep.subr.bf16.mxu0 0
      %616 = vmatpush1.bf16.msra.mxu0 0
      %617 = vmatprep.subr.bf16.mxu0 0
      %618 = vmatpush1.bf16.msra.mxu0 0
      %619 = vmatprep.subr.bf16.mxu0 0
      %620 = vmatpush1.bf16.msra.mxu0 0
      %621 = vmatprep.subr.bf16.mxu0 0
      %622 = vmatpush1.bf16.msra.mxu0 0
      %623 = vmatprep.subr.bf16.mxu0 0
      %624 = vmatpush1.bf16.msra.mxu0 0
      %625 = vmatprep.subr.bf16.mxu0 0
      %626 = vmatpush1.bf16.msra.mxu0 0
      %627 = vmatprep.subr.bf16.mxu0 0
      %628 = vmatpush1.bf16.msra.mxu0 0
      %629 = vmatprep.subr.bf16.mxu0 0
      %630 = vmatpush1.bf16.msra.mxu0 0
      %631 = vmatprep.subr.bf16.mxu0 0
      %632 = vmatpush1.bf16.msra.mxu0 0
      %633 = vmatprep.subr.bf16.mxu0 0
      %634 = vmatpush1.bf16.msra.mxu0 0
      %635 = vmatprep.subr.bf16.mxu0 0
      %636 = vmatpush1.bf16.msra.mxu0 0
      %637 = vmatprep.subr.bf16.mxu0 0
      %638 = vmatpush1.bf16.msra.mxu0 0
      %639 = vmatprep.subr.bf16.mxu0 0
      %640 = vmatpush1.bf16.msra.mxu0 0
      %641 = vmatprep.subr.bf16.mxu0 0
      %642 = vmatpush1.bf16.msra.mxu0 0
      %643 = vmatprep.subr.bf16.mxu0 0
      %644 = vmatpush1.bf16.msra.mxu0 0
      %645 = vmatprep.mubr.bf16.mxu0 0
      %646 = vmatmul.mubr.bf16.gmra.mrb[0].mxu0 %v605
      %v647 = vpop.f32.mrb[0].mxu0
      %v648 = vadd.f32 0.0, %v647
      %v649 = vpop.f32.mrb[0].mxu0
      %v650 = vadd.f32 0.0, %v649
      %v651 = vpop.f32.mrb[0].mxu0
      %v652 = vpop.f32.mrb[0].mxu0
      %653 = vdwg.mxu0
      %v654 = vadd.f32 %v585, %v648
      %v655 = vadd.f32 %v586, %v650
      %656 = vrot.lane.b32.xlu0 %v447, 96
      %v657 = vpop.permute.xlu0 %656
      %v659 = vsel %vm388, %v657, 0
      %v662 = vsel %vm392, %v443, 0
      %v665 = vsel %vm392, %v444, 0
      %667 = vmatprep.subr.bf16.mxu0 %v665
      %668 = vmatpush1.bf16.msra.mxu0 %v662
      %669 = vmatprep.subr.bf16.mxu0 0
      %670 = vmatpush1.bf16.msra.mxu0 0
      %671 = vmatprep.subr.bf16.mxu0 0
      %672 = vmatpush1.bf16.msra.mxu0 0
      %673 = vmatprep.subr.bf16.mxu0 0
      %674 = vmatpush1.bf16.msra.mxu0 0
      %675 = vmatprep.subr.bf16.mxu0 0
      %676 = vmatpush1.bf16.msra.mxu0 0
      %677 = vmatprep.subr.bf16.mxu0 0
      %678 = vmatpush1.bf16.msra.mxu0 0
      %679 = vmatprep.subr.bf16.mxu0 0
      %680 = vmatpush1.bf16.msra.mxu0 0
      %681 = vmatprep.subr.bf16.mxu0 0
      %682 = vmatpush1.bf16.msra.mxu0 0
      %683 = vmatprep.subr.bf16.mxu0 0
      %684 = vmatpush1.bf16.msra.mxu0 0
      %685 = vmatprep.subr.bf16.mxu0 0
      %686 = vmatpush1.bf16.msra.mxu0 0
      %687 = vmatprep.subr.bf16.mxu0 0
      %688 = vmatpush1.bf16.msra.mxu0 0
      %689 = vmatprep.subr.bf16.mxu0 0
      %690 = vmatpush1.bf16.msra.mxu0 0
      %691 = vmatprep.subr.bf16.mxu0 0
      %692 = vmatpush1.bf16.msra.mxu0 0
      %693 = vmatprep.subr.bf16.mxu0 0
      %694 = vmatpush1.bf16.msra.mxu0 0
      %695 = vmatprep.subr.bf16.mxu0 0
      %696 = vmatpush1.bf16.msra.mxu0 0
      %697 = vmatprep.subr.bf16.mxu0 0
      %698 = vmatpush1.bf16.msra.mxu0 0
      %699 = vmatprep.mubr.bf16.mxu0 0
      %700 = vmatmul.mubr.bf16.gmra.mrb[0].mxu0 %v659
      %v701 = vpop.f32.mrb[0].mxu0
      %v702 = vadd.f32 0.0, %v701
      %v703 = vpop.f32.mrb[0].mxu0
      %v704 = vadd.f32 0.0, %v703
      %v705 = vpop.f32.mrb[0].mxu0
      %v706 = vpop.f32.mrb[0].mxu0
      %707 = vdwg.mxu0
      %v708 = vadd.f32 %v654, %v702
      %v709 = vadd.f32 %v655, %v704
      %v710 = vld [vmem:[#allocation2 + $0x8] sm:$0xff]
      %v711 = vld [vmem:[#allocation2 + $0x10] sm:$0xff]
      %v712 = vld [vmem:[#allocation2 + $0x18] sm:$0xff]
      %716 = vrot.lane.b32.xlu0 %v710, 127
      %v717 = vpop.permute.xlu0 %716
      %718 = vrot.lane.b32.xlu0 %v711, 127
      %v719 = vpop.permute.xlu0 %718
      %720 = vrot.lane.b32.xlu0 %v712, 127
      %v721 = vpop.permute.xlu0 %720
      %vm722 = vcmask 1039360
      %v723 = vsel %vm722, %v717, %v719
      %v724 = vsel %vm722, %v719, %v721
      %v727 = vsel %vm516, %v723, 0.0
      %v728 = vsel %vm517, %v724, 0.0
      %v729 = vpack.c.bf16 %v727, %v727
      %v730 = vpack.c.bf16 %v728, %v728
      %731 = vrot.lane.b32.xlu0 %v447, 88
      %v732 = vpop.permute.xlu0 %731
      %v734 = vsel %vm388, %v732, 0
      %v737 = vsel %vm392, %v729, 0
      %v740 = vsel %vm392, %v730, 0
      %742 = vmatprep.subr.bf16.mxu0 %v740
      %743 = vmatpush1.bf16.msra.mxu0 %v737
      %744 = vmatprep.subr.bf16.mxu0 0
      %745 = vmatpush1.bf16.msra.mxu0 0
      %746 = vmatprep.subr.bf16.mxu0 0
      %747 = vmatpush1.bf16.msra.mxu0 0
      %748 = vmatprep.subr.bf16.mxu0 0
      %749 = vmatpush1.bf16.msra.mxu0 0
      %750 = vmatprep.subr.bf16.mxu0 0
      %751 = vmatpush1.bf16.msra.mxu0 0
      %752 = vmatprep.subr.bf16.mxu0 0
      %753 = vmatpush1.bf16.msra.mxu0 0
      %754 = vmatprep.subr.bf16.mxu0 0
      %755 = vmatpush1.bf16.msra.mxu0 0
      %756 = vmatprep.subr.bf16.mxu0 0
      %757 = vmatpush1.bf16.msra.mxu0 0
      %758 = vmatprep.subr.bf16.mxu0 0
      %759 = vmatpush1.bf16.msra.mxu0 0
      %760 = vmatprep.subr.bf16.mxu0 0
      %761 = vmatpush1.bf16.msra.mxu0 0
      %762 = vmatprep.subr.bf16.mxu0 0
      %763 = vmatpush1.bf16.msra.mxu0 0
      %764 = vmatprep.subr.bf16.mxu0 0
      %765 = vmatpush1.bf16.msra.mxu0 0
      %766 = vmatprep.subr.bf16.mxu0 0
      %767 = vmatpush1.bf16.msra.mxu0 0
      %768 = vmatprep.subr.bf16.mxu0 0
      %769 = vmatpush1.bf16.msra.mxu0 0
      %770 = vmatprep.subr.bf16.mxu0 0
      %771 = vmatpush1.bf16.msra.mxu0 0
      %772 = vmatprep.subr.bf16.mxu0 0
      %773 = vmatpush1.bf16.msra.mxu0 0
      %774 = vmatprep.mubr.bf16.mxu0 0
      %775 = vmatmul.mubr.bf16.gmra.mrb[0].mxu0 %v734
      %v776 = vpop.f32.mrb[0].mxu0
      %v777 = vadd.f32 0.0, %v776
      %v778 = vpop.f32.mrb[0].mxu0
      %v779 = vadd.f32 0.0, %v778
      %v780 = vpop.f32.mrb[0].mxu0
      %v781 = vpop.f32.mrb[0].mxu0
      %782 = vdwg.mxu0
      %v783 = vadd.f32 %v708, %v777
      %v784 = vadd.f32 %v709, %v779
      %785 = vrot.lane.b32.xlu0 %v710, 113
      %v786 = vpop.permute.xlu0 %785
      %787 = vrot.lane.b32.xlu0 %v711, 113
      %v788 = vpop.permute.xlu0 %787
      %789 = vrot.lane.b32.xlu0 %v712, 113
      %v790 = vpop.permute.xlu0 %789
      %vm791 = vcmask 924672
      %v792 = vsel %vm791, %v786, %v788
      %v793 = vsel %vm791, %v788, %v790
      %v796 = vsel %vm367, %v792, 0.0
      %v797 = vsel %vm368, %v793, 0.0
      %v798 = vpack.c.bf16 %v796, %v796
      %v799 = vpack.c.bf16 %v797, %v797
      %800 = vrot.lane.b32.xlu0 %v447, 80
      %v801 = vpop.permute.xlu0 %800
      %v803 = vsel %vm388, %v801, 0
      %v806 = vsel %vm392, %v798, 0
      %v809 = vsel %vm392, %v799, 0
      %811 = vmatprep.subr.bf16.mxu0 %v809
      %812 = vmatpush1.bf16.msra.mxu0 %v806
      %813 = vmatprep.subr.bf16.mxu0 0
      %814 = vmatpush1.bf16.msra.mxu0 0
      %815 = vmatprep.subr.bf16.mxu0 0
      %816 = vmatpush1.bf16.msra.mxu0 0
      %817 = vmatprep.subr.bf16.mxu0 0
      %818 = vmatpush1.bf16.msra.mxu0 0
      %819 = vmatprep.subr.bf16.mxu0 0
      %820 = vmatpush1.bf16.msra.mxu0 0
      %821 = vmatprep.subr.bf16.mxu0 0
      %822 = vmatpush1.bf16.msra.mxu0 0
      %823 = vmatprep.subr.bf16.mxu0 0
      %824 = vmatpush1.bf16.msra.mxu0 0
      %825 = vmatprep.subr.bf16.mxu0 0
      %826 = vmatpush1.bf16.msra.mxu0 0
      %827 = vmatprep.subr.bf16.mxu0 0
      %828 = vmatpush1.bf16.msra.mxu0 0
      %829 = vmatprep.subr.bf16.mxu0 0
      %830 = vmatpush1.bf16.msra.mxu0 0
      %831 = vmatprep.subr.bf16.mxu0 0
      %832 = vmatpush1.bf16.msra.mxu0 0
      %833 = vmatprep.subr.bf16.mxu0 0
      %834 = vmatpush1.bf16.msra.mxu0 0
      %835 = vmatprep.subr.bf16.mxu0 0
      %836 = vmatpush1.bf16.msra.mxu0 0
      %837 = vmatprep.subr.bf16.mxu0 0
      %838 = vmatpush1.bf16.msra.mxu0 0
      %839 = vmatprep.subr.bf16.mxu0 0
      %840 = vmatpush1.bf16.msra.mxu0 0
      %841 = vmatprep.subr.bf16.mxu0 0
      %842 = vmatpush1.bf16.msra.mxu0 0
      %843 = vmatprep.mubr.bf16.mxu0 0
      %844 = vmatmul.mubr.bf16.gmra.mrb[0].mxu0 %v803
      %v845 = vpop.f32.mrb[0].mxu0
      %v846 = vadd.f32 0.0, %v845
      %v847 = vpop.f32.mrb[0].mxu0
      %v848 = vadd.f32 0.0, %v847
      %v849 = vpop.f32.mrb[0].mxu0
      %v850 = vpop.f32.mrb[0].mxu0
      %851 = vdwg.mxu0
      %v852 = vadd.f32 %v783, %v846
      %v853 = vadd.f32 %v784, %v848
      %v854 = vpack.c.bf16 %v710, %v710
      %v855 = vpack.c.bf16 %v711, %v711
      %v856 = vpack.c.bf16 %v712, %v712
      %857 = vrot.lane.b32.xlu0 %v447, 72
      %v858 = vpop.permute.xlu0 %857
      %862 = vrot.lane.b32.xlu0 %v854, 112
      %v863 = vpop.permute.xlu0 %862
      %864 = vrot.lane.b32.xlu0 %v855, 112
      %v865 = vpop.permute.xlu0 %864
      %866 = vrot.lane.b32.xlu0 %v856, 112
      %v867 = vpop.permute.xlu0 %866
      %vm868 = vcmask 916480
      %v869 = vsel %vm868, %v863, %v865
      %v870 = vsel %vm868, %v865, %v867
      %v872 = vsel %vm388, %v858, 0
      %v875 = vsel %vm392, %v869, 0
      %v878 = vsel %vm392, %v870, 0
      %880 = vmatprep.subr.bf16.mxu0 %v878
      %881 = vmatpush1.bf16.msra.mxu0 %v875
      %882 = vmatprep.subr.bf16.mxu0 0
      %883 = vmatpush1.bf16.msra.mxu0 0
      %884 = vmatprep.subr.bf16.mxu0 0
      %885 = vmatpush1.bf16.msra.mxu0 0
      %886 = vmatprep.subr.bf16.mxu0 0
      %887 = vmatpush1.bf16.msra.mxu0 0
      %888 = vmatprep.subr.bf16.mxu0 0
      %889 = vmatpush1.bf16.msra.mxu0 0
      %890 = vmatprep.subr.bf16.mxu0 0
      %891 = vmatpush1.bf16.msra.mxu0 0
      %892 = vmatprep.subr.bf16.mxu0 0
      %893 = vmatpush1.bf16.msra.mxu0 0
      %894 = vmatprep.subr.bf16.mxu0 0
      %895 = vmatpush1.bf16.msra.mxu0 0
      %896 = vmatprep.subr.bf16.mxu0 0
      %897 = vmatpush1.bf16.msra.mxu0 0
      %898 = vmatprep.subr.bf16.mxu0 0
      %899 = vmatpush1.bf16.msra.mxu0 0
      %900 = vmatprep.subr.bf16.mxu0 0
      %901 = vmatpush1.bf16.msra.mxu0 0
      %902 = vmatprep.subr.bf16.mxu0 0
      %903 = vmatpush1.bf16.msra.mxu0 0
      %904 = vmatprep.subr.bf16.mxu0 0
      %905 = vmatpush1.bf16.msra.mxu0 0
      %906 = vmatprep.subr.bf16.mxu0 0
      %907 = vmatpush1.bf16.msra.mxu0 0
      %908 = vmatprep.subr.bf16.mxu0 0
      %909 = vmatpush1.bf16.msra.mxu0 0
      %910 = vmatprep.subr.bf16.mxu0 0
      %911 = vmatpush1.bf16.msra.mxu0 0
      %912 = vmatprep.mubr.bf16.mxu0 0
      %913 = vmatmul.mubr.bf16.gmra.mrb[0].mxu0 %v872
      %v914 = vpop.f32.mrb[0].mxu0
      %v915 = vadd.f32 0.0, %v914
      %v916 = vpop.f32.mrb[0].mxu0
      %v917 = vadd.f32 0.0, %v916
      %v918 = vpop.f32.mrb[0].mxu0
      %v919 = vpop.f32.mrb[0].mxu0
      %920 = vdwg.mxu0
      %v921 = vadd.f32 %v852, %v915
      %v922 = vadd.f32 %v853, %v917
      %923 = vrot.lane.b32.xlu0 %v710, 111
      %v924 = vpop.permute.xlu0 %923
      %925 = vrot.lane.b32.xlu0 %v711, 111
      %v926 = vpop.permute.xlu0 %925
      %927 = vrot.lane.b32.xlu0 %v712, 111
      %v928 = vpop.permute.xlu0 %927
      %vm929 = vcmask 908288
      %v930 = vsel %vm929, %v924, %v926
      %v931 = vsel %vm929, %v926, %v928
      %v934 = vsel %vm516, %v930, 0.0
      %v935 = vsel %vm517, %v931, 0.0
      %v936 = vpack.c.bf16 %v934, %v934
      %v937 = vpack.c.bf16 %v935, %v935
      %938 = vrot.lane.b32.xlu0 %v447, 64
      %v939 = vpop.permute.xlu0 %938
      %v941 = vsel %vm388, %v939, 0
      %v944 = vsel %vm392, %v936, 0
      %v947 = vsel %vm392, %v937, 0
      %949 = vmatprep.subr.bf16.mxu0 %v947
      %950 = vmatpush1.bf16.msra.mxu0 %v944
      %951 = vmatprep.subr.bf16.mxu0 0
      %952 = vmatpush1.bf16.msra.mxu0 0
      %953 = vmatprep.subr.bf16.mxu0 0
      %954 = vmatpush1.bf16.msra.mxu0 0
      %955 = vmatprep.subr.bf16.mxu0 0
      %956 = vmatpush1.bf16.msra.mxu0 0
      %957 = vmatprep.subr.bf16.mxu0 0
      %958 = vmatpush1.bf16.msra.mxu0 0
      %959 = vmatprep.subr.bf16.mxu0 0
      %960 = vmatpush1.bf16.msra.mxu0 0
      %961 = vmatprep.subr.bf16.mxu0 0
      %962 = vmatpush1.bf16.msra.mxu0 0
      %963 = vmatprep.subr.bf16.mxu0 0
      %964 = vmatpush1.bf16.msra.mxu0 0
      %965 = vmatprep.subr.bf16.mxu0 0
      %966 = vmatpush1.bf16.msra.mxu0 0
      %967 = vmatprep.subr.bf16.mxu0 0
      %968 = vmatpush1.bf16.msra.mxu0 0
      %969 = vmatprep.subr.bf16.mxu0 0
      %970 = vmatpush1.bf16.msra.mxu0 0
      %971 = vmatprep.subr.bf16.mxu0 0
      %972 = vmatpush1.bf16.msra.mxu0 0
      %973 = vmatprep.subr.bf16.mxu0 0
      %974 = vmatpush1.bf16.msra.mxu0 0
      %975 = vmatprep.subr.bf16.mxu0 0
      %976 = vmatpush1.bf16.msra.mxu0 0
      %977 = vmatprep.subr.bf16.mxu0 0
      %978 = vmatpush1.bf16.msra.mxu0 0
      %979 = vmatprep.subr.bf16.mxu0 0
      %980 = vmatpush1.bf16.msra.mxu0 0
      %981 = vmatprep.mubr.bf16.mxu0 0
      %982 = vmatmul.mubr.bf16.gmra.mrb[0].mxu0 %v941
      %v983 = vpop.f32.mrb[0].mxu0
      %v984 = vadd.f32 0.0, %v983
      %v985 = vpop.f32.mrb[0].mxu0
      %v986 = vadd.f32 0.0, %v985
      %v987 = vpop.f32.mrb[0].mxu0
      %v988 = vpop.f32.mrb[0].mxu0
      %989 = vdwg.mxu0
      %v990 = vadd.f32 %v921, %v984
      %v991 = vadd.f32 %v922, %v986
      %v992 = vmax.f32 %v990, 0.0
      %v993 = vmax.f32 %v991, 0.0
      %994 = vst [vmem:[#allocation2 + $0x8] sm:$0xff] %v992
      %995 = vst [vmem:[#allocation2 + $0x10] sm:$0xff] %v993
      %v996 = vld [vmem:[#allocation2] sm:$0xff]
      %v997 = vld [vmem:[#allocation2 + $0x8] sm:$0xff]
      %v998 = vld [vmem:[#allocation2 + $0x10] sm:$0xff]
      %1002 = vrot.lane.b32.xlu0 %v996, 17
      %v1003 = vpop.permute.xlu0 %1002
      %1004 = vrot.lane.b32.xlu0 %v997, 17
      %v1005 = vpop.permute.xlu0 %1004
      %1006 = vrot.lane.b32.xlu0 %v998, 17
      %v1007 = vpop.permute.xlu0 %1006
      %v1008 = vsel %vm378, %v1003, %v1005
      %v1009 = vsel %vm378, %v1005, %v1007
      %v1012 = vsel %vm367, %v1008, 0.0
      %v1013 = vsel %vm368, %v1009, 0.0
      %v1014 = vpack.c.bf16 %v1012, %v1012
      %v1015 = vpack.c.bf16 %v1013, %v1013
      %v1016 = vld [vmem:[%s3] sm:$0xf]
      %v1018 = vsel %vm388, %v1016, 0
      %v1021 = vsel %vm392, %v1014, 0
      %v1024 = vsel %vm392, %v1015, 0
      %1026 = vmatprep.subr.bf16.mxu0 %v1024
      %1027 = vmatpush1.bf16.msra.mxu0 %v1021
      %1028 = vmatprep.subr.bf16.mxu0 0
      %1029 = vmatpush1.bf16.msra.mxu0 0
      %1030 = vmatprep.subr.bf16.mxu0 0
      %1031 = vmatpush1.bf16.msra.mxu0 0
      %1032 = vmatprep.subr.bf16.mxu0 0
      %1033 = vmatpush1.bf16.msra.mxu0 0
      %1034 = vmatprep.subr.bf16.mxu0 0
      %1035 = vmatpush1.bf16.msra.mxu0 0
      %1036 = vmatprep.subr.bf16.mxu0 0
      %1037 = vmatpush1.bf16.msra.mxu0 0
      %1038 = vmatprep.subr.bf16.mxu0 0
      %1039 = vmatpush1.bf16.msra.mxu0 0
      %1040 = vmatprep.subr.bf16.mxu0 0
      %1041 = vmatpush1.bf16.msra.mxu0 0
      %1042 = vmatprep.subr.bf16.mxu0 0
      %1043 = vmatpush1.bf16.msra.mxu0 0
      %1044 = vmatprep.subr.bf16.mxu0 0
      %1045 = vmatpush1.bf16.msra.mxu0 0
      %1046 = vmatprep.subr.bf16.mxu0 0
      %1047 = vmatpush1.bf16.msra.mxu0 0
      %1048 = vmatprep.subr.bf16.mxu0 0
      %1049 = vmatpush1.bf16.msra.mxu0 0
      %1050 = vmatprep.subr.bf16.mxu0 0
      %1051 = vmatpush1.bf16.msra.mxu0 0
      %1052 = vmatprep.subr.bf16.mxu0 0
      %1053 = vmatpush1.bf16.msra.mxu0 0
      %1054 = vmatprep.subr.bf16.mxu0 0
      %1055 = vmatpush1.bf16.msra.mxu0 0
      %1056 = vmatprep.subr.bf16.mxu0 0
      %1057 = vmatpush1.bf16.msra.mxu0 0
      %1058 = vmatprep.mubr.bf16.mxu0 0
      %1059 = vmatmul.mubr.bf16.gmra.mrb[0].mxu0 %v1018
      %v1060 = vpop.f32.mrb[0].mxu0
      %v1061 = vadd.f32 0.0, %v1060
      %v1062 = vpop.f32.mrb[0].mxu0
      %v1063 = vadd.f32 0.0, %v1062
      %v1064 = vpop.f32.mrb[0].mxu0
      %v1065 = vpop.f32.mrb[0].mxu0
      %1066 = vdwg.mxu0
      %v1067 = vadd.f32 %v350, %v1061
      %v1068 = vadd.f32 %v350, %v1063
      %v1069 = vpack.c.bf16 %v996, %v996
      %v1070 = vpack.c.bf16 %v997, %v997
      %v1071 = vpack.c.bf16 %v998, %v998
      %v1073 = vunpack.c.l.b16 %v1016
      %v1074 = vpack.c.b16 %v1073, %v1073
      %1075 = vrot.lane.b32.xlu0 %v1074, 120
      %v1076 = vpop.permute.xlu0 %1075
      %1080 = vrot.lane.b32.xlu0 %v1069, 16
      %v1081 = vpop.permute.xlu0 %1080
      %1082 = vrot.lane.b32.xlu0 %v1070, 16
      %v1083 = vpop.permute.xlu0 %1082
      %1084 = vrot.lane.b32.xlu0 %v1071, 16
      %v1085 = vpop.permute.xlu0 %1084
      %v1086 = vsel %vm459, %v1081, %v1083
      %v1087 = vsel %vm459, %v1083, %v1085
      %v1089 = vsel %vm388, %v1076, 0
      %v1092 = vsel %vm392, %v1086, 0
      %v1095 = vsel %vm392, %v1087, 0
      %1097 = vmatprep.subr.bf16.mxu0 %v1095
      %1098 = vmatpush1.bf16.msra.mxu0 %v1092
      %1099 = vmatprep.subr.bf16.mxu0 0
      %1100 = vmatpush1.bf16.msra.mxu0 0
      %1101 = vmatprep.subr.bf16.mxu0 0
      %1102 = vmatpush1.bf16.msra.mxu0 0
      %1103 = vmatprep.subr.bf16.mxu0 0
      %1104 = vmatpush1.bf16.msra.mxu0 0
      %1105 = vmatprep.subr.bf16.mxu0 0
      %1106 = vmatpush1.bf16.msra.mxu0 0
      %1107 = vmatprep.subr.bf16.mxu0 0
      %1108 = vmatpush1.bf16.msra.mxu0 0
      %1109 = vmatprep.subr.bf16.mxu0 0
      %1110 = vmatpush1.bf16.msra.mxu0 0
      %1111 = vmatprep.subr.bf16.mxu0 0
      %1112 = vmatpush1.bf16.msra.mxu0 0
      %1113 = vmatprep.subr.bf16.mxu0 0
      %1114 = vmatpush1.bf16.msra.mxu0 0
      %1115 = vmatprep.subr.bf16.mxu0 0
      %1116 = vmatpush1.bf16.msra.mxu0 0
      %1117 = vmatprep.subr.bf16.mxu0 0
      %1118 = vmatpush1.bf16.msra.mxu0 0
      %1119 = vmatprep.subr.bf16.mxu0 0
      %1120 = vmatpush1.bf16.msra.mxu0 0
      %1121 = vmatprep.subr.bf16.mxu0 0
      %1122 = vmatpush1.bf16.msra.mxu0 0
      %1123 = vmatprep.subr.bf16.mxu0 0
      %1124 = vmatpush1.bf16.msra.mxu0 0
      %1125 = vmatprep.subr.bf16.mxu0 0
      %1126 = vmatpush1.bf16.msra.mxu0 0
      %1127 = vmatprep.subr.bf16.mxu0 0
      %1128 = vmatpush1.bf16.msra.mxu0 0
      %1129 = vmatprep.mubr.bf16.mxu0 0
      %1130 = vmatmul.mubr.bf16.gmra.mrb[0].mxu0 %v1089
      %v1131 = vpop.f32.mrb[0].mxu0
      %v1132 = vadd.f32 0.0, %v1131
      %v1133 = vpop.f32.mrb[0].mxu0
      %v1134 = vadd.f32 0.0, %v1133
      %v1135 = vpop.f32.mrb[0].mxu0
      %v1136 = vpop.f32.mrb[0].mxu0
      %1137 = vdwg.mxu0
      %v1138 = vadd.f32 %v1067, %v1132
      %v1139 = vadd.f32 %v1068, %v1134
      %1140 = vrot.lane.b32.xlu0 %v996, 15
      %v1141 = vpop.permute.xlu0 %1140
      %1142 = vrot.lane.b32.xlu0 %v997, 15
      %v1143 = vpop.permute.xlu0 %1142
      %1144 = vrot.lane.b32.xlu0 %v998, 15
      %v1145 = vpop.permute.xlu0 %1144
      %v1146 = vsel %vm524, %v1141, %v1143
      %v1147 = vsel %vm524, %v1143, %v1145
      %v1150 = vsel %vm516, %v1146, 0.0
      %v1151 = vsel %vm517, %v1147, 0.0
      %v1152 = vpack.c.bf16 %v1150, %v1150
      %v1153 = vpack.c.bf16 %v1151, %v1151
      %1154 = vrot.lane.b32.xlu0 %v1074, 112
      %v1155 = vpop.permute.xlu0 %1154
      %v1157 = vsel %vm388, %v1155, 0
      %v1160 = vsel %vm392, %v1152, 0
      %v1163 = vsel %vm392, %v1153, 0
      %1165 = vmatprep.subr.bf16.mxu0 %v1163
      %1166 = vmatpush1.bf16.msra.mxu0 %v1160
      %1167 = vmatprep.subr.bf16.mxu0 0
      %1168 = vmatpush1.bf16.msra.mxu0 0
      %1169 = vmatprep.subr.bf16.mxu0 0
      %1170 = vmatpush1.bf16.msra.mxu0 0
      %1171 = vmatprep.subr.bf16.mxu0 0
      %1172 = vmatpush1.bf16.msra.mxu0 0
      %1173 = vmatprep.subr.bf16.mxu0 0
      %1174 = vmatpush1.bf16.msra.mxu0 0
      %1175 = vmatprep.subr.bf16.mxu0 0
      %1176 = vmatpush1.bf16.msra.mxu0 0
      %1177 = vmatprep.subr.bf16.mxu0 0
      %1178 = vmatpush1.bf16.msra.mxu0 0
      %1179 = vmatprep.subr.bf16.mxu0 0
      %1180 = vmatpush1.bf16.msra.mxu0 0
      %1181 = vmatprep.subr.bf16.mxu0 0
      %1182 = vmatpush1.bf16.msra.mxu0 0
      %1183 = vmatprep.subr.bf16.mxu0 0
      %1184 = vmatpush1.bf16.msra.mxu0 0
      %1185 = vmatprep.subr.bf16.mxu0 0
      %1186 = vmatpush1.bf16.msra.mxu0 0
      %1187 = vmatprep.subr.bf16.mxu0 0
      %1188 = vmatpush1.bf16.msra.mxu0 0
      %1189 = vmatprep.subr.bf16.mxu0 0
      %1190 = vmatpush1.bf16.msra.mxu0 0
      %1191 = vmatprep.subr.bf16.mxu0 0
      %1192 = vmatpush1.bf16.msra.mxu0 0
      %1193 = vmatprep.subr.bf16.mxu0 0
      %1194 = vmatpush1.bf16.msra.mxu0 0
      %1195 = vmatprep.subr.bf16.mxu0 0
      %1196 = vmatpush1.bf16.msra.mxu0 0
      %1197 = vmatprep.mubr.bf16.mxu0 0
      %1198 = vmatmul.mubr.bf16.gmra.mrb[0].mxu0 %v1157
      %v1199 = vpop.f32.mrb[0].mxu0
      %v1200 = vadd.f32 0.0, %v1199
      %v1201 = vpop.f32.mrb[0].mxu0
      %v1202 = vadd.f32 0.0, %v1201
      %v1203 = vpop.f32.mrb[0].mxu0
      %v1204 = vpop.f32.mrb[0].mxu0
      %1205 = vdwg.mxu0
      %v1206 = vadd.f32 %v1138, %v1200
      %v1207 = vadd.f32 %v1139, %v1202
      %1208 = vrot.lane.b32.xlu0 %v996, 1
      %v1209 = vpop.permute.xlu0 %1208
      %1210 = vrot.lane.b32.xlu0 %v997, 1
      %v1211 = vpop.permute.xlu0 %1210
      %1212 = vrot.lane.b32.xlu0 %v998, 1
      %v1213 = vpop.permute.xlu0 %1212
      %v1214 = vsel %vm593, %v1209, %v1211
      %v1215 = vsel %vm593, %v1211, %v1213
      %v1218 = vsel %vm367, %v1214, 0.0
      %v1219 = vsel %vm368, %v1215, 0.0
      %v1220 = vpack.c.bf16 %v1218, %v1218
      %v1221 = vpack.c.bf16 %v1219, %v1219
      %1222 = vrot.lane.b32.xlu0 %v1074, 104
      %v1223 = vpop.permute.xlu0 %1222
      %v1225 = vsel %vm388, %v1223, 0
      %v1228 = vsel %vm392, %v1220, 0
      %v1231 = vsel %vm392, %v1221, 0
      %1233 = vmatprep.subr.bf16.mxu0 %v1231
      %1234 = vmatpush1.bf16.msra.mxu0 %v1228
      %1235 = vmatprep.subr.bf16.mxu0 0
      %1236 = vmatpush1.bf16.msra.mxu0 0
      %1237 = vmatprep.subr.bf16.mxu0 0
      %1238 = vmatpush1.bf16.msra.mxu0 0
      %1239 = vmatprep.subr.bf16.mxu0 0
      %1240 = vmatpush1.bf16.msra.mxu0 0
      %1241 = vmatprep.subr.bf16.mxu0 0
      %1242 = vmatpush1.bf16.msra.mxu0 0
      %1243 = vmatprep.subr.bf16.mxu0 0
      %1244 = vmatpush1.bf16.msra.mxu0 0
      %1245 = vmatprep.subr.bf16.mxu0 0
      %1246 = vmatpush1.bf16.msra.mxu0 0
      %1247 = vmatprep.subr.bf16.mxu0 0
      %1248 = vmatpush1.bf16.msra.mxu0 0
      %1249 = vmatprep.subr.bf16.mxu0 0
      %1250 = vmatpush1.bf16.msra.mxu0 0
      %1251 = vmatprep.subr.bf16.mxu0 0
      %1252 = vmatpush1.bf16.msra.mxu0 0
      %1253 = vmatprep.subr.bf16.mxu0 0
      %1254 = vmatpush1.bf16.msra.mxu0 0
      %1255 = vmatprep.subr.bf16.mxu0 0
      %1256 = vmatpush1.bf16.msra.mxu0 0
      %1257 = vmatprep.subr.bf16.mxu0 0
      %1258 = vmatpush1.bf16.msra.mxu0 0
      %1259 = vmatprep.subr.bf16.mxu0 0
      %1260 = vmatpush1.bf16.msra.mxu0 0
      %1261 = vmatprep.subr.bf16.mxu0 0
      %1262 = vmatpush1.bf16.msra.mxu0 0
      %1263 = vmatprep.subr.bf16.mxu0 0
      %1264 = vmatpush1.bf16.msra.mxu0 0
      %1265 = vmatprep.mubr.bf16.mxu0 0
      %1266 = vmatmul.mubr.bf16.gmra.mrb[0].mxu0 %v1225
      %v1267 = vpop.f32.mrb[0].mxu0
      %v1268 = vadd.f32 0.0, %v1267
      %v1269 = vpop.f32.mrb[0].mxu0
      %v1270 = vadd.f32 0.0, %v1269
      %v1271 = vpop.f32.mrb[0].mxu0
      %v1272 = vpop.f32.mrb[0].mxu0
      %1273 = vdwg.mxu0
      %v1274 = vadd.f32 %v1206, %v1268
      %v1275 = vadd.f32 %v1207, %v1270
      %1276 = vrot.lane.b32.xlu0 %v1074, 96
      %v1277 = vpop.permute.xlu0 %1276
      %v1279 = vsel %vm388, %v1277, 0
      %v1282 = vsel %vm392, %v1070, 0
      %v1285 = vsel %vm392, %v1071, 0
      %1287 = vmatprep.subr.bf16.mxu0 %v1285
      %1288 = vmatpush1.bf16.msra.mxu0 %v1282
      %1289 = vmatprep.subr.bf16.mxu0 0
      %1290 = vmatpush1.bf16.msra.mxu0 0
      %1291 = vmatprep.subr.bf16.mxu0 0
      %1292 = vmatpush1.bf16.msra.mxu0 0
      %1293 = vmatprep.subr.bf16.mxu0 0
      %1294 = vmatpush1.bf16.msra.mxu0 0
      %1295 = vmatprep.subr.bf16.mxu0 0
      %1296 = vmatpush1.bf16.msra.mxu0 0
      %1297 = vmatprep.subr.bf16.mxu0 0
      %1298 = vmatpush1.bf16.msra.mxu0 0
      %1299 = vmatprep.subr.bf16.mxu0 0
      %1300 = vmatpush1.bf16.msra.mxu0 0
      %1301 = vmatprep.subr.bf16.mxu0 0
      %1302 = vmatpush1.bf16.msra.mxu0 0
      %1303 = vmatprep.subr.bf16.mxu0 0
      %1304 = vmatpush1.bf16.msra.mxu0 0
      %1305 = vmatprep.subr.bf16.mxu0 0
      %1306 = vmatpush1.bf16.msra.mxu0 0
      %1307 = vmatprep.subr.bf16.mxu0 0
      %1308 = vmatpush1.bf16.msra.mxu0 0
      %1309 = vmatprep.subr.bf16.mxu0 0
      %1310 = vmatpush1.bf16.msra.mxu0 0
      %1311 = vmatprep.subr.bf16.mxu0 0
      %1312 = vmatpush1.bf16.msra.mxu0 0
      %1313 = vmatprep.subr.bf16.mxu0 0
      %1314 = vmatpush1.bf16.msra.mxu0 0
      %1315 = vmatprep.subr.bf16.mxu0 0
      %1316 = vmatpush1.bf16.msra.mxu0 0
      %1317 = vmatprep.subr.bf16.mxu0 0
      %1318 = vmatpush1.bf16.msra.mxu0 0
      %1319 = vmatprep.mubr.bf16.mxu0 0
      %1320 = vmatmul.mubr.bf16.gmra.mrb[0].mxu0 %v1279
      %v1321 = vpop.f32.mrb[0].mxu0
      %v1322 = vadd.f32 0.0, %v1321
      %v1323 = vpop.f32.mrb[0].mxu0
      %v1324 = vadd.f32 0.0, %v1323
      %v1325 = vpop.f32.mrb[0].mxu0
      %v1326 = vpop.f32.mrb[0].mxu0
      %1327 = vdwg.mxu0
      %v1328 = vadd.f32 %v1274, %v1322
      %v1329 = vadd.f32 %v1275, %v1324
      %v1330 = vld [vmem:[#allocation2 + $0x8] sm:$0xff]
      %v1331 = vld [vmem:[#allocation2 + $0x10] sm:$0xff]
      %v1332 = vld [vmem:[#allocation2 + $0x18] sm:$0xff]
      %1336 = vrot.lane.b32.xlu0 %v1330, 127
      %v1337 = vpop.permute.xlu0 %1336
      %1338 = vrot.lane.b32.xlu0 %v1331, 127
      %v1339 = vpop.permute.xlu0 %1338
      %1340 = vrot.lane.b32.xlu0 %v1332, 127
      %v1341 = vpop.permute.xlu0 %1340
      %v1342 = vsel %vm722, %v1337, %v1339
      %v1343 = vsel %vm722, %v1339, %v1341
      %v1346 = vsel %vm516, %v1342, 0.0
      %v1347 = vsel %vm517, %v1343, 0.0
      %v1348 = vpack.c.bf16 %v1346, %v1346
      %v1349 = vpack.c.bf16 %v1347, %v1347
      %1350 = vrot.lane.b32.xlu0 %v1074, 88
      %v1351 = vpop.permute.xlu0 %1350
      %v1353 = vsel %vm388, %v1351, 0
      %v1356 = vsel %vm392, %v1348, 0
      %v1359 = vsel %vm392, %v1349, 0
      %1361 = vmatprep.subr.bf16.mxu0 %v1359
      %1362 = vmatpush1.bf16.msra.mxu0 %v1356
      %1363 = vmatprep.subr.bf16.mxu0 0
      %1364 = vmatpush1.bf16.msra.mxu0 0
      %1365 = vmatprep.subr.bf16.mxu0 0
      %1366 = vmatpush1.bf16.msra.mxu0 0
      %1367 = vmatprep.subr.bf16.mxu0 0
      %1368 = vmatpush1.bf16.msra.mxu0 0
      %1369 = vmatprep.subr.bf16.mxu0 0
      %1370 = vmatpush1.bf16.msra.mxu0 0
      %1371 = vmatprep.subr.bf16.mxu0 0
      %1372 = vmatpush1.bf16.msra.mxu0 0
      %1373 = vmatprep.subr.bf16.mxu0 0
      %1374 = vmatpush1.bf16.msra.mxu0 0
      %1375 = vmatprep.subr.bf16.mxu0 0
      %1376 = vmatpush1.bf16.msra.mxu0 0
      %1377 = vmatprep.subr.bf16.mxu0 0
      %1378 = vmatpush1.bf16.msra.mxu0 0
      %1379 = vmatprep.subr.bf16.mxu0 0
      %1380 = vmatpush1.bf16.msra.mxu0 0
      %1381 = vmatprep.subr.bf16.mxu0 0
      %1382 = vmatpush1.bf16.msra.mxu0 0
      %1383 = vmatprep.subr.bf16.mxu0 0
      %1384 = vmatpush1.bf16.msra.mxu0 0
      %1385 = vmatprep.subr.bf16.mxu0 0
      %1386 = vmatpush1.bf16.msra.mxu0 0
      %1387 = vmatprep.subr.bf16.mxu0 0
      %1388 = vmatpush1.bf16.msra.mxu0 0
      %1389 = vmatprep.subr.bf16.mxu0 0
      %1390 = vmatpush1.bf16.msra.mxu0 0
      %1391 = vmatprep.subr.bf16.mxu0 0
      %1392 = vmatpush1.bf16.msra.mxu0 0
      %1393 = vmatprep.mubr.bf16.mxu0 0
      %1394 = vmatmul.mubr.bf16.gmra.mrb[0].mxu0 %v1353
      %v1395 = vpop.f32.mrb[0].mxu0
      %v1396 = vadd.f32 0.0, %v1395
      %v1397 = vpop.f32.mrb[0].mxu0
      %v1398 = vadd.f32 0.0, %v1397
      %v1399 = vpop.f32.mrb[0].mxu0
      %v1400 = vpop.f32.mrb[0].mxu0
      %1401 = vdwg.mxu0
      %v1402 = vadd.f32 %v1328, %v1396
      %v1403 = vadd.f32 %v1329, %v1398
      %1404 = vrot.lane.b32.xlu0 %v1330, 113
      %v1405 = vpop.permute.xlu0 %1404
      %1406 = vrot.lane.b32.xlu0 %v1331, 113
      %v1407 = vpop.permute.xlu0 %1406
      %1408 = vrot.lane.b32.xlu0 %v1332, 113
      %v1409 = vpop.permute.xlu0 %1408
      %v1410 = vsel %vm791, %v1405, %v1407
      %v1411 = vsel %vm791, %v1407, %v1409
      %v1414 = vsel %vm367, %v1410, 0.0
      %v1415 = vsel %vm368, %v1411, 0.0
      %v1416 = vpack.c.bf16 %v1414, %v1414
      %v1417 = vpack.c.bf16 %v1415, %v1415
      %1418 = vrot.lane.b32.xlu0 %v1074, 80
      %v1419 = vpop.permute.xlu0 %1418
      %v1421 = vsel %vm388, %v1419, 0
      %v1424 = vsel %vm392, %v1416, 0
      %v1427 = vsel %vm392, %v1417, 0
      %1429 = vmatprep.subr.bf16.mxu0 %v1427
      %1430 = vmatpush1.bf16.msra.mxu0 %v1424
      %1431 = vmatprep.subr.bf16.mxu0 0
      %1432 = vmatpush1.bf16.msra.mxu0 0
      %1433 = vmatprep.subr.bf16.mxu0 0
      %1434 = vmatpush1.bf16.msra.mxu0 0
      %1435 = vmatprep.subr.bf16.mxu0 0
      %1436 = vmatpush1.bf16.msra.mxu0 0
      %1437 = vmatprep.subr.bf16.mxu0 0
      %1438 = vmatpush1.bf16.msra.mxu0 0
      %1439 = vmatprep.subr.bf16.mxu0 0
      %1440 = vmatpush1.bf16.msra.mxu0 0
      %1441 = vmatprep.subr.bf16.mxu0 0
      %1442 = vmatpush1.bf16.msra.mxu0 0
      %1443 = vmatprep.subr.bf16.mxu0 0
      %1444 = vmatpush1.bf16.msra.mxu0 0
      %1445 = vmatprep.subr.bf16.mxu0 0
      %1446 = vmatpush1.bf16.msra.mxu0 0
      %1447 = vmatprep.subr.bf16.mxu0 0
      %1448 = vmatpush1.bf16.msra.mxu0 0
      %1449 = vmatprep.subr.bf16.mxu0 0
      %1450 = vmatpush1.bf16.msra.mxu0 0
      %1451 = vmatprep.subr.bf16.mxu0 0
      %1452 = vmatpush1.bf16.msra.mxu0 0
      %1453 = vmatprep.subr.bf16.mxu0 0
      %1454 = vmatpush1.bf16.msra.mxu0 0
      %1455 = vmatprep.subr.bf16.mxu0 0
      %1456 = vmatpush1.bf16.msra.mxu0 0
      %1457 = vmatprep.subr.bf16.mxu0 0
      %1458 = vmatpush1.bf16.msra.mxu0 0
      %1459 = vmatprep.subr.bf16.mxu0 0
      %1460 = vmatpush1.bf16.msra.mxu0 0
      %1461 = vmatprep.mubr.bf16.mxu0 0
      %1462 = vmatmul.mubr.bf16.gmra.mrb[0].mxu0 %v1421
      %v1463 = vpop.f32.mrb[0].mxu0
      %v1464 = vadd.f32 0.0, %v1463
      %v1465 = vpop.f32.mrb[0].mxu0
      %v1466 = vadd.f32 0.0, %v1465
      %v1467 = vpop.f32.mrb[0].mxu0
      %v1468 = vpop.f32.mrb[0].mxu0
      %1469 = vdwg.mxu0
      %v1470 = vadd.f32 %v1402, %v1464
      %v1471 = vadd.f32 %v1403, %v1466
      %v1472 = vpack.c.bf16 %v1330, %v1330
      %v1473 = vpack.c.bf16 %v1331, %v1331
      %v1474 = vpack.c.bf16 %v1332, %v1332
      %1475 = vrot.lane.b32.xlu0 %v1074, 72
      %v1476 = vpop.permute.xlu0 %1475
      %1480 = vrot.lane.b32.xlu0 %v1472, 112
      %v1481 = vpop.permute.xlu0 %1480
      %1482 = vrot.lane.b32.xlu0 %v1473, 112
      %v1483 = vpop.permute.xlu0 %1482
      %1484 = vrot.lane.b32.xlu0 %v1474, 112
      %v1485 = vpop.permute.xlu0 %1484
      %v1486 = vsel %vm868, %v1481, %v1483
      %v1487 = vsel %vm868, %v1483, %v1485
      %v1489 = vsel %vm388, %v1476, 0
      %v1492 = vsel %vm392, %v1486, 0
      %v1495 = vsel %vm392, %v1487, 0
      %1497 = vmatprep.subr.bf16.mxu0 %v1495
      %1498 = vmatpush1.bf16.msra.mxu0 %v1492
      %1499 = vmatprep.subr.bf16.mxu0 0
      %1500 = vmatpush1.bf16.msra.mxu0 0
      %1501 = vmatprep.subr.bf16.mxu0 0
      %1502 = vmatpush1.bf16.msra.mxu0 0
      %1503 = vmatprep.subr.bf16.mxu0 0
      %1504 = vmatpush1.bf16.msra.mxu0 0
      %1505 = vmatprep.subr.bf16.mxu0 0
      %1506 = vmatpush1.bf16.msra.mxu0 0
      %1507 = vmatprep.subr.bf16.mxu0 0
      %1508 = vmatpush1.bf16.msra.mxu0 0
      %1509 = vmatprep.subr.bf16.mxu0 0
      %1510 = vmatpush1.bf16.msra.mxu0 0
      %1511 = vmatprep.subr.bf16.mxu0 0
      %1512 = vmatpush1.bf16.msra.mxu0 0
      %1513 = vmatprep.subr.bf16.mxu0 0
      %1514 = vmatpush1.bf16.msra.mxu0 0
      %1515 = vmatprep.subr.bf16.mxu0 0
      %1516 = vmatpush1.bf16.msra.mxu0 0
      %1517 = vmatprep.subr.bf16.mxu0 0
      %1518 = vmatpush1.bf16.msra.mxu0 0
      %1519 = vmatprep.subr.bf16.mxu0 0
      %1520 = vmatpush1.bf16.msra.mxu0 0
      %1521 = vmatprep.subr.bf16.mxu0 0
      %1522 = vmatpush1.bf16.msra.mxu0 0
      %1523 = vmatprep.subr.bf16.mxu0 0
      %1524 = vmatpush1.bf16.msra.mxu0 0
      %1525 = vmatprep.subr.bf16.mxu0 0
      %1526 = vmatpush1.bf16.msra.mxu0 0
      %1527 = vmatprep.subr.bf16.mxu0 0
      %1528 = vmatpush1.bf16.msra.mxu0 0
      %1529 = vmatprep.mubr.bf16.mxu0 0
      %1530 = vmatmul.mubr.bf16.gmra.mrb[0].mxu0 %v1489
      %v1531 = vpop.f32.mrb[0].mxu0
      %v1532 = vadd.f32 0.0, %v1531
      %v1533 = vpop.f32.mrb[0].mxu0
      %v1534 = vadd.f32 0.0, %v1533
      %v1535 = vpop.f32.mrb[0].mxu0
      %v1536 = vpop.f32.mrb[0].mxu0
      %1537 = vdwg.mxu0
      %v1538 = vadd.f32 %v1470, %v1532
      %v1539 = vadd.f32 %v1471, %v1534
      %1540 = vrot.lane.b32.xlu0 %v1330, 111
      %v1541 = vpop.permute.xlu0 %1540
      %1542 = vrot.lane.b32.xlu0 %v1331, 111
      %v1543 = vpop.permute.xlu0 %1542
      %1544 = vrot.lane.b32.xlu0 %v1332, 111
      %v1545 = vpop.permute.xlu0 %1544
      %v1546 = vsel %vm929, %v1541, %v1543
      %v1547 = vsel %vm929, %v1543, %v1545
      %v1550 = vsel %vm516, %v1546, 0.0
      %v1551 = vsel %vm517, %v1547, 0.0
      %v1552 = vpack.c.bf16 %v1550, %v1550
      %v1553 = vpack.c.bf16 %v1551, %v1551
      %1554 = vrot.lane.b32.xlu0 %v1074, 64
      %v1555 = vpop.permute.xlu0 %1554
      %v1557 = vsel %vm388, %v1555, 0
      %v1560 = vsel %vm392, %v1552, 0
      %v1563 = vsel %vm392, %v1553, 0
      %1565 = vmatprep.subr.bf16.mxu0 %v1563
      %1566 = vmatpush1.bf16.msra.mxu0 %v1560
      %1567 = vmatprep.subr.bf16.mxu0 0
      %1568 = vmatpush1.bf16.msra.mxu0 0
      %1569 = vmatprep.subr.bf16.mxu0 0
      %1570 = vmatpush1.bf16.msra.mxu0 0
      %1571 = vmatprep.subr.bf16.mxu0 0
      %1572 = vmatpush1.bf16.msra.mxu0 0
      %1573 = vmatprep.subr.bf16.mxu0 0
      %1574 = vmatpush1.bf16.msra.mxu0 0
      %1575 = vmatprep.subr.bf16.mxu0 0
      %1576 = vmatpush1.bf16.msra.mxu0 0
      %1577 = vmatprep.subr.bf16.mxu0 0
      %1578 = vmatpush1.bf16.msra.mxu0 0
      %1579 = vmatprep.subr.bf16.mxu0 0
      %1580 = vmatpush1.bf16.msra.mxu0 0
      %1581 = vmatprep.subr.bf16.mxu0 0
      %1582 = vmatpush1.bf16.msra.mxu0 0
      %1583 = vmatprep.subr.bf16.mxu0 0
      %1584 = vmatpush1.bf16.msra.mxu0 0
      %1585 = vmatprep.subr.bf16.mxu0 0
      %1586 = vmatpush1.bf16.msra.mxu0 0
      %1587 = vmatprep.subr.bf16.mxu0 0
      %1588 = vmatpush1.bf16.msra.mxu0 0
      %1589 = vmatprep.subr.bf16.mxu0 0
      %1590 = vmatpush1.bf16.msra.mxu0 0
      %1591 = vmatprep.subr.bf16.mxu0 0
      %1592 = vmatpush1.bf16.msra.mxu0 0
      %1593 = vmatprep.subr.bf16.mxu0 0
      %1594 = vmatpush1.bf16.msra.mxu0 0
      %1595 = vmatprep.subr.bf16.mxu0 0
      %1596 = vmatpush1.bf16.msra.mxu0 0
      %1597 = vmatprep.mubr.bf16.mxu0 0
      %1598 = vmatmul.mubr.bf16.gmra.mrb[0].mxu0 %v1557
      %v1599 = vpop.f32.mrb[0].mxu0
      %v1600 = vadd.f32 0.0, %v1599
      %v1601 = vpop.f32.mrb[0].mxu0
      %v1602 = vadd.f32 0.0, %v1601
      %v1603 = vpop.f32.mrb[0].mxu0
      %v1604 = vpop.f32.mrb[0].mxu0
      %1605 = vdwg.mxu0
      %v1606 = vadd.f32 %v1538, %v1600
      %v1607 = vadd.f32 %v1539, %v1602
      %v1608 = vmax.f32 %v1606, 0.0
      %v1609 = vmax.f32 %v1607, 0.0
      %1610 = vst [vmem:[#allocation2 + $0x8] sm:$0xff] %v1608
      %1611 = vst [vmem:[#allocation2 + $0x10] sm:$0xff] %v1609
      %v1612 = vld [vmem:[#allocation2] sm:$0xff]
      %v1613 = vld [vmem:[#allocation2 + $0x8] sm:$0xff]
      %v1614 = vld [vmem:[#allocation2 + $0x10] sm:$0xff]
      %1618 = vrot.lane.b32.xlu0 %v1612, 17
      %v1619 = vpop.permute.xlu0 %1618
      %1620 = vrot.lane.b32.xlu0 %v1613, 17
      %v1621 = vpop.permute.xlu0 %1620
      %1622 = vrot.lane.b32.xlu0 %v1614, 17
      %v1623 = vpop.permute.xlu0 %1622
      %v1624 = vsel %vm378, %v1619, %v1621
      %v1625 = vsel %vm378, %v1621, %v1623
      %v1628 = vsel %vm367, %v1624, 0.0
      %v1629 = vsel %vm368, %v1625, 0.0
      %v1630 = vpack.c.bf16 %v1628, %v1628
      %v1631 = vpack.c.bf16 %v1629, %v1629
      %v1632 = vld [vmem:[%s3] sm:$0xf]
      %v1634 = vsel %vm388, %v1632, 0
      %v1637 = vsel %vm392, %v1630, 0
      %v1640 = vsel %vm392, %v1631, 0
      %1642 = vmatprep.subr.bf16.mxu0 %v1640
      %1643 = vmatpush1.bf16.msra.mxu0 %v1637
      %1644 = vmatprep.subr.bf16.mxu0 0
      %1645 = vmatpush1.bf16.msra.mxu0 0
      %1646 = vmatprep.subr.bf16.mxu0 0
      %1647 = vmatpush1.bf16.msra.mxu0 0
      %1648 = vmatprep.subr.bf16.mxu0 0
      %1649 = vmatpush1.bf16.msra.mxu0 0
      %1650 = vmatprep.subr.bf16.mxu0 0
      %1651 = vmatpush1.bf16.msra.mxu0 0
      %1652 = vmatprep.subr.bf16.mxu0 0
      %1653 = vmatpush1.bf16.msra.mxu0 0
      %1654 = vmatprep.subr.bf16.mxu0 0
      %1655 = vmatpush1.bf16.msra.mxu0 0
      %1656 = vmatprep.subr.bf16.mxu0 0
      %1657 = vmatpush1.bf16.msra.mxu0 0
      %1658 = vmatprep.subr.bf16.mxu0 0
      %1659 = vmatpush1.bf16.msra.mxu0 0
      %1660 = vmatprep.subr.bf16.mxu0 0
      %1661 = vmatpush1.bf16.msra.mxu0 0
      %1662 = vmatprep.subr.bf16.mxu0 0
      %1663 = vmatpush1.bf16.msra.mxu0 0
      %1664 = vmatprep.subr.bf16.mxu0 0
      %1665 = vmatpush1.bf16.msra.mxu0 0
      %1666 = vmatprep.subr.bf16.mxu0 0
      %1667 = vmatpush1.bf16.msra.mxu0 0
      %1668 = vmatprep.subr.bf16.mxu0 0
      %1669 = vmatpush1.bf16.msra.mxu0 0
      %1670 = vmatprep.subr.bf16.mxu0 0
      %1671 = vmatpush1.bf16.msra.mxu0 0
      %1672 = vmatprep.subr.bf16.mxu0 0
      %1673 = vmatpush1.bf16.msra.mxu0 0
      %1674 = vmatprep.mubr.bf16.mxu0 0
      %1675 = vmatmul.mubr.bf16.gmra.mrb[0].mxu0 %v1634
      %v1676 = vpop.f32.mrb[0].mxu0
      %v1677 = vadd.f32 0.0, %v1676
      %v1678 = vpop.f32.mrb[0].mxu0
      %v1679 = vadd.f32 0.0, %v1678
      %v1680 = vpop.f32.mrb[0].mxu0
      %v1681 = vpop.f32.mrb[0].mxu0
      %1682 = vdwg.mxu0
      %v1683 = vadd.f32 %v350, %v1677
      %v1684 = vadd.f32 %v350, %v1679
      %v1685 = vld [vmem:[%s5] sm:$0xf]
      %v1686 = vpack.c.bf16 %v1612, %v1612
      %v1687 = vpack.c.bf16 %v1613, %v1613
      %v1688 = vpack.c.bf16 %v1614, %v1614
      %v1690 = vunpack.c.l.b16 %v1632
      %v1691 = vpack.c.b16 %v1690, %v1690
      %1692 = vrot.lane.b32.xlu0 %v1691, 120
      %v1693 = vpop.permute.xlu0 %1692
      %1697 = vrot.lane.b32.xlu0 %v1686, 16
      %v1698 = vpop.permute.xlu0 %1697
      %1699 = vrot.lane.b32.xlu0 %v1687, 16
      %v1700 = vpop.permute.xlu0 %1699
      %1701 = vrot.lane.b32.xlu0 %v1688, 16
      %v1702 = vpop.permute.xlu0 %1701
      %v1703 = vsel %vm459, %v1698, %v1700
      %v1704 = vsel %vm459, %v1700, %v1702
      %v1706 = vsel %vm388, %v1693, 0
      %v1709 = vsel %vm392, %v1703, 0
      %v1712 = vsel %vm392, %v1704, 0
      %1714 = vmatprep.subr.bf16.mxu0 %v1712
      %1715 = vmatpush1.bf16.msra.mxu0 %v1709
      %1716 = vmatprep.subr.bf16.mxu0 0
      %1717 = vmatpush1.bf16.msra.mxu0 0
      %1718 = vmatprep.subr.bf16.mxu0 0
      %1719 = vmatpush1.bf16.msra.mxu0 0
      %1720 = vmatprep.subr.bf16.mxu0 0
      %1721 = vmatpush1.bf16.msra.mxu0 0
      %1722 = vmatprep.subr.bf16.mxu0 0
      %1723 = vmatpush1.bf16.msra.mxu0 0
      %1724 = vmatprep.subr.bf16.mxu0 0
      %1725 = vmatpush1.bf16.msra.mxu0 0
      %1726 = vmatprep.subr.bf16.mxu0 0
      %1727 = vmatpush1.bf16.msra.mxu0 0
      %1728 = vmatprep.subr.bf16.mxu0 0
      %1729 = vmatpush1.bf16.msra.mxu0 0
      %1730 = vmatprep.subr.bf16.mxu0 0
      %1731 = vmatpush1.bf16.msra.mxu0 0
      %1732 = vmatprep.subr.bf16.mxu0 0
      %1733 = vmatpush1.bf16.msra.mxu0 0
      %1734 = vmatprep.subr.bf16.mxu0 0
      %1735 = vmatpush1.bf16.msra.mxu0 0
      %1736 = vmatprep.subr.bf16.mxu0 0
      %1737 = vmatpush1.bf16.msra.mxu0 0
      %1738 = vmatprep.subr.bf16.mxu0 0
      %1739 = vmatpush1.bf16.msra.mxu0 0
      %1740 = vmatprep.subr.bf16.mxu0 0
      %1741 = vmatpush1.bf16.msra.mxu0 0
      %1742 = vmatprep.subr.bf16.mxu0 0
      %1743 = vmatpush1.bf16.msra.mxu0 0
      %1744 = vmatprep.subr.bf16.mxu0 0
      %1745 = vmatpush1.bf16.msra.mxu0 0
      %1746 = vmatprep.mubr.bf16.mxu0 0
      %1747 = vmatmul.mubr.bf16.gmra.mrb[0].mxu0 %v1706
      %v1748 = vpop.f32.mrb[0].mxu0
      %v1749 = vadd.f32 0.0, %v1748
      %v1750 = vpop.f32.mrb[0].mxu0
      %v1751 = vadd.f32 0.0, %v1750
      %v1752 = vpop.f32.mrb[0].mxu0
      %v1753 = vpop.f32.mrb[0].mxu0
      %1754 = vdwg.mxu0
      %v1755 = vadd.f32 %v1683, %v1749
      %v1756 = vadd.f32 %v1684, %v1751
      %v1758 = vunpack.c.l.b16 %v1685
      %v1759 = vpack.c.b16 %v1758, %v1758
      %1760 = vrot.lane.b32.xlu0 %v1759, 120
      %v1761 = vpop.permute.xlu0 %1760
      %v1763 = vsel %vm388, %v1761, 0
      %1765 = vmatprep.subr.bf16.mxu0 %v1712
      %1766 = vmatpush1.bf16.msra.mxu0 %v1709
      %1767 = vmatprep.subr.bf16.mxu0 0
      %1768 = vmatpush1.bf16.msra.mxu0 0
      %1769 = vmatprep.subr.bf16.mxu0 0
      %1770 = vmatpush1.bf16.msra.mxu0 0
      %1771 = vmatprep.subr.bf16.mxu0 0
      %1772 = vmatpush1.bf16.msra.mxu0 0
      %1773 = vmatprep.subr.bf16.mxu0 0
      %1774 = vmatpush1.bf16.msra.mxu0 0
      %1775 = vmatprep.subr.bf16.mxu0 0
      %1776 = vmatpush1.bf16.msra.mxu0 0
      %1777 = vmatprep.subr.bf16.mxu0 0
      %1778 = vmatpush1.bf16.msra.mxu0 0
      %1779 = vmatprep.subr.bf16.mxu0 0
      %1780 = vmatpush1.bf16.msra.mxu0 0
      %1781 = vmatprep.subr.bf16.mxu0 0
      %1782 = vmatpush1.bf16.msra.mxu0 0
      %1783 = vmatprep.subr.bf16.mxu0 0
      %1784 = vmatpush1.bf16.msra.mxu0 0
      %1785 = vmatprep.subr.bf16.mxu0 0
      %1786 = vmatpush1.bf16.msra.mxu0 0
      %1787 = vmatprep.subr.bf16.mxu0 0
      %1788 = vmatpush1.bf16.msra.mxu0 0
      %1789 = vmatprep.subr.bf16.mxu0 0
      %1790 = vmatpush1.bf16.msra.mxu0 0
      %1791 = vmatprep.subr.bf16.mxu0 0
      %1792 = vmatpush1.bf16.msra.mxu0 0
      %1793 = vmatprep.subr.bf16.mxu0 0
      %1794 = vmatpush1.bf16.msra.mxu0 0
      %1795 = vmatprep.subr.bf16.mxu0 0
      %1796 = vmatpush1.bf16.msra.mxu0 0
      %1797 = vmatprep.mubr.bf16.mxu0 0
      %1798 = vmatmul.mubr.bf16.gmra.mrb[0].mxu0 %v1763
      %v1799 = vpop.f32.mrb[0].mxu0
      %v1800 = vadd.f32 0.0, %v1799
      %v1801 = vpop.f32.mrb[0].mxu0
      %v1802 = vadd.f32 0.0, %v1801
      %v1803 = vpop.f32.mrb[0].mxu0
      %v1804 = vpop.f32.mrb[0].mxu0
      %1805 = vdwg.mxu0
      %v1807 = vsel %vm388, %v1685, 0
      %1809 = vmatprep.subr.bf16.mxu0 %v1640
      %1810 = vmatpush1.bf16.msra.mxu0 %v1637
      %1811 = vmatprep.subr.bf16.mxu0 0
      %1812 = vmatpush1.bf16.msra.mxu0 0
      %1813 = vmatprep.subr.bf16.mxu0 0
      %1814 = vmatpush1.bf16.msra.mxu0 0
      %1815 = vmatprep.subr.bf16.mxu0 0
      %1816 = vmatpush1.bf16.msra.mxu0 0
      %1817 = vmatprep.subr.bf16.mxu0 0
      %1818 = vmatpush1.bf16.msra.mxu0 0
      %1819 = vmatprep.subr.bf16.mxu0 0
      %1820 = vmatpush1.bf16.msra.mxu0 0
      %1821 = vmatprep.subr.bf16.mxu0 0
      %1822 = vmatpush1.bf16.msra.mxu0 0
      %1823 = vmatprep.subr.bf16.mxu0 0
      %1824 = vmatpush1.bf16.msra.mxu0 0
      %1825 = vmatprep.subr.bf16.mxu0 0
      %1826 = vmatpush1.bf16.msra.mxu0 0
      %1827 = vmatprep.subr.bf16.mxu0 0
      %1828 = vmatpush1.bf16.msra.mxu0 0
      %1829 = vmatprep.subr.bf16.mxu0 0
      %1830 = vmatpush1.bf16.msra.mxu0 0
      %1831 = vmatprep.subr.bf16.mxu0 0
      %1832 = vmatpush1.bf16.msra.mxu0 0
      %1833 = vmatprep.subr.bf16.mxu0 0
      %1834 = vmatpush1.bf16.msra.mxu0 0
      %1835 = vmatprep.subr.bf16.mxu0 0
      %1836 = vmatpush1.bf16.msra.mxu0 0
      %1837 = vmatprep.subr.bf16.mxu0 0
      %1838 = vmatpush1.bf16.msra.mxu0 0
      %1839 = vmatprep.subr.bf16.mxu0 0
      %1840 = vmatpush1.bf16.msra.mxu0 0
      %1841 = vmatprep.mubr.bf16.mxu0 0
      %1842 = vmatmul.mubr.bf16.gmra.mrb[0].mxu0 %v1807
      %v1843 = vpop.f32.mrb[0].mxu0
      %v1844 = vadd.f32 %v1800, %v1843
      %v1845 = vpop.f32.mrb[0].mxu0
      %v1846 = vadd.f32 %v1802, %v1845
      %v1847 = vpop.f32.mrb[0].mxu0
      %v1848 = vpop.f32.mrb[0].mxu0
      %1849 = vdwg.mxu0
      %1850 = vrot.lane.b32.xlu0 %v1612, 15
      %v1851 = vpop.permute.xlu0 %1850
      %1852 = vrot.lane.b32.xlu0 %v1613, 15
      %v1853 = vpop.permute.xlu0 %1852
      %1854 = vrot.lane.b32.xlu0 %v1614, 15
      %v1855 = vpop.permute.xlu0 %1854
      %v1856 = vsel %vm524, %v1851, %v1853
      %v1857 = vsel %vm524, %v1853, %v1855
      %v1860 = vsel %vm516, %v1856, 0.0
      %v1861 = vsel %vm517, %v1857, 0.0
      %v1862 = vpack.c.bf16 %v1860, %v1860
      %v1863 = vpack.c.bf16 %v1861, %v1861
      %1864 = vrot.lane.b32.xlu0 %v1691, 112
      %v1865 = vpop.permute.xlu0 %1864
      %v1867 = vsel %vm388, %v1865, 0
      %v1870 = vsel %vm392, %v1862, 0
      %v1873 = vsel %vm392, %v1863, 0
      %1875 = vmatprep.subr.bf16.mxu0 %v1873
      %1876 = vmatpush1.bf16.msra.mxu0 %v1870
      %1877 = vmatprep.subr.bf16.mxu0 0
      %1878 = vmatpush1.bf16.msra.mxu0 0
      %1879 = vmatprep.subr.bf16.mxu0 0
      %1880 = vmatpush1.bf16.msra.mxu0 0
      %1881 = vmatprep.subr.bf16.mxu0 0
      %1882 = vmatpush1.bf16.msra.mxu0 0
      %1883 = vmatprep.subr.bf16.mxu0 0
      %1884 = vmatpush1.bf16.msra.mxu0 0
      %1885 = vmatprep.subr.bf16.mxu0 0
      %1886 = vmatpush1.bf16.msra.mxu0 0
      %1887 = vmatprep.subr.bf16.mxu0 0
      %1888 = vmatpush1.bf16.msra.mxu0 0
      %1889 = vmatprep.subr.bf16.mxu0 0
      %1890 = vmatpush1.bf16.msra.mxu0 0
      %1891 = vmatprep.subr.bf16.mxu0 0
      %1892 = vmatpush1.bf16.msra.mxu0 0
      %1893 = vmatprep.subr.bf16.mxu0 0
      %1894 = vmatpush1.bf16.msra.mxu0 0
      %1895 = vmatprep.subr.bf16.mxu0 0
      %1896 = vmatpush1.bf16.msra.mxu0 0
      %1897 = vmatprep.subr.bf16.mxu0 0
      %1898 = vmatpush1.bf16.msra.mxu0 0
      %1899 = vmatprep.subr.bf16.mxu0 0
      %1900 = vmatpush1.bf16.msra.mxu0 0
      %1901 = vmatprep.subr.bf16.mxu0 0
      %1902 = vmatpush1.bf16.msra.mxu0 0
      %1903 = vmatprep.subr.bf16.mxu0 0
      %1904 = vmatpush1.bf16.msra.mxu0 0
      %1905 = vmatprep.subr.bf16.mxu0 0
      %1906 = vmatpush1.bf16.msra.mxu0 0
      %1907 = vmatprep.mubr.bf16.mxu0 0
      %1908 = vmatmul.mubr.bf16.gmra.mrb[0].mxu0 %v1867
      %v1909 = vpop.f32.mrb[0].mxu0
      %v1910 = vadd.f32 0.0, %v1909
      %v1911 = vpop.f32.mrb[0].mxu0
      %v1912 = vadd.f32 0.0, %v1911
      %v1913 = vpop.f32.mrb[0].mxu0
      %v1914 = vpop.f32.mrb[0].mxu0
      %1915 = vdwg.mxu0
      %v1916 = vadd.f32 %v1755, %v1910
      %v1917 = vadd.f32 %v1756, %v1912
      %1918 = vrot.lane.b32.xlu0 %v1759, 112
      %v1919 = vpop.permute.xlu0 %1918
      %v1921 = vsel %vm388, %v1919, 0
      %1923 = vmatprep.subr.bf16.mxu0 %v1873
      %1924 = vmatpush1.bf16.msra.mxu0 %v1870
      %1925 = vmatprep.subr.bf16.mxu0 0
      %1926 = vmatpush1.bf16.msra.mxu0 0
      %1927 = vmatprep.subr.bf16.mxu0 0
      %1928 = vmatpush1.bf16.msra.mxu0 0
      %1929 = vmatprep.subr.bf16.mxu0 0
      %1930 = vmatpush1.bf16.msra.mxu0 0
      %1931 = vmatprep.subr.bf16.mxu0 0
      %1932 = vmatpush1.bf16.msra.mxu0 0
      %1933 = vmatprep.subr.bf16.mxu0 0
      %1934 = vmatpush1.bf16.msra.mxu0 0
      %1935 = vmatprep.subr.bf16.mxu0 0
      %1936 = vmatpush1.bf16.msra.mxu0 0
      %1937 = vmatprep.subr.bf16.mxu0 0
      %1938 = vmatpush1.bf16.msra.mxu0 0
      %1939 = vmatprep.subr.bf16.mxu0 0
      %1940 = vmatpush1.bf16.msra.mxu0 0
      %1941 = vmatprep.subr.bf16.mxu0 0
      %1942 = vmatpush1.bf16.msra.mxu0 0
      %1943 = vmatprep.subr.bf16.mxu0 0
      %1944 = vmatpush1.bf16.msra.mxu0 0
      %1945 = vmatprep.subr.bf16.mxu0 0
      %1946 = vmatpush1.bf16.msra.mxu0 0
      %1947 = vmatprep.subr.bf16.mxu0 0
      %1948 = vmatpush1.bf16.msra.mxu0 0
      %1949 = vmatprep.subr.bf16.mxu0 0
      %1950 = vmatpush1.bf16.msra.mxu0 0
      %1951 = vmatprep.subr.bf16.mxu0 0
      %1952 = vmatpush1.bf16.msra.mxu0 0
      %1953 = vmatprep.subr.bf16.mxu0 0
      %1954 = vmatpush1.bf16.msra.mxu0 0
      %1955 = vmatprep.mubr.bf16.mxu0 0
      %1956 = vmatmul.mubr.bf16.gmra.mrb[0].mxu0 %v1921
      %v1957 = vpop.f32.mrb[0].mxu0
      %v1958 = vadd.f32 0.0, %v1957
      %v1959 = vpop.f32.mrb[0].mxu0
      %v1960 = vadd.f32 0.0, %v1959
      %v1961 = vpop.f32.mrb[0].mxu0
      %v1962 = vpop.f32.mrb[0].mxu0
      %1963 = vdwg.mxu0
      %v1964 = vadd.f32 %v1844, %v1958
      %v1965 = vadd.f32 %v1846, %v1960
      %1966 = vrot.lane.b32.xlu0 %v1612, 1
      %v1967 = vpop.permute.xlu0 %1966
      %1968 = vrot.lane.b32.xlu0 %v1613, 1
      %v1969 = vpop.permute.xlu0 %1968
      %1970 = vrot.lane.b32.xlu0 %v1614, 1
      %v1971 = vpop.permute.xlu0 %1970
      %v1972 = vsel %vm593, %v1967, %v1969
      %v1973 = vsel %vm593, %v1969, %v1971
      %v1976 = vsel %vm367, %v1972, 0.0
      %v1977 = vsel %vm368, %v1973, 0.0
      %v1978 = vpack.c.bf16 %v1976, %v1976
      %v1979 = vpack.c.bf16 %v1977, %v1977
      %1980 = vrot.lane.b32.xlu0 %v1691, 104
      %v1981 = vpop.permute.xlu0 %1980
      %v1983 = vsel %vm388, %v1981, 0
      %v1986 = vsel %vm392, %v1978, 0
      %v1989 = vsel %vm392, %v1979, 0
      %1991 = vmatprep.subr.bf16.mxu0 %v1989
      %1992 = vmatpush1.bf16.msra.mxu0 %v1986
      %1993 = vmatprep.subr.bf16.mxu0 0
      %1994 = vmatpush1.bf16.msra.mxu0 0
      %1995 = vmatprep.subr.bf16.mxu0 0
      %1996 = vmatpush1.bf16.msra.mxu0 0
      %1997 = vmatprep.subr.bf16.mxu0 0
      %1998 = vmatpush1.bf16.msra.mxu0 0
      %1999 = vmatprep.subr.bf16.mxu0 0
      %2000 = vmatpush1.bf16.msra.mxu0 0
      %2001 = vmatprep.subr.bf16.mxu0 0
      %2002 = vmatpush1.bf16.msra.mxu0 0
      %2003 = vmatprep.subr.bf16.mxu0 0
      %2004 = vmatpush1.bf16.msra.mxu0 0
      %2005 = vmatprep.subr.bf16.mxu0 0
      %2006 = vmatpush1.bf16.msra.mxu0 0
      %2007 = vmatprep.subr.bf16.mxu0 0
      %2008 = vmatpush1.bf16.msra.mxu0 0
      %2009 = vmatprep.subr.bf16.mxu0 0
      %2010 = vmatpush1.bf16.msra.mxu0 0
      %2011 = vmatprep.subr.bf16.mxu0 0
      %2012 = vmatpush1.bf16.msra.mxu0 0
      %2013 = vmatprep.subr.bf16.mxu0 0
      %2014 = vmatpush1.bf16.msra.mxu0 0
      %2015 = vmatprep.subr.bf16.mxu0 0
      %2016 = vmatpush1.bf16.msra.mxu0 0
      %2017 = vmatprep.subr.bf16.mxu0 0
      %2018 = vmatpush1.bf16.msra.mxu0 0
      %2019 = vmatprep.subr.bf16.mxu0 0
      %2020 = vmatpush1.bf16.msra.mxu0 0
      %2021 = vmatprep.subr.bf16.mxu0 0
      %2022 = vmatpush1.bf16.msra.mxu0 0
      %2023 = vmatprep.mubr.bf16.mxu0 0
      %2024 = vmatmul.mubr.bf16.gmra.mrb[0].mxu0 %v1983
      %v2025 = vpop.f32.mrb[0].mxu0
      %v2026 = vadd.f32 0.0, %v2025
      %v2027 = vpop.f32.mrb[0].mxu0
      %v2028 = vadd.f32 0.0, %v2027
      %v2029 = vpop.f32.mrb[0].mxu0
      %v2030 = vpop.f32.mrb[0].mxu0
      %2031 = vdwg.mxu0
      %v2032 = vadd.f32 %v1916, %v2026
      %v2033 = vadd.f32 %v1917, %v2028
      %2034 = vrot.lane.b32.xlu0 %v1759, 104
      %v2035 = vpop.permute.xlu0 %2034
      %v2037 = vsel %vm388, %v2035, 0
      %2039 = vmatprep.subr.bf16.mxu0 %v1989
      %2040 = vmatpush1.bf16.msra.mxu0 %v1986
      %2041 = vmatprep.subr.bf16.mxu0 0
      %2042 = vmatpush1.bf16.msra.mxu0 0
      %2043 = vmatprep.subr.bf16.mxu0 0
      %2044 = vmatpush1.bf16.msra.mxu0 0
      %2045 = vmatprep.subr.bf16.mxu0 0
      %2046 = vmatpush1.bf16.msra.mxu0 0
      %2047 = vmatprep.subr.bf16.mxu0 0
      %2048 = vmatpush1.bf16.msra.mxu0 0
      %2049 = vmatprep.subr.bf16.mxu0 0
      %2050 = vmatpush1.bf16.msra.mxu0 0
      %2051 = vmatprep.subr.bf16.mxu0 0
      %2052 = vmatpush1.bf16.msra.mxu0 0
      %2053 = vmatprep.subr.bf16.mxu0 0
      %2054 = vmatpush1.bf16.msra.mxu0 0
      %2055 = vmatprep.subr.bf16.mxu0 0
      %2056 = vmatpush1.bf16.msra.mxu0 0
      %2057 = vmatprep.subr.bf16.mxu0 0
      %2058 = vmatpush1.bf16.msra.mxu0 0
      %2059 = vmatprep.subr.bf16.mxu0 0
      %2060 = vmatpush1.bf16.msra.mxu0 0
      %2061 = vmatprep.subr.bf16.mxu0 0
      %2062 = vmatpush1.bf16.msra.mxu0 0
      %2063 = vmatprep.subr.bf16.mxu0 0
      %2064 = vmatpush1.bf16.msra.mxu0 0
      %2065 = vmatprep.subr.bf16.mxu0 0
      %2066 = vmatpush1.bf16.msra.mxu0 0
      %2067 = vmatprep.subr.bf16.mxu0 0
      %2068 = vmatpush1.bf16.msra.mxu0 0
      %2069 = vmatprep.subr.bf16.mxu0 0
      %2070 = vmatpush1.bf16.msra.mxu0 0
      %2071 = vmatprep.mubr.bf16.mxu0 0
      %2072 = vmatmul.mubr.bf16.gmra.mrb[0].mxu0 %v2037
      %v2073 = vpop.f32.mrb[0].mxu0
      %v2074 = vadd.f32 0.0, %v2073
      %v2075 = vpop.f32.mrb[0].mxu0
      %v2076 = vadd.f32 0.0, %v2075
      %v2077 = vpop.f32.mrb[0].mxu0
      %v2078 = vpop.f32.mrb[0].mxu0
      %2079 = vdwg.mxu0
      %v2080 = vadd.f32 %v1964, %v2074
      %v2081 = vadd.f32 %v1965, %v2076
      %2082 = vrot.lane.b32.xlu0 %v1691, 96
      %v2083 = vpop.permute.xlu0 %2082
      %v2085 = vsel %vm388, %v2083, 0
      %v2088 = vsel %vm392, %v1687, 0
      %v2091 = vsel %vm392, %v1688, 0
      %2093 = vmatprep.subr.bf16.mxu0 %v2091
      %2094 = vmatpush1.bf16.msra.mxu0 %v2088
      %2095 = vmatprep.subr.bf16.mxu0 0
      %2096 = vmatpush1.bf16.msra.mxu0 0
      %2097 = vmatprep.subr.bf16.mxu0 0
      %2098 = vmatpush1.bf16.msra.mxu0 0
      %2099 = vmatprep.subr.bf16.mxu0 0
      %2100 = vmatpush1.bf16.msra.mxu0 0
      %2101 = vmatprep.subr.bf16.mxu0 0
      %2102 = vmatpush1.bf16.msra.mxu0 0
      %2103 = vmatprep.subr.bf16.mxu0 0
      %2104 = vmatpush1.bf16.msra.mxu0 0
      %2105 = vmatprep.subr.bf16.mxu0 0
      %2106 = vmatpush1.bf16.msra.mxu0 0
      %2107 = vmatprep.subr.bf16.mxu0 0
      %2108 = vmatpush1.bf16.msra.mxu0 0
      %2109 = vmatprep.subr.bf16.mxu0 0
      %2110 = vmatpush1.bf16.msra.mxu0 0
      %2111 = vmatprep.subr.bf16.mxu0 0
      %2112 = vmatpush1.bf16.msra.mxu0 0
      %2113 = vmatprep.subr.bf16.mxu0 0
      %2114 = vmatpush1.bf16.msra.mxu0 0
      %2115 = vmatprep.subr.bf16.mxu0 0
      %2116 = vmatpush1.bf16.msra.mxu0 0
      %2117 = vmatprep.subr.bf16.mxu0 0
      %2118 = vmatpush1.bf16.msra.mxu0 0
      %2119 = vmatprep.subr.bf16.mxu0 0
      %2120 = vmatpush1.bf16.msra.mxu0 0
      %2121 = vmatprep.subr.bf16.mxu0 0
      %2122 = vmatpush1.bf16.msra.mxu0 0
      %2123 = vmatprep.subr.bf16.mxu0 0
      %2124 = vmatpush1.bf16.msra.mxu0 0
      %2125 = vmatprep.mubr.bf16.mxu0 0
      %2126 = vmatmul.mubr.bf16.gmra.mrb[0].mxu0 %v2085
      %v2127 = vpop.f32.mrb[0].mxu0
      %v2128 = vadd.f32 0.0, %v2127
      %v2129 = vpop.f32.mrb[0].mxu0
      %v2130 = vadd.f32 0.0, %v2129
      %v2131 = vpop.f32.mrb[0].mxu0
      %v2132 = vpop.f32.mrb[0].mxu0
      %2133 = vdwg.mxu0
      %v2134 = vadd.f32 %v2032, %v2128
      %v2135 = vadd.f32 %v2033, %v2130
      %2136 = vrot.lane.b32.xlu0 %v1759, 96
      %v2137 = vpop.permute.xlu0 %2136
      %v2139 = vsel %vm388, %v2137, 0
      %2141 = vmatprep.subr.bf16.mxu0 %v2091
      %2142 = vmatpush1.bf16.msra.mxu0 %v2088
      %2143 = vmatprep.subr.bf16.mxu0 0
      %2144 = vmatpush1.bf16.msra.mxu0 0
      %2145 = vmatprep.subr.bf16.mxu0 0
      %2146 = vmatpush1.bf16.msra.mxu0 0
      %2147 = vmatprep.subr.bf16.mxu0 0
      %2148 = vmatpush1.bf16.msra.mxu0 0
      %2149 = vmatprep.subr.bf16.mxu0 0
      %2150 = vmatpush1.bf16.msra.mxu0 0
      %2151 = vmatprep.subr.bf16.mxu0 0
      %2152 = vmatpush1.bf16.msra.mxu0 0
      %2153 = vmatprep.subr.bf16.mxu0 0
      %2154 = vmatpush1.bf16.msra.mxu0 0
      %2155 = vmatprep.subr.bf16.mxu0 0
      %2156 = vmatpush1.bf16.msra.mxu0 0
      %2157 = vmatprep.subr.bf16.mxu0 0
      %2158 = vmatpush1.bf16.msra.mxu0 0
      %2159 = vmatprep.subr.bf16.mxu0 0
      %2160 = vmatpush1.bf16.msra.mxu0 0
      %2161 = vmatprep.subr.bf16.mxu0 0
      %2162 = vmatpush1.bf16.msra.mxu0 0
      %2163 = vmatprep.subr.bf16.mxu0 0
      %2164 = vmatpush1.bf16.msra.mxu0 0
      %2165 = vmatprep.subr.bf16.mxu0 0
      %2166 = vmatpush1.bf16.msra.mxu0 0
      %2167 = vmatprep.subr.bf16.mxu0 0
      %2168 = vmatpush1.bf16.msra.mxu0 0
      %2169 = vmatprep.subr.bf16.mxu0 0
      %2170 = vmatpush1.bf16.msra.mxu0 0
      %2171 = vmatprep.subr.bf16.mxu0 0
      %2172 = vmatpush1.bf16.msra.mxu0 0
      %2173 = vmatprep.mubr.bf16.mxu0 0
      %2174 = vmatmul.mubr.bf16.gmra.mrb[0].mxu0 %v2139
      %v2175 = vpop.f32.mrb[0].mxu0
      %v2176 = vadd.f32 0.0, %v2175
      %v2177 = vpop.f32.mrb[0].mxu0
      %v2178 = vadd.f32 0.0, %v2177
      %v2179 = vpop.f32.mrb[0].mxu0
      %v2180 = vpop.f32.mrb[0].mxu0
      %2181 = vdwg.mxu0
      %v2182 = vadd.f32 %v2080, %v2176
      %v2183 = vadd.f32 %v2081, %v2178
      %v2184 = vld [vmem:[#allocation2 + $0x8] sm:$0xff]
      %v2185 = vld [vmem:[#allocation2 + $0x10] sm:$0xff]
      %v2186 = vld [vmem:[#allocation2 + $0x18] sm:$0xff]
      %2190 = vrot.lane.b32.xlu0 %v2184, 127
      %v2191 = vpop.permute.xlu0 %2190
      %2192 = vrot.lane.b32.xlu0 %v2185, 127
      %v2193 = vpop.permute.xlu0 %2192
      %2194 = vrot.lane.b32.xlu0 %v2186, 127
      %v2195 = vpop.permute.xlu0 %2194
      %v2196 = vsel %vm722, %v2191, %v2193
      %v2197 = vsel %vm722, %v2193, %v2195
      %v2200 = vsel %vm516, %v2196, 0.0
      %v2201 = vsel %vm517, %v2197, 0.0
      %v2202 = vpack.c.bf16 %v2200, %v2200
      %v2203 = vpack.c.bf16 %v2201, %v2201
      %2204 = vrot.lane.b32.xlu0 %v1691, 88
      %v2205 = vpop.permute.xlu0 %2204
      %v2207 = vsel %vm388, %v2205, 0
      %v2210 = vsel %vm392, %v2202, 0
      %v2213 = vsel %vm392, %v2203, 0
      %2215 = vmatprep.subr.bf16.mxu0 %v2213
      %2216 = vmatpush1.bf16.msra.mxu0 %v2210
      %2217 = vmatprep.subr.bf16.mxu0 0
      %2218 = vmatpush1.bf16.msra.mxu0 0
      %2219 = vmatprep.subr.bf16.mxu0 0
      %2220 = vmatpush1.bf16.msra.mxu0 0
      %2221 = vmatprep.subr.bf16.mxu0 0
      %2222 = vmatpush1.bf16.msra.mxu0 0
      %2223 = vmatprep.subr.bf16.mxu0 0
      %2224 = vmatpush1.bf16.msra.mxu0 0
      %2225 = vmatprep.subr.bf16.mxu0 0
      %2226 = vmatpush1.bf16.msra.mxu0 0
      %2227 = vmatprep.subr.bf16.mxu0 0
      %2228 = vmatpush1.bf16.msra.mxu0 0
      %2229 = vmatprep.subr.bf16.mxu0 0
      %2230 = vmatpush1.bf16.msra.mxu0 0
      %2231 = vmatprep.subr.bf16.mxu0 0
      %2232 = vmatpush1.bf16.msra.mxu0 0
      %2233 = vmatprep.subr.bf16.mxu0 0
      %2234 = vmatpush1.bf16.msra.mxu0 0
      %2235 = vmatprep.subr.bf16.mxu0 0
      %2236 = vmatpush1.bf16.msra.mxu0 0
      %2237 = vmatprep.subr.bf16.mxu0 0
      %2238 = vmatpush1.bf16.msra.mxu0 0
      %2239 = vmatprep.subr.bf16.mxu0 0
      %2240 = vmatpush1.bf16.msra.mxu0 0
      %2241 = vmatprep.subr.bf16.mxu0 0
      %2242 = vmatpush1.bf16.msra.mxu0 0
      %2243 = vmatprep.subr.bf16.mxu0 0
      %2244 = vmatpush1.bf16.msra.mxu0 0
      %2245 = vmatprep.subr.bf16.mxu0 0
      %2246 = vmatpush1.bf16.msra.mxu0 0
      %2247 = vmatprep.mubr.bf16.mxu0 0
      %2248 = vmatmul.mubr.bf16.gmra.mrb[0].mxu0 %v2207
      %v2249 = vpop.f32.mrb[0].mxu0
      %v2250 = vadd.f32 0.0, %v2249
      %v2251 = vpop.f32.mrb[0].mxu0
      %v2252 = vadd.f32 0.0, %v2251
      %v2253 = vpop.f32.mrb[0].mxu0
      %v2254 = vpop.f32.mrb[0].mxu0
      %2255 = vdwg.mxu0
      %v2256 = vadd.f32 %v2134, %v2250
      %v2257 = vadd.f32 %v2135, %v2252
      %2258 = vrot.lane.b32.xlu0 %v1759, 88
      %v2259 = vpop.permute.xlu0 %2258
      %v2261 = vsel %vm388, %v2259, 0
      %2263 = vmatprep.subr.bf16.mxu0 %v2213
      %2264 = vmatpush1.bf16.msra.mxu0 %v2210
      %2265 = vmatprep.subr.bf16.mxu0 0
      %2266 = vmatpush1.bf16.msra.mxu0 0
      %2267 = vmatprep.subr.bf16.mxu0 0
      %2268 = vmatpush1.bf16.msra.mxu0 0
      %2269 = vmatprep.subr.bf16.mxu0 0
      %2270 = vmatpush1.bf16.msra.mxu0 0
      %2271 = vmatprep.subr.bf16.mxu0 0
      %2272 = vmatpush1.bf16.msra.mxu0 0
      %2273 = vmatprep.subr.bf16.mxu0 0
      %2274 = vmatpush1.bf16.msra.mxu0 0
      %2275 = vmatprep.subr.bf16.mxu0 0
      %2276 = vmatpush1.bf16.msra.mxu0 0
      %2277 = vmatprep.subr.bf16.mxu0 0
      %2278 = vmatpush1.bf16.msra.mxu0 0
      %2279 = vmatprep.subr.bf16.mxu0 0
      %2280 = vmatpush1.bf16.msra.mxu0 0
      %2281 = vmatprep.subr.bf16.mxu0 0
      %2282 = vmatpush1.bf16.msra.mxu0 0
      %2283 = vmatprep.subr.bf16.mxu0 0
      %2284 = vmatpush1.bf16.msra.mxu0 0
      %2285 = vmatprep.subr.bf16.mxu0 0
      %2286 = vmatpush1.bf16.msra.mxu0 0
      %2287 = vmatprep.subr.bf16.mxu0 0
      %2288 = vmatpush1.bf16.msra.mxu0 0
      %2289 = vmatprep.subr.bf16.mxu0 0
      %2290 = vmatpush1.bf16.msra.mxu0 0
      %2291 = vmatprep.subr.bf16.mxu0 0
      %2292 = vmatpush1.bf16.msra.mxu0 0
      %2293 = vmatprep.subr.bf16.mxu0 0
      %2294 = vmatpush1.bf16.msra.mxu0 0
      %2295 = vmatprep.mubr.bf16.mxu0 0
      %2296 = vmatmul.mubr.bf16.gmra.mrb[0].mxu0 %v2261
      %v2297 = vpop.f32.mrb[0].mxu0
      %v2298 = vadd.f32 0.0, %v2297
      %v2299 = vpop.f32.mrb[0].mxu0
      %v2300 = vadd.f32 0.0, %v2299
      %v2301 = vpop.f32.mrb[0].mxu0
      %v2302 = vpop.f32.mrb[0].mxu0
      %2303 = vdwg.mxu0
      %v2304 = vadd.f32 %v2182, %v2298
      %v2305 = vadd.f32 %v2183, %v2300
      %2306 = vrot.lane.b32.xlu0 %v2184, 113
      %v2307 = vpop.permute.xlu0 %2306
      %2308 = vrot.lane.b32.xlu0 %v2185, 113
      %v2309 = vpop.permute.xlu0 %2308
      %2310 = vrot.lane.b32.xlu0 %v2186, 113
      %v2311 = vpop.permute.xlu0 %2310
      %v2312 = vsel %vm791, %v2307, %v2309
      %v2313 = vsel %vm791, %v2309, %v2311
      %v2316 = vsel %vm367, %v2312, 0.0
      %v2317 = vsel %vm368, %v2313, 0.0
      %v2318 = vpack.c.bf16 %v2316, %v2316
      %v2319 = vpack.c.bf16 %v2317, %v2317
      %2320 = vrot.lane.b32.xlu0 %v1691, 80
      %v2321 = vpop.permute.xlu0 %2320
      %v2323 = vsel %vm388, %v2321, 0
      %v2326 = vsel %vm392, %v2318, 0
      %v2329 = vsel %vm392, %v2319, 0
      %2331 = vmatprep.subr.bf16.mxu0 %v2329
      %2332 = vmatpush1.bf16.msra.mxu0 %v2326
      %2333 = vmatprep.subr.bf16.mxu0 0
      %2334 = vmatpush1.bf16.msra.mxu0 0
      %2335 = vmatprep.subr.bf16.mxu0 0
      %2336 = vmatpush1.bf16.msra.mxu0 0
      %2337 = vmatprep.subr.bf16.mxu0 0
      %2338 = vmatpush1.bf16.msra.mxu0 0
      %2339 = vmatprep.subr.bf16.mxu0 0
      %2340 = vmatpush1.bf16.msra.mxu0 0
      %2341 = vmatprep.subr.bf16.mxu0 0
      %2342 = vmatpush1.bf16.msra.mxu0 0
      %2343 = vmatprep.subr.bf16.mxu0 0
      %2344 = vmatpush1.bf16.msra.mxu0 0
      %2345 = vmatprep.subr.bf16.mxu0 0
      %2346 = vmatpush1.bf16.msra.mxu0 0
      %2347 = vmatprep.subr.bf16.mxu0 0
      %2348 = vmatpush1.bf16.msra.mxu0 0
      %2349 = vmatprep.subr.bf16.mxu0 0
      %2350 = vmatpush1.bf16.msra.mxu0 0
      %2351 = vmatprep.subr.bf16.mxu0 0
      %2352 = vmatpush1.bf16.msra.mxu0 0
      %2353 = vmatprep.subr.bf16.mxu0 0
      %2354 = vmatpush1.bf16.msra.mxu0 0
      %2355 = vmatprep.subr.bf16.mxu0 0
      %2356 = vmatpush1.bf16.msra.mxu0 0
      %2357 = vmatprep.subr.bf16.mxu0 0
      %2358 = vmatpush1.bf16.msra.mxu0 0
      %2359 = vmatprep.subr.bf16.mxu0 0
      %2360 = vmatpush1.bf16.msra.mxu0 0
      %2361 = vmatprep.subr.bf16.mxu0 0
      %2362 = vmatpush1.bf16.msra.mxu0 0
      %2363 = vmatprep.mubr.bf16.mxu0 0
      %2364 = vmatmul.mubr.bf16.gmra.mrb[0].mxu0 %v2323
      %v2365 = vpop.f32.mrb[0].mxu0
      %v2366 = vadd.f32 0.0, %v2365
      %v2367 = vpop.f32.mrb[0].mxu0
      %v2368 = vadd.f32 0.0, %v2367
      %v2369 = vpop.f32.mrb[0].mxu0
      %v2370 = vpop.f32.mrb[0].mxu0
      %2371 = vdwg.mxu0
      %v2372 = vadd.f32 %v2256, %v2366
      %v2373 = vadd.f32 %v2257, %v2368
      %2374 = vrot.lane.b32.xlu0 %v1759, 80
      %v2375 = vpop.permute.xlu0 %2374
      %v2377 = vsel %vm388, %v2375, 0
      %2379 = vmatprep.subr.bf16.mxu0 %v2329
      %2380 = vmatpush1.bf16.msra.mxu0 %v2326
      %2381 = vmatprep.subr.bf16.mxu0 0
      %2382 = vmatpush1.bf16.msra.mxu0 0
      %2383 = vmatprep.subr.bf16.mxu0 0
      %2384 = vmatpush1.bf16.msra.mxu0 0
      %2385 = vmatprep.subr.bf16.mxu0 0
      %2386 = vmatpush1.bf16.msra.mxu0 0
      %2387 = vmatprep.subr.bf16.mxu0 0
      %2388 = vmatpush1.bf16.msra.mxu0 0
      %2389 = vmatprep.subr.bf16.mxu0 0
      %2390 = vmatpush1.bf16.msra.mxu0 0
      %2391 = vmatprep.subr.bf16.mxu0 0
      %2392 = vmatpush1.bf16.msra.mxu0 0
      %2393 = vmatprep.subr.bf16.mxu0 0
      %2394 = vmatpush1.bf16.msra.mxu0 0
      %2395 = vmatprep.subr.bf16.mxu0 0
      %2396 = vmatpush1.bf16.msra.mxu0 0
      %2397 = vmatprep.subr.bf16.mxu0 0
      %2398 = vmatpush1.bf16.msra.mxu0 0
      %2399 = vmatprep.subr.bf16.mxu0 0
      %2400 = vmatpush1.bf16.msra.mxu0 0
      %2401 = vmatprep.subr.bf16.mxu0 0
      %2402 = vmatpush1.bf16.msra.mxu0 0
      %2403 = vmatprep.subr.bf16.mxu0 0
      %2404 = vmatpush1.bf16.msra.mxu0 0
      %2405 = vmatprep.subr.bf16.mxu0 0
      %2406 = vmatpush1.bf16.msra.mxu0 0
      %2407 = vmatprep.subr.bf16.mxu0 0
      %2408 = vmatpush1.bf16.msra.mxu0 0
      %2409 = vmatprep.subr.bf16.mxu0 0
      %2410 = vmatpush1.bf16.msra.mxu0 0
      %2411 = vmatprep.mubr.bf16.mxu0 0
      %2412 = vmatmul.mubr.bf16.gmra.mrb[0].mxu0 %v2377
      %v2413 = vpop.f32.mrb[0].mxu0
      %v2414 = vadd.f32 0.0, %v2413
      %v2415 = vpop.f32.mrb[0].mxu0
      %v2416 = vadd.f32 0.0, %v2415
      %v2417 = vpop.f32.mrb[0].mxu0
      %v2418 = vpop.f32.mrb[0].mxu0
      %2419 = vdwg.mxu0
      %v2420 = vadd.f32 %v2304, %v2414
      %v2421 = vadd.f32 %v2305, %v2416
      %v2422 = vpack.c.bf16 %v2184, %v2184
      %v2423 = vpack.c.bf16 %v2185, %v2185
      %v2424 = vpack.c.bf16 %v2186, %v2186
      %2425 = vrot.lane.b32.xlu0 %v1691, 72
      %v2426 = vpop.permute.xlu0 %2425
      %2430 = vrot.lane.b32.xlu0 %v2422, 112
      %v2431 = vpop.permute.xlu0 %2430
      %2432 = vrot.lane.b32.xlu0 %v2423, 112
      %v2433 = vpop.permute.xlu0 %2432
      %2434 = vrot.lane.b32.xlu0 %v2424, 112
      %v2435 = vpop.permute.xlu0 %2434
      %v2436 = vsel %vm868, %v2431, %v2433
      %v2437 = vsel %vm868, %v2433, %v2435
      %v2439 = vsel %vm388, %v2426, 0
      %v2442 = vsel %vm392, %v2436, 0
      %v2445 = vsel %vm392, %v2437, 0
      %2447 = vmatprep.subr.bf16.mxu0 %v2445
      %2448 = vmatpush1.bf16.msra.mxu0 %v2442
      %2449 = vmatprep.subr.bf16.mxu0 0
      %2450 = vmatpush1.bf16.msra.mxu0 0
      %2451 = vmatprep.subr.bf16.mxu0 0
      %2452 = vmatpush1.bf16.msra.mxu0 0
      %2453 = vmatprep.subr.bf16.mxu0 0
      %2454 = vmatpush1.bf16.msra.mxu0 0
      %2455 = vmatprep.subr.bf16.mxu0 0
      %2456 = vmatpush1.bf16.msra.mxu0 0
      %2457 = vmatprep.subr.bf16.mxu0 0
      %2458 = vmatpush1.bf16.msra.mxu0 0
      %2459 = vmatprep.subr.bf16.mxu0 0
      %2460 = vmatpush1.bf16.msra.mxu0 0
      %2461 = vmatprep.subr.bf16.mxu0 0
      %2462 = vmatpush1.bf16.msra.mxu0 0
      %2463 = vmatprep.subr.bf16.mxu0 0
      %2464 = vmatpush1.bf16.msra.mxu0 0
      %2465 = vmatprep.subr.bf16.mxu0 0
      %2466 = vmatpush1.bf16.msra.mxu0 0
      %2467 = vmatprep.subr.bf16.mxu0 0
      %2468 = vmatpush1.bf16.msra.mxu0 0
      %2469 = vmatprep.subr.bf16.mxu0 0
      %2470 = vmatpush1.bf16.msra.mxu0 0
      %2471 = vmatprep.subr.bf16.mxu0 0
      %2472 = vmatpush1.bf16.msra.mxu0 0
      %2473 = vmatprep.subr.bf16.mxu0 0
      %2474 = vmatpush1.bf16.msra.mxu0 0
      %2475 = vmatprep.subr.bf16.mxu0 0
      %2476 = vmatpush1.bf16.msra.mxu0 0
      %2477 = vmatprep.subr.bf16.mxu0 0
      %2478 = vmatpush1.bf16.msra.mxu0 0
      %2479 = vmatprep.mubr.bf16.mxu0 0
      %2480 = vmatmul.mubr.bf16.gmra.mrb[0].mxu0 %v2439
      %v2481 = vpop.f32.mrb[0].mxu0
      %v2482 = vadd.f32 0.0, %v2481
      %v2483 = vpop.f32.mrb[0].mxu0
      %v2484 = vadd.f32 0.0, %v2483
      %v2485 = vpop.f32.mrb[0].mxu0
      %v2486 = vpop.f32.mrb[0].mxu0
      %2487 = vdwg.mxu0
      %v2488 = vadd.f32 %v2372, %v2482
      %v2489 = vadd.f32 %v2373, %v2484
      %2490 = vrot.lane.b32.xlu0 %v1759, 72
      %v2491 = vpop.permute.xlu0 %2490
      %v2493 = vsel %vm388, %v2491, 0
      %2495 = vmatprep.subr.bf16.mxu0 %v2445
      %2496 = vmatpush1.bf16.msra.mxu0 %v2442
      %2497 = vmatprep.subr.bf16.mxu0 0
      %2498 = vmatpush1.bf16.msra.mxu0 0
      %2499 = vmatprep.subr.bf16.mxu0 0
      %2500 = vmatpush1.bf16.msra.mxu0 0
      %2501 = vmatprep.subr.bf16.mxu0 0
      %2502 = vmatpush1.bf16.msra.mxu0 0
      %2503 = vmatprep.subr.bf16.mxu0 0
      %2504 = vmatpush1.bf16.msra.mxu0 0
      %2505 = vmatprep.subr.bf16.mxu0 0
      %2506 = vmatpush1.bf16.msra.mxu0 0
      %2507 = vmatprep.subr.bf16.mxu0 0
      %2508 = vmatpush1.bf16.msra.mxu0 0
      %2509 = vmatprep.subr.bf16.mxu0 0
      %2510 = vmatpush1.bf16.msra.mxu0 0
      %2511 = vmatprep.subr.bf16.mxu0 0
      %2512 = vmatpush1.bf16.msra.mxu0 0
      %2513 = vmatprep.subr.bf16.mxu0 0
      %2514 = vmatpush1.bf16.msra.mxu0 0
      %2515 = vmatprep.subr.bf16.mxu0 0
      %2516 = vmatpush1.bf16.msra.mxu0 0
      %2517 = vmatprep.subr.bf16.mxu0 0
      %2518 = vmatpush1.bf16.msra.mxu0 0
      %2519 = vmatprep.subr.bf16.mxu0 0
      %2520 = vmatpush1.bf16.msra.mxu0 0
      %2521 = vmatprep.subr.bf16.mxu0 0
      %2522 = vmatpush1.bf16.msra.mxu0 0
      %2523 = vmatprep.subr.bf16.mxu0 0
      %2524 = vmatpush1.bf16.msra.mxu0 0
      %2525 = vmatprep.subr.bf16.mxu0 0
      %2526 = vmatpush1.bf16.msra.mxu0 0
      %2527 = vmatprep.mubr.bf16.mxu0 0
      %2528 = vmatmul.mubr.bf16.gmra.mrb[0].mxu0 %v2493
      %v2529 = vpop.f32.mrb[0].mxu0
      %v2530 = vadd.f32 0.0, %v2529
      %v2531 = vpop.f32.mrb[0].mxu0
      %v2532 = vadd.f32 0.0, %v2531
      %v2533 = vpop.f32.mrb[0].mxu0
      %v2534 = vpop.f32.mrb[0].mxu0
      %2535 = vdwg.mxu0
      %v2536 = vadd.f32 %v2420, %v2530
      %v2537 = vadd.f32 %v2421, %v2532
      %2538 = vrot.lane.b32.xlu0 %v2184, 111
      %v2539 = vpop.permute.xlu0 %2538
      %2540 = vrot.lane.b32.xlu0 %v2185, 111
      %v2541 = vpop.permute.xlu0 %2540
      %2542 = vrot.lane.b32.xlu0 %v2186, 111
      %v2543 = vpop.permute.xlu0 %2542
      %v2544 = vsel %vm929, %v2539, %v2541
      %v2545 = vsel %vm929, %v2541, %v2543
      %v2548 = vsel %vm516, %v2544, 0.0
      %v2549 = vsel %vm517, %v2545, 0.0
      %v2550 = vpack.c.bf16 %v2548, %v2548
      %v2551 = vpack.c.bf16 %v2549, %v2549
      %2552 = vrot.lane.b32.xlu0 %v1691, 64
      %v2553 = vpop.permute.xlu0 %2552
      %v2555 = vsel %vm388, %v2553, 0
      %v2558 = vsel %vm392, %v2550, 0
      %v2561 = vsel %vm392, %v2551, 0
      %2563 = vmatprep.subr.bf16.mxu0 %v2561
      %2564 = vmatpush1.bf16.msra.mxu0 %v2558
      %2565 = vmatprep.subr.bf16.mxu0 0
      %2566 = vmatpush1.bf16.msra.mxu0 0
      %2567 = vmatprep.subr.bf16.mxu0 0
      %2568 = vmatpush1.bf16.msra.mxu0 0
      %2569 = vmatprep.subr.bf16.mxu0 0
      %2570 = vmatpush1.bf16.msra.mxu0 0
      %2571 = vmatprep.subr.bf16.mxu0 0
      %2572 = vmatpush1.bf16.msra.mxu0 0
      %2573 = vmatprep.subr.bf16.mxu0 0
      %2574 = vmatpush1.bf16.msra.mxu0 0
      %2575 = vmatprep.subr.bf16.mxu0 0
      %2576 = vmatpush1.bf16.msra.mxu0 0
      %2577 = vmatprep.subr.bf16.mxu0 0
      %2578 = vmatpush1.bf16.msra.mxu0 0
      %2579 = vmatprep.subr.bf16.mxu0 0
      %2580 = vmatpush1.bf16.msra.mxu0 0
      %2581 = vmatprep.subr.bf16.mxu0 0
      %2582 = vmatpush1.bf16.msra.mxu0 0
      %2583 = vmatprep.subr.bf16.mxu0 0
      %2584 = vmatpush1.bf16.msra.mxu0 0
      %2585 = vmatprep.subr.bf16.mxu0 0
      %2586 = vmatpush1.bf16.msra.mxu0 0
      %2587 = vmatprep.subr.bf16.mxu0 0
      %2588 = vmatpush1.bf16.msra.mxu0 0
      %2589 = vmatprep.subr.bf16.mxu0 0
      %2590 = vmatpush1.bf16.msra.mxu0 0
      %2591 = vmatprep.subr.bf16.mxu0 0
      %2592 = vmatpush1.bf16.msra.mxu0 0
      %2593 = vmatprep.subr.bf16.mxu0 0
      %2594 = vmatpush1.bf16.msra.mxu0 0
      %2595 = vmatprep.mubr.bf16.mxu0 0
      %2596 = vmatmul.mubr.bf16.gmra.mrb[0].mxu0 %v2555
      %v2597 = vpop.f32.mrb[0].mxu0
      %v2598 = vadd.f32 0.0, %v2597
      %v2599 = vpop.f32.mrb[0].mxu0
      %v2600 = vadd.f32 0.0, %v2599
      %v2601 = vpop.f32.mrb[0].mxu0
      %v2602 = vpop.f32.mrb[0].mxu0
      %2603 = vdwg.mxu0
      %v2604 = vadd.f32 %v2488, %v2598
      %v2605 = vadd.f32 %v2489, %v2600
      %2606 = vrot.lane.b32.xlu0 %v1759, 64
      %v2607 = vpop.permute.xlu0 %2606
      %v2609 = vsel %vm388, %v2607, 0
      %2611 = vmatprep.subr.bf16.mxu0 %v2561
      %2612 = vmatpush1.bf16.msra.mxu0 %v2558
      %2613 = vmatprep.subr.bf16.mxu0 0
      %2614 = vmatpush1.bf16.msra.mxu0 0
      %2615 = vmatprep.subr.bf16.mxu0 0
      %2616 = vmatpush1.bf16.msra.mxu0 0
      %2617 = vmatprep.subr.bf16.mxu0 0
      %2618 = vmatpush1.bf16.msra.mxu0 0
      %2619 = vmatprep.subr.bf16.mxu0 0
      %2620 = vmatpush1.bf16.msra.mxu0 0
      %2621 = vmatprep.subr.bf16.mxu0 0
      %2622 = vmatpush1.bf16.msra.mxu0 0
      %2623 = vmatprep.subr.bf16.mxu0 0
      %2624 = vmatpush1.bf16.msra.mxu0 0
      %2625 = vmatprep.subr.bf16.mxu0 0
      %2626 = vmatpush1.bf16.msra.mxu0 0
      %2627 = vmatprep.subr.bf16.mxu0 0
      %2628 = vmatpush1.bf16.msra.mxu0 0
      %2629 = vmatprep.subr.bf16.mxu0 0
      %2630 = vmatpush1.bf16.msra.mxu0 0
      %2631 = vmatprep.subr.bf16.mxu0 0
      %2632 = vmatpush1.bf16.msra.mxu0 0
      %2633 = vmatprep.subr.bf16.mxu0 0
      %2634 = vmatpush1.bf16.msra.mxu0 0
      %2635 = vmatprep.subr.bf16.mxu0 0
      %2636 = vmatpush1.bf16.msra.mxu0 0
      %2637 = vmatprep.subr.bf16.mxu0 0
      %2638 = vmatpush1.bf16.msra.mxu0 0
      %2639 = vmatprep.subr.bf16.mxu0 0
      %2640 = vmatpush1.bf16.msra.mxu0 0
      %2641 = vmatprep.subr.bf16.mxu0 0
      %2642 = vmatpush1.bf16.msra.mxu0 0
      %2643 = vmatprep.mubr.bf16.mxu0 0
      %2644 = vmatmul.mubr.bf16.gmra.mrb[0].mxu0 %v2609
      %v2645 = vpop.f32.mrb[0].mxu0
      %v2646 = vadd.f32 0.0, %v2645
      %v2647 = vpop.f32.mrb[0].mxu0
      %v2648 = vadd.f32 0.0, %v2647
      %v2649 = vpop.f32.mrb[0].mxu0
      %v2650 = vpop.f32.mrb[0].mxu0
      %2651 = vdwg.mxu0
      %v2652 = vadd.f32 %v2536, %v2646
      %v2653 = vadd.f32 %v2537, %v2648
      %v2654 = vadd.f32 %v2652, %v356
      %v2655 = vadd.f32 %v2653, %v356
      %2656 = vst [vmem:[#allocation3] sm:$0xff] %v2654
      %2657 = vst [vmem:[#allocation3 + $0x8] sm:$0xff] %v2655
      %v2658 = vmax.f32 %v2604, 0.0
      %v2659 = vmax.f32 %v2605, 0.0
      %2660 = vst [vmem:[#allocation2 + $0x8] sm:$0xff] %v2658
      %2661 = vst [vmem:[#allocation2 + $0x10] sm:$0xff] %v2659
      %v2662 = vld [vmem:[#allocation2] sm:$0xff]
      %v2663 = vld [vmem:[#allocation2 + $0x8] sm:$0xff]
      %v2664 = vld [vmem:[#allocation2 + $0x10] sm:$0xff]
      %2668 = vrot.lane.b32.xlu0 %v2662, 17
      %v2669 = vpop.permute.xlu0 %2668
      %2670 = vrot.lane.b32.xlu0 %v2663, 17
      %v2671 = vpop.permute.xlu0 %2670
      %2672 = vrot.lane.b32.xlu0 %v2664, 17
      %v2673 = vpop.permute.xlu0 %2672
      %v2674 = vsel %vm378, %v2669, %v2671
      %v2675 = vsel %vm378, %v2671, %v2673
      %v2678 = vsel %vm367, %v2674, 0.0
      %v2679 = vsel %vm368, %v2675, 0.0
      %v2680 = vpack.c.bf16 %v2678, %v2678
      %v2681 = vpack.c.bf16 %v2679, %v2679
      %v2682 = vld [vmem:[%s3] sm:$0xf]
      %v2684 = vsel %vm388, %v2682, 0
      %v2687 = vsel %vm392, %v2680, 0
      %v2690 = vsel %vm392, %v2681, 0
      %2692 = vmatprep.subr.bf16.mxu0 %v2690
      %2693 = vmatpush1.bf16.msra.mxu0 %v2687
      %2694 = vmatprep.subr.bf16.mxu0 0
      %2695 = vmatpush1.bf16.msra.mxu0 0
      %2696 = vmatprep.subr.bf16.mxu0 0
      %2697 = vmatpush1.bf16.msra.mxu0 0
      %2698 = vmatprep.subr.bf16.mxu0 0
      %2699 = vmatpush1.bf16.msra.mxu0 0
      %2700 = vmatprep.subr.bf16.mxu0 0
      %2701 = vmatpush1.bf16.msra.mxu0 0
      %2702 = vmatprep.subr.bf16.mxu0 0
      %2703 = vmatpush1.bf16.msra.mxu0 0
      %2704 = vmatprep.subr.bf16.mxu0 0
      %2705 = vmatpush1.bf16.msra.mxu0 0
      %2706 = vmatprep.subr.bf16.mxu0 0
      %2707 = vmatpush1.bf16.msra.mxu0 0
      %2708 = vmatprep.subr.bf16.mxu0 0
      %2709 = vmatpush1.bf16.msra.mxu0 0
      %2710 = vmatprep.subr.bf16.mxu0 0
      %2711 = vmatpush1.bf16.msra.mxu0 0
      %2712 = vmatprep.subr.bf16.mxu0 0
      %2713 = vmatpush1.bf16.msra.mxu0 0
      %2714 = vmatprep.subr.bf16.mxu0 0
      %2715 = vmatpush1.bf16.msra.mxu0 0
      %2716 = vmatprep.subr.bf16.mxu0 0
      %2717 = vmatpush1.bf16.msra.mxu0 0
      %2718 = vmatprep.subr.bf16.mxu0 0
      %2719 = vmatpush1.bf16.msra.mxu0 0
      %2720 = vmatprep.subr.bf16.mxu0 0
      %2721 = vmatpush1.bf16.msra.mxu0 0
      %2722 = vmatprep.subr.bf16.mxu0 0
      %2723 = vmatpush1.bf16.msra.mxu0 0
      %2724 = vmatprep.mubr.bf16.mxu0 0
      %2725 = vmatmul.mubr.bf16.gmra.mrb[0].mxu0 %v2684
      %v2726 = vpop.f32.mrb[0].mxu0
      %v2727 = vadd.f32 0.0, %v2726
      %v2728 = vpop.f32.mrb[0].mxu0
      %v2729 = vadd.f32 0.0, %v2728
      %v2730 = vpop.f32.mrb[0].mxu0
      %v2731 = vpop.f32.mrb[0].mxu0
      %2732 = vdwg.mxu0
      %v2733 = vadd.f32 %v350, %v2727
      %v2734 = vadd.f32 %v350, %v2729
      %v2735 = vpack.c.bf16 %v2662, %v2662
      %v2736 = vpack.c.bf16 %v2663, %v2663
      %v2737 = vpack.c.bf16 %v2664, %v2664
      %v2739 = vunpack.c.l.b16 %v2682
      %v2740 = vpack.c.b16 %v2739, %v2739
      %2741 = vrot.lane.b32.xlu0 %v2740, 120
      %v2742 = vpop.permute.xlu0 %2741
      %2746 = vrot.lane.b32.xlu0 %v2735, 16
      %v2747 = vpop.permute.xlu0 %2746
      %2748 = vrot.lane.b32.xlu0 %v2736, 16
      %v2749 = vpop.permute.xlu0 %2748
      %2750 = vrot.lane.b32.xlu0 %v2737, 16
      %v2751 = vpop.permute.xlu0 %2750
      %v2752 = vsel %vm459, %v2747, %v2749
      %v2753 = vsel %vm459, %v2749, %v2751
      %v2755 = vsel %vm388, %v2742, 0
      %v2758 = vsel %vm392, %v2752, 0
      %v2761 = vsel %vm392, %v2753, 0
      %2763 = vmatprep.subr.bf16.mxu0 %v2761
      %2764 = vmatpush1.bf16.msra.mxu0 %v2758
      %2765 = vmatprep.subr.bf16.mxu0 0
      %2766 = vmatpush1.bf16.msra.mxu0 0
      %2767 = vmatprep.subr.bf16.mxu0 0
      %2768 = vmatpush1.bf16.msra.mxu0 0
      %2769 = vmatprep.subr.bf16.mxu0 0
      %2770 = vmatpush1.bf16.msra.mxu0 0
      %2771 = vmatprep.subr.bf16.mxu0 0
      %2772 = vmatpush1.bf16.msra.mxu0 0
      %2773 = vmatprep.subr.bf16.mxu0 0
      %2774 = vmatpush1.bf16.msra.mxu0 0
      %2775 = vmatprep.subr.bf16.mxu0 0
      %2776 = vmatpush1.bf16.msra.mxu0 0
      %2777 = vmatprep.subr.bf16.mxu0 0
      %2778 = vmatpush1.bf16.msra.mxu0 0
      %2779 = vmatprep.subr.bf16.mxu0 0
      %2780 = vmatpush1.bf16.msra.mxu0 0
      %2781 = vmatprep.subr.bf16.mxu0 0
      %2782 = vmatpush1.bf16.msra.mxu0 0
      %2783 = vmatprep.subr.bf16.mxu0 0
      %2784 = vmatpush1.bf16.msra.mxu0 0
      %2785 = vmatprep.subr.bf16.mxu0 0
      %2786 = vmatpush1.bf16.msra.mxu0 0
      %2787 = vmatprep.subr.bf16.mxu0 0
      %2788 = vmatpush1.bf16.msra.mxu0 0
      %2789 = vmatprep.subr.bf16.mxu0 0
      %2790 = vmatpush1.bf16.msra.mxu0 0
      %2791 = vmatprep.subr.bf16.mxu0 0
      %2792 = vmatpush1.bf16.msra.mxu0 0
      %2793 = vmatprep.subr.bf16.mxu0 0
      %2794 = vmatpush1.bf16.msra.mxu0 0
      %2795 = vmatprep.mubr.bf16.mxu0 0
      %2796 = vmatmul.mubr.bf16.gmra.mrb[0].mxu0 %v2755
      %v2797 = vpop.f32.mrb[0].mxu0
      %v2798 = vadd.f32 0.0, %v2797
      %v2799 = vpop.f32.mrb[0].mxu0
      %v2800 = vadd.f32 0.0, %v2799
      %v2801 = vpop.f32.mrb[0].mxu0
      %v2802 = vpop.f32.mrb[0].mxu0
      %2803 = vdwg.mxu0
      %v2804 = vadd.f32 %v2733, %v2798
      %v2805 = vadd.f32 %v2734, %v2800
      %2806 = vrot.lane.b32.xlu0 %v2662, 15
      %v2807 = vpop.permute.xlu0 %2806
      %2808 = vrot.lane.b32.xlu0 %v2663, 15
      %v2809 = vpop.permute.xlu0 %2808
      %2810 = vrot.lane.b32.xlu0 %v2664, 15
      %v2811 = vpop.permute.xlu0 %2810
      %v2812 = vsel %vm524, %v2807, %v2809
      %v2813 = vsel %vm524, %v2809, %v2811
      %v2816 = vsel %vm516, %v2812, 0.0
      %v2817 = vsel %vm517, %v2813, 0.0
      %v2818 = vpack.c.bf16 %v2816, %v2816
      %v2819 = vpack.c.bf16 %v2817, %v2817
      %2820 = vrot.lane.b32.xlu0 %v2740, 112
      %v2821 = vpop.permute.xlu0 %2820
      %v2823 = vsel %vm388, %v2821, 0
      %v2826 = vsel %vm392, %v2818, 0
      %v2829 = vsel %vm392, %v2819, 0
      %2831 = vmatprep.subr.bf16.mxu0 %v2829
      %2832 = vmatpush1.bf16.msra.mxu0 %v2826
      %2833 = vmatprep.subr.bf16.mxu0 0
      %2834 = vmatpush1.bf16.msra.mxu0 0
      %2835 = vmatprep.subr.bf16.mxu0 0
      %2836 = vmatpush1.bf16.msra.mxu0 0
      %2837 = vmatprep.subr.bf16.mxu0 0
      %2838 = vmatpush1.bf16.msra.mxu0 0
      %2839 = vmatprep.subr.bf16.mxu0 0
      %2840 = vmatpush1.bf16.msra.mxu0 0
      %2841 = vmatprep.subr.bf16.mxu0 0
      %2842 = vmatpush1.bf16.msra.mxu0 0
      %2843 = vmatprep.subr.bf16.mxu0 0
      %2844 = vmatpush1.bf16.msra.mxu0 0
      %2845 = vmatprep.subr.bf16.mxu0 0
      %2846 = vmatpush1.bf16.msra.mxu0 0
      %2847 = vmatprep.subr.bf16.mxu0 0
      %2848 = vmatpush1.bf16.msra.mxu0 0
      %2849 = vmatprep.subr.bf16.mxu0 0
      %2850 = vmatpush1.bf16.msra.mxu0 0
      %2851 = vmatprep.subr.bf16.mxu0 0
      %2852 = vmatpush1.bf16.msra.mxu0 0
      %2853 = vmatprep.subr.bf16.mxu0 0
      %2854 = vmatpush1.bf16.msra.mxu0 0
      %2855 = vmatprep.subr.bf16.mxu0 0
      %2856 = vmatpush1.bf16.msra.mxu0 0
      %2857 = vmatprep.subr.bf16.mxu0 0
      %2858 = vmatpush1.bf16.msra.mxu0 0
      %2859 = vmatprep.subr.bf16.mxu0 0
      %2860 = vmatpush1.bf16.msra.mxu0 0
      %2861 = vmatprep.subr.bf16.mxu0 0
      %2862 = vmatpush1.bf16.msra.mxu0 0
      %2863 = vmatprep.mubr.bf16.mxu0 0
      %2864 = vmatmul.mubr.bf16.gmra.mrb[0].mxu0 %v2823
      %v2865 = vpop.f32.mrb[0].mxu0
      %v2866 = vadd.f32 0.0, %v2865
      %v2867 = vpop.f32.mrb[0].mxu0
      %v2868 = vadd.f32 0.0, %v2867
      %v2869 = vpop.f32.mrb[0].mxu0
      %v2870 = vpop.f32.mrb[0].mxu0
      %2871 = vdwg.mxu0
      %v2872 = vadd.f32 %v2804, %v2866
      %v2873 = vadd.f32 %v2805, %v2868
      %2874 = vrot.lane.b32.xlu0 %v2662, 1
      %v2875 = vpop.permute.xlu0 %2874
      %2876 = vrot.lane.b32.xlu0 %v2663, 1
      %v2877 = vpop.permute.xlu0 %2876
      %2878 = vrot.lane.b32.xlu0 %v2664, 1
      %v2879 = vpop.permute.xlu0 %2878
      %v2880 = vsel %vm593, %v2875, %v2877
      %v2881 = vsel %vm593, %v2877, %v2879
      %v2884 = vsel %vm367, %v2880, 0.0
      %v2885 = vsel %vm368, %v2881, 0.0
      %v2886 = vpack.c.bf16 %v2884, %v2884
      %v2887 = vpack.c.bf16 %v2885, %v2885
      %2888 = vrot.lane.b32.xlu0 %v2740, 104
      %v2889 = vpop.permute.xlu0 %2888
      %v2891 = vsel %vm388, %v2889, 0
      %v2894 = vsel %vm392, %v2886, 0
      %v2897 = vsel %vm392, %v2887, 0
      %2899 = vmatprep.subr.bf16.mxu0 %v2897
      %2900 = vmatpush1.bf16.msra.mxu0 %v2894
      %2901 = vmatprep.subr.bf16.mxu0 0
      %2902 = vmatpush1.bf16.msra.mxu0 0
      %2903 = vmatprep.subr.bf16.mxu0 0
      %2904 = vmatpush1.bf16.msra.mxu0 0
      %2905 = vmatprep.subr.bf16.mxu0 0
      %2906 = vmatpush1.bf16.msra.mxu0 0
      %2907 = vmatprep.subr.bf16.mxu0 0
      %2908 = vmatpush1.bf16.msra.mxu0 0
      %2909 = vmatprep.subr.bf16.mxu0 0
      %2910 = vmatpush1.bf16.msra.mxu0 0
      %2911 = vmatprep.subr.bf16.mxu0 0
      %2912 = vmatpush1.bf16.msra.mxu0 0
      %2913 = vmatprep.subr.bf16.mxu0 0
      %2914 = vmatpush1.bf16.msra.mxu0 0
      %2915 = vmatprep.subr.bf16.mxu0 0
      %2916 = vmatpush1.bf16.msra.mxu0 0
      %2917 = vmatprep.subr.bf16.mxu0 0
      %2918 = vmatpush1.bf16.msra.mxu0 0
      %2919 = vmatprep.subr.bf16.mxu0 0
      %2920 = vmatpush1.bf16.msra.mxu0 0
      %2921 = vmatprep.subr.bf16.mxu0 0
      %2922 = vmatpush1.bf16.msra.mxu0 0
      %2923 = vmatprep.subr.bf16.mxu0 0
      %2924 = vmatpush1.bf16.msra.mxu0 0
      %2925 = vmatprep.subr.bf16.mxu0 0
      %2926 = vmatpush1.bf16.msra.mxu0 0
      %2927 = vmatprep.subr.bf16.mxu0 0
      %2928 = vmatpush1.bf16.msra.mxu0 0
      %2929 = vmatprep.subr.bf16.mxu0 0
      %2930 = vmatpush1.bf16.msra.mxu0 0
      %2931 = vmatprep.mubr.bf16.mxu0 0
      %2932 = vmatmul.mubr.bf16.gmra.mrb[0].mxu0 %v2891
      %v2933 = vpop.f32.mrb[0].mxu0
      %v2934 = vadd.f32 0.0, %v2933
      %v2935 = vpop.f32.mrb[0].mxu0
      %v2936 = vadd.f32 0.0, %v2935
      %v2937 = vpop.f32.mrb[0].mxu0
      %v2938 = vpop.f32.mrb[0].mxu0
      %2939 = vdwg.mxu0
      %v2940 = vadd.f32 %v2872, %v2934
      %v2941 = vadd.f32 %v2873, %v2936
      %2942 = vrot.lane.b32.xlu0 %v2740, 96
      %v2943 = vpop.permute.xlu0 %2942
      %v2945 = vsel %vm388, %v2943, 0
      %v2948 = vsel %vm392, %v2736, 0
      %v2951 = vsel %vm392, %v2737, 0
      %2953 = vmatprep.subr.bf16.mxu0 %v2951
      %2954 = vmatpush1.bf16.msra.mxu0 %v2948
      %2955 = vmatprep.subr.bf16.mxu0 0
      %2956 = vmatpush1.bf16.msra.mxu0 0
      %2957 = vmatprep.subr.bf16.mxu0 0
      %2958 = vmatpush1.bf16.msra.mxu0 0
      %2959 = vmatprep.subr.bf16.mxu0 0
      %2960 = vmatpush1.bf16.msra.mxu0 0
      %2961 = vmatprep.subr.bf16.mxu0 0
      %2962 = vmatpush1.bf16.msra.mxu0 0
      %2963 = vmatprep.subr.bf16.mxu0 0
      %2964 = vmatpush1.bf16.msra.mxu0 0
      %2965 = vmatprep.subr.bf16.mxu0 0
      %2966 = vmatpush1.bf16.msra.mxu0 0
      %2967 = vmatprep.subr.bf16.mxu0 0
      %2968 = vmatpush1.bf16.msra.mxu0 0
      %2969 = vmatprep.subr.bf16.mxu0 0
      %2970 = vmatpush1.bf16.msra.mxu0 0
      %2971 = vmatprep.subr.bf16.mxu0 0
      %2972 = vmatpush1.bf16.msra.mxu0 0
      %2973 = vmatprep.subr.bf16.mxu0 0
      %2974 = vmatpush1.bf16.msra.mxu0 0
      %2975 = vmatprep.subr.bf16.mxu0 0
      %2976 = vmatpush1.bf16.msra.mxu0 0
      %2977 = vmatprep.subr.bf16.mxu0 0
      %2978 = vmatpush1.bf16.msra.mxu0 0
      %2979 = vmatprep.subr.bf16.mxu0 0
      %2980 = vmatpush1.bf16.msra.mxu0 0
      %2981 = vmatprep.subr.bf16.mxu0 0
      %2982 = vmatpush1.bf16.msra.mxu0 0
      %2983 = vmatprep.subr.bf16.mxu0 0
      %2984 = vmatpush1.bf16.msra.mxu0 0
      %2985 = vmatprep.mubr.bf16.mxu0 0
      %2986 = vmatmul.mubr.bf16.gmra.mrb[0].mxu0 %v2945
      %v2987 = vpop.f32.mrb[0].mxu0
      %v2988 = vadd.f32 0.0, %v2987
      %v2989 = vpop.f32.mrb[0].mxu0
      %v2990 = vadd.f32 0.0, %v2989
      %v2991 = vpop.f32.mrb[0].mxu0
      %v2992 = vpop.f32.mrb[0].mxu0
      %2993 = vdwg.mxu0
      %v2994 = vadd.f32 %v2940, %v2988
      %v2995 = vadd.f32 %v2941, %v2990
      %v2996 = vld [vmem:[#allocation2 + $0x8] sm:$0xff]
      %v2997 = vld [vmem:[#allocation2 + $0x10] sm:$0xff]
      %v2998 = vld [vmem:[#allocation2 + $0x18] sm:$0xff]
      %3002 = vrot.lane.b32.xlu0 %v2996, 127
      %v3003 = vpop.permute.xlu0 %3002
      %3004 = vrot.lane.b32.xlu0 %v2997, 127
      %v3005 = vpop.permute.xlu0 %3004
      %3006 = vrot.lane.b32.xlu0 %v2998, 127
      %v3007 = vpop.permute.xlu0 %3006
      %v3008 = vsel %vm722, %v3003, %v3005
      %v3009 = vsel %vm722, %v3005, %v3007
      %v3012 = vsel %vm516, %v3008, 0.0
      %v3013 = vsel %vm517, %v3009, 0.0
      %v3014 = vpack.c.bf16 %v3012, %v3012
      %v3015 = vpack.c.bf16 %v3013, %v3013
      %3016 = vrot.lane.b32.xlu0 %v2740, 88
      %v3017 = vpop.permute.xlu0 %3016
      %v3019 = vsel %vm388, %v3017, 0
      %v3022 = vsel %vm392, %v3014, 0
      %v3025 = vsel %vm392, %v3015, 0
      %3027 = vmatprep.subr.bf16.mxu0 %v3025
      %3028 = vmatpush1.bf16.msra.mxu0 %v3022
      %3029 = vmatprep.subr.bf16.mxu0 0
      %3030 = vmatpush1.bf16.msra.mxu0 0
      %3031 = vmatprep.subr.bf16.mxu0 0
      %3032 = vmatpush1.bf16.msra.mxu0 0
      %3033 = vmatprep.subr.bf16.mxu0 0
      %3034 = vmatpush1.bf16.msra.mxu0 0
      %3035 = vmatprep.subr.bf16.mxu0 0
      %3036 = vmatpush1.bf16.msra.mxu0 0
      %3037 = vmatprep.subr.bf16.mxu0 0
      %3038 = vmatpush1.bf16.msra.mxu0 0
      %3039 = vmatprep.subr.bf16.mxu0 0
      %3040 = vmatpush1.bf16.msra.mxu0 0
      %3041 = vmatprep.subr.bf16.mxu0 0
      %3042 = vmatpush1.bf16.msra.mxu0 0
      %3043 = vmatprep.subr.bf16.mxu0 0
      %3044 = vmatpush1.bf16.msra.mxu0 0
      %3045 = vmatprep.subr.bf16.mxu0 0
      %3046 = vmatpush1.bf16.msra.mxu0 0
      %3047 = vmatprep.subr.bf16.mxu0 0
      %3048 = vmatpush1.bf16.msra.mxu0 0
      %3049 = vmatprep.subr.bf16.mxu0 0
      %3050 = vmatpush1.bf16.msra.mxu0 0
      %3051 = vmatprep.subr.bf16.mxu0 0
      %3052 = vmatpush1.bf16.msra.mxu0 0
      %3053 = vmatprep.subr.bf16.mxu0 0
      %3054 = vmatpush1.bf16.msra.mxu0 0
      %3055 = vmatprep.subr.bf16.mxu0 0
      %3056 = vmatpush1.bf16.msra.mxu0 0
      %3057 = vmatprep.subr.bf16.mxu0 0
      %3058 = vmatpush1.bf16.msra.mxu0 0
      %3059 = vmatprep.mubr.bf16.mxu0 0
      %3060 = vmatmul.mubr.bf16.gmra.mrb[0].mxu0 %v3019
      %v3061 = vpop.f32.mrb[0].mxu0
      %v3062 = vadd.f32 0.0, %v3061
      %v3063 = vpop.f32.mrb[0].mxu0
      %v3064 = vadd.f32 0.0, %v3063
      %v3065 = vpop.f32.mrb[0].mxu0
      %v3066 = vpop.f32.mrb[0].mxu0
      %3067 = vdwg.mxu0
      %v3068 = vadd.f32 %v2994, %v3062
      %v3069 = vadd.f32 %v2995, %v3064
      %3070 = vrot.lane.b32.xlu0 %v2996, 113
      %v3071 = vpop.permute.xlu0 %3070
      %3072 = vrot.lane.b32.xlu0 %v2997, 113
      %v3073 = vpop.permute.xlu0 %3072
      %3074 = vrot.lane.b32.xlu0 %v2998, 113
      %v3075 = vpop.permute.xlu0 %3074
      %v3076 = vsel %vm791, %v3071, %v3073
      %v3077 = vsel %vm791, %v3073, %v3075
      %v3080 = vsel %vm367, %v3076, 0.0
      %v3081 = vsel %vm368, %v3077, 0.0
      %v3082 = vpack.c.bf16 %v3080, %v3080
      %v3083 = vpack.c.bf16 %v3081, %v3081
      %3084 = vrot.lane.b32.xlu0 %v2740, 80
      %v3085 = vpop.permute.xlu0 %3084
      %v3087 = vsel %vm388, %v3085, 0
      %v3090 = vsel %vm392, %v3082, 0
      %v3093 = vsel %vm392, %v3083, 0
      %3095 = vmatprep.subr.bf16.mxu0 %v3093
      %3096 = vmatpush1.bf16.msra.mxu0 %v3090
      %3097 = vmatprep.subr.bf16.mxu0 0
      %3098 = vmatpush1.bf16.msra.mxu0 0
      %3099 = vmatprep.subr.bf16.mxu0 0
      %3100 = vmatpush1.bf16.msra.mxu0 0
      %3101 = vmatprep.subr.bf16.mxu0 0
      %3102 = vmatpush1.bf16.msra.mxu0 0
      %3103 = vmatprep.subr.bf16.mxu0 0
      %3104 = vmatpush1.bf16.msra.mxu0 0
      %3105 = vmatprep.subr.bf16.mxu0 0
      %3106 = vmatpush1.bf16.msra.mxu0 0
      %3107 = vmatprep.subr.bf16.mxu0 0
      %3108 = vmatpush1.bf16.msra.mxu0 0
      %3109 = vmatprep.subr.bf16.mxu0 0
      %3110 = vmatpush1.bf16.msra.mxu0 0
      %3111 = vmatprep.subr.bf16.mxu0 0
      %3112 = vmatpush1.bf16.msra.mxu0 0
      %3113 = vmatprep.subr.bf16.mxu0 0
      %3114 = vmatpush1.bf16.msra.mxu0 0
      %3115 = vmatprep.subr.bf16.mxu0 0
      %3116 = vmatpush1.bf16.msra.mxu0 0
      %3117 = vmatprep.subr.bf16.mxu0 0
      %3118 = vmatpush1.bf16.msra.mxu0 0
      %3119 = vmatprep.subr.bf16.mxu0 0
      %3120 = vmatpush1.bf16.msra.mxu0 0
      %3121 = vmatprep.subr.bf16.mxu0 0
      %3122 = vmatpush1.bf16.msra.mxu0 0
      %3123 = vmatprep.subr.bf16.mxu0 0
      %3124 = vmatpush1.bf16.msra.mxu0 0
      %3125 = vmatprep.subr.bf16.mxu0 0
      %3126 = vmatpush1.bf16.msra.mxu0 0
      %3127 = vmatprep.mubr.bf16.mxu0 0
      %3128 = vmatmul.mubr.bf16.gmra.mrb[0].mxu0 %v3087
      %v3129 = vpop.f32.mrb[0].mxu0
      %v3130 = vadd.f32 0.0, %v3129
      %v3131 = vpop.f32.mrb[0].mxu0
      %v3132 = vadd.f32 0.0, %v3131
      %v3133 = vpop.f32.mrb[0].mxu0
      %v3134 = vpop.f32.mrb[0].mxu0
      %3135 = vdwg.mxu0
      %v3136 = vadd.f32 %v3068, %v3130
      %v3137 = vadd.f32 %v3069, %v3132
      %v3138 = vpack.c.bf16 %v2996, %v2996
      %v3139 = vpack.c.bf16 %v2997, %v2997
      %v3140 = vpack.c.bf16 %v2998, %v2998
      %3141 = vrot.lane.b32.xlu0 %v2740, 72
      %v3142 = vpop.permute.xlu0 %3141
      %3146 = vrot.lane.b32.xlu0 %v3138, 112
      %v3147 = vpop.permute.xlu0 %3146
      %3148 = vrot.lane.b32.xlu0 %v3139, 112
      %v3149 = vpop.permute.xlu0 %3148
      %3150 = vrot.lane.b32.xlu0 %v3140, 112
      %v3151 = vpop.permute.xlu0 %3150
      %v3152 = vsel %vm868, %v3147, %v3149
      %v3153 = vsel %vm868, %v3149, %v3151
      %v3155 = vsel %vm388, %v3142, 0
      %v3158 = vsel %vm392, %v3152, 0
      %v3161 = vsel %vm392, %v3153, 0
      %3163 = vmatprep.subr.bf16.mxu0 %v3161
      %3164 = vmatpush1.bf16.msra.mxu0 %v3158
      %3165 = vmatprep.subr.bf16.mxu0 0
      %3166 = vmatpush1.bf16.msra.mxu0 0
      %3167 = vmatprep.subr.bf16.mxu0 0
      %3168 = vmatpush1.bf16.msra.mxu0 0
      %3169 = vmatprep.subr.bf16.mxu0 0
      %3170 = vmatpush1.bf16.msra.mxu0 0
      %3171 = vmatprep.subr.bf16.mxu0 0
      %3172 = vmatpush1.bf16.msra.mxu0 0
      %3173 = vmatprep.subr.bf16.mxu0 0
      %3174 = vmatpush1.bf16.msra.mxu0 0
      %3175 = vmatprep.subr.bf16.mxu0 0
      %3176 = vmatpush1.bf16.msra.mxu0 0
      %3177 = vmatprep.subr.bf16.mxu0 0
      %3178 = vmatpush1.bf16.msra.mxu0 0
      %3179 = vmatprep.subr.bf16.mxu0 0
      %3180 = vmatpush1.bf16.msra.mxu0 0
      %3181 = vmatprep.subr.bf16.mxu0 0
      %3182 = vmatpush1.bf16.msra.mxu0 0
      %3183 = vmatprep.subr.bf16.mxu0 0
      %3184 = vmatpush1.bf16.msra.mxu0 0
      %3185 = vmatprep.subr.bf16.mxu0 0
      %3186 = vmatpush1.bf16.msra.mxu0 0
      %3187 = vmatprep.subr.bf16.mxu0 0
      %3188 = vmatpush1.bf16.msra.mxu0 0
      %3189 = vmatprep.subr.bf16.mxu0 0
      %3190 = vmatpush1.bf16.msra.mxu0 0
      %3191 = vmatprep.subr.bf16.mxu0 0
      %3192 = vmatpush1.bf16.msra.mxu0 0
      %3193 = vmatprep.subr.bf16.mxu0 0
      %3194 = vmatpush1.bf16.msra.mxu0 0
      %3195 = vmatprep.mubr.bf16.mxu0 0
      %3196 = vmatmul.mubr.bf16.gmra.mrb[0].mxu0 %v3155
      %v3197 = vpop.f32.mrb[0].mxu0
      %v3198 = vadd.f32 0.0, %v3197
      %v3199 = vpop.f32.mrb[0].mxu0
      %v3200 = vadd.f32 0.0, %v3199
      %v3201 = vpop.f32.mrb[0].mxu0
      %v3202 = vpop.f32.mrb[0].mxu0
      %3203 = vdwg.mxu0
      %v3204 = vadd.f32 %v3136, %v3198
      %v3205 = vadd.f32 %v3137, %v3200
      %3206 = vrot.lane.b32.xlu0 %v2996, 111
      %v3207 = vpop.permute.xlu0 %3206
      %3208 = vrot.lane.b32.xlu0 %v2997, 111
      %v3209 = vpop.permute.xlu0 %3208
      %3210 = vrot.lane.b32.xlu0 %v2998, 111
      %v3211 = vpop.permute.xlu0 %3210
      %v3212 = vsel %vm929, %v3207, %v3209
      %v3213 = vsel %vm929, %v3209, %v3211
      %v3216 = vsel %vm516, %v3212, 0.0
      %v3217 = vsel %vm517, %v3213, 0.0
      %v3218 = vpack.c.bf16 %v3216, %v3216
      %v3219 = vpack.c.bf16 %v3217, %v3217
      %3220 = vrot.lane.b32.xlu0 %v2740, 64
      %v3221 = vpop.permute.xlu0 %3220
      %v3223 = vsel %vm388, %v3221, 0
      %v3226 = vsel %vm392, %v3218, 0
      %v3229 = vsel %vm392, %v3219, 0
      %3231 = vmatprep.subr.bf16.mxu0 %v3229
      %3232 = vmatpush1.bf16.msra.mxu0 %v3226
      %3233 = vmatprep.subr.bf16.mxu0 0
      %3234 = vmatpush1.bf16.msra.mxu0 0
      %3235 = vmatprep.subr.bf16.mxu0 0
      %3236 = vmatpush1.bf16.msra.mxu0 0
      %3237 = vmatprep.subr.bf16.mxu0 0
      %3238 = vmatpush1.bf16.msra.mxu0 0
      %3239 = vmatprep.subr.bf16.mxu0 0
      %3240 = vmatpush1.bf16.msra.mxu0 0
      %3241 = vmatprep.subr.bf16.mxu0 0
      %3242 = vmatpush1.bf16.msra.mxu0 0
      %3243 = vmatprep.subr.bf16.mxu0 0
      %3244 = vmatpush1.bf16.msra.mxu0 0
      %3245 = vmatprep.subr.bf16.mxu0 0
      %3246 = vmatpush1.bf16.msra.mxu0 0
      %3247 = vmatprep.subr.bf16.mxu0 0
      %3248 = vmatpush1.bf16.msra.mxu0 0
      %3249 = vmatprep.subr.bf16.mxu0 0
      %3250 = vmatpush1.bf16.msra.mxu0 0
      %3251 = vmatprep.subr.bf16.mxu0 0
      %3252 = vmatpush1.bf16.msra.mxu0 0
      %3253 = vmatprep.subr.bf16.mxu0 0
      %3254 = vmatpush1.bf16.msra.mxu0 0
      %3255 = vmatprep.subr.bf16.mxu0 0
      %3256 = vmatpush1.bf16.msra.mxu0 0
      %3257 = vmatprep.subr.bf16.mxu0 0
      %3258 = vmatpush1.bf16.msra.mxu0 0
      %3259 = vmatprep.subr.bf16.mxu0 0
      %3260 = vmatpush1.bf16.msra.mxu0 0
      %3261 = vmatprep.subr.bf16.mxu0 0
      %3262 = vmatpush1.bf16.msra.mxu0 0
      %3263 = vmatprep.mubr.bf16.mxu0 0
      %3264 = vmatmul.mubr.bf16.gmra.mrb[0].mxu0 %v3223
      %v3265 = vpop.f32.mrb[0].mxu0
      %v3266 = vadd.f32 0.0, %v3265
      %v3267 = vpop.f32.mrb[0].mxu0
      %v3268 = vadd.f32 0.0, %v3267
      %v3269 = vpop.f32.mrb[0].mxu0
      %v3270 = vpop.f32.mrb[0].mxu0
      %3271 = vdwg.mxu0
      %v3272 = vadd.f32 %v3204, %v3266
      %v3273 = vadd.f32 %v3205, %v3268
      %v3274 = vmax.f32 %v3272, 0.0
      %v3275 = vmax.f32 %v3273, 0.0
      %3276 = vst [vmem:[#allocation2 + $0x8] sm:$0xff] %v3274
      %3277 = vst [vmem:[#allocation2 + $0x10] sm:$0xff] %v3275
      %v3278 = vld [vmem:[#allocation3] sm:$0xff]
      %v3279 = vld [vmem:[#allocation3 + $0x8] sm:$0xff]
      %v3280 = vld [vmem:[#allocation2] sm:$0xff]
      %v3281 = vld [vmem:[#allocation2 + $0x8] sm:$0xff]
      %v3282 = vld [vmem:[#allocation2 + $0x10] sm:$0xff]
      %3286 = vrot.lane.b32.xlu0 %v3280, 17
      %v3287 = vpop.permute.xlu0 %3286
      %3288 = vrot.lane.b32.xlu0 %v3281, 17
      %v3289 = vpop.permute.xlu0 %3288
      %3290 = vrot.lane.b32.xlu0 %v3282, 17
      %v3291 = vpop.permute.xlu0 %3290
      %v3292 = vsel %vm378, %v3287, %v3289
      %v3293 = vsel %vm378, %v3289, %v3291
      %v3296 = vsel %vm367, %v3292, 0.0
      %v3297 = vsel %vm368, %v3293, 0.0
      %v3298 = vpack.c.bf16 %v3296, %v3296
      %v3299 = vpack.c.bf16 %v3297, %v3297
      %v3300 = vld [vmem:[%s6] sm:$0xf]
      %v3302 = vsel %vm388, %v3300, 0
      %v3305 = vsel %vm392, %v3298, 0
      %v3308 = vsel %vm392, %v3299, 0
      %3310 = vmatprep.subr.bf16.mxu0 %v3308
      %3311 = vmatpush1.bf16.msra.mxu0 %v3305
      %3312 = vmatprep.subr.bf16.mxu0 0
      %3313 = vmatpush1.bf16.msra.mxu0 0
      %3314 = vmatprep.subr.bf16.mxu0 0
      %3315 = vmatpush1.bf16.msra.mxu0 0
      %3316 = vmatprep.subr.bf16.mxu0 0
      %3317 = vmatpush1.bf16.msra.mxu0 0
      %3318 = vmatprep.subr.bf16.mxu0 0
      %3319 = vmatpush1.bf16.msra.mxu0 0
      %3320 = vmatprep.subr.bf16.mxu0 0
      %3321 = vmatpush1.bf16.msra.mxu0 0
      %3322 = vmatprep.subr.bf16.mxu0 0
      %3323 = vmatpush1.bf16.msra.mxu0 0
      %3324 = vmatprep.subr.bf16.mxu0 0
      %3325 = vmatpush1.bf16.msra.mxu0 0
      %3326 = vmatprep.subr.bf16.mxu0 0
      %3327 = vmatpush1.bf16.msra.mxu0 0
      %3328 = vmatprep.subr.bf16.mxu0 0
      %3329 = vmatpush1.bf16.msra.mxu0 0
      %3330 = vmatprep.subr.bf16.mxu0 0
      %3331 = vmatpush1.bf16.msra.mxu0 0
      %3332 = vmatprep.subr.bf16.mxu0 0
      %3333 = vmatpush1.bf16.msra.mxu0 0
      %3334 = vmatprep.subr.bf16.mxu0 0
      %3335 = vmatpush1.bf16.msra.mxu0 0
      %3336 = vmatprep.subr.bf16.mxu0 0
      %3337 = vmatpush1.bf16.msra.mxu0 0
      %3338 = vmatprep.subr.bf16.mxu0 0
      %3339 = vmatpush1.bf16.msra.mxu0 0
      %3340 = vmatprep.subr.bf16.mxu0 0
      %3341 = vmatpush1.bf16.msra.mxu0 0
      %3342 = vmatprep.mubr.bf16.mxu0 0
      %3343 = vmatmul.mubr.bf16.gmra.mrb[0].mxu0 %v3302
      %v3344 = vpop.f32.mrb[0].mxu0
      %v3345 = vadd.f32 0.0, %v3344
      %v3346 = vpop.f32.mrb[0].mxu0
      %v3347 = vadd.f32 0.0, %v3346
      %v3348 = vpop.f32.mrb[0].mxu0
      %v3349 = vpop.f32.mrb[0].mxu0
      %3350 = vdwg.mxu0
      %v3351 = vadd.f32 %v3278, %v3345
      %v3352 = vadd.f32 %v3279, %v3347
      %v3353 = vpack.c.bf16 %v3280, %v3280
      %v3354 = vpack.c.bf16 %v3281, %v3281
      %v3355 = vpack.c.bf16 %v3282, %v3282
      %v3357 = vunpack.c.l.b16 %v3300
      %v3358 = vpack.c.b16 %v3357, %v3357
      %3359 = vrot.lane.b32.xlu0 %v3358, 120
      %v3360 = vpop.permute.xlu0 %3359
      %3364 = vrot.lane.b32.xlu0 %v3353, 16
      %v3365 = vpop.permute.xlu0 %3364
      %3366 = vrot.lane.b32.xlu0 %v3354, 16
      %v3367 = vpop.permute.xlu0 %3366
      %3368 = vrot.lane.b32.xlu0 %v3355, 16
      %v3369 = vpop.permute.xlu0 %3368
      %v3370 = vsel %vm459, %v3365, %v3367
      %v3371 = vsel %vm459, %v3367, %v3369
      %v3373 = vsel %vm388, %v3360, 0
      %v3376 = vsel %vm392, %v3370, 0
      %v3379 = vsel %vm392, %v3371, 0
      %3381 = vmatprep.subr.bf16.mxu0 %v3379
      %3382 = vmatpush1.bf16.msra.mxu0 %v3376
      %3383 = vmatprep.subr.bf16.mxu0 0
      %3384 = vmatpush1.bf16.msra.mxu0 0
      %3385 = vmatprep.subr.bf16.mxu0 0
      %3386 = vmatpush1.bf16.msra.mxu0 0
      %3387 = vmatprep.subr.bf16.mxu0 0
      %3388 = vmatpush1.bf16.msra.mxu0 0
      %3389 = vmatprep.subr.bf16.mxu0 0
      %3390 = vmatpush1.bf16.msra.mxu0 0
      %3391 = vmatprep.subr.bf16.mxu0 0
      %3392 = vmatpush1.bf16.msra.mxu0 0
      %3393 = vmatprep.subr.bf16.mxu0 0
      %3394 = vmatpush1.bf16.msra.mxu0 0
      %3395 = vmatprep.subr.bf16.mxu0 0
      %3396 = vmatpush1.bf16.msra.mxu0 0
      %3397 = vmatprep.subr.bf16.mxu0 0
      %3398 = vmatpush1.bf16.msra.mxu0 0
      %3399 = vmatprep.subr.bf16.mxu0 0
      %3400 = vmatpush1.bf16.msra.mxu0 0
      %3401 = vmatprep.subr.bf16.mxu0 0
      %3402 = vmatpush1.bf16.msra.mxu0 0
      %3403 = vmatprep.subr.bf16.mxu0 0
      %3404 = vmatpush1.bf16.msra.mxu0 0
      %3405 = vmatprep.subr.bf16.mxu0 0
      %3406 = vmatpush1.bf16.msra.mxu0 0
      %3407 = vmatprep.subr.bf16.mxu0 0
      %3408 = vmatpush1.bf16.msra.mxu0 0
      %3409 = vmatprep.subr.bf16.mxu0 0
      %3410 = vmatpush1.bf16.msra.mxu0 0
      %3411 = vmatprep.subr.bf16.mxu0 0
      %3412 = vmatpush1.bf16.msra.mxu0 0
      %3413 = vmatprep.mubr.bf16.mxu0 0
      %3414 = vmatmul.mubr.bf16.gmra.mrb[0].mxu0 %v3373
      %v3415 = vpop.f32.mrb[0].mxu0
      %v3416 = vadd.f32 0.0, %v3415
      %v3417 = vpop.f32.mrb[0].mxu0
      %v3418 = vadd.f32 0.0, %v3417
      %v3419 = vpop.f32.mrb[0].mxu0
      %v3420 = vpop.f32.mrb[0].mxu0
      %3421 = vdwg.mxu0
      %v3422 = vadd.f32 %v3351, %v3416
      %v3423 = vadd.f32 %v3352, %v3418
      %3424 = vrot.lane.b32.xlu0 %v3280, 15
      %v3425 = vpop.permute.xlu0 %3424
      %3426 = vrot.lane.b32.xlu0 %v3281, 15
      %v3427 = vpop.permute.xlu0 %3426
      %3428 = vrot.lane.b32.xlu0 %v3282, 15
      %v3429 = vpop.permute.xlu0 %3428
      %v3430 = vsel %vm524, %v3425, %v3427
      %v3431 = vsel %vm524, %v3427, %v3429
      %v3434 = vsel %vm516, %v3430, 0.0
      %v3435 = vsel %vm517, %v3431, 0.0
      %v3436 = vpack.c.bf16 %v3434, %v3434
      %v3437 = vpack.c.bf16 %v3435, %v3435
      %3438 = vrot.lane.b32.xlu0 %v3358, 112
      %v3439 = vpop.permute.xlu0 %3438
      %v3441 = vsel %vm388, %v3439, 0
      %v3444 = vsel %vm392, %v3436, 0
      %v3447 = vsel %vm392, %v3437, 0
      %3449 = vmatprep.subr.bf16.mxu0 %v3447
      %3450 = vmatpush1.bf16.msra.mxu0 %v3444
      %3451 = vmatprep.subr.bf16.mxu0 0
      %3452 = vmatpush1.bf16.msra.mxu0 0
      %3453 = vmatprep.subr.bf16.mxu0 0
      %3454 = vmatpush1.bf16.msra.mxu0 0
      %3455 = vmatprep.subr.bf16.mxu0 0
      %3456 = vmatpush1.bf16.msra.mxu0 0
      %3457 = vmatprep.subr.bf16.mxu0 0
      %3458 = vmatpush1.bf16.msra.mxu0 0
      %3459 = vmatprep.subr.bf16.mxu0 0
      %3460 = vmatpush1.bf16.msra.mxu0 0
      %3461 = vmatprep.subr.bf16.mxu0 0
      %3462 = vmatpush1.bf16.msra.mxu0 0
      %3463 = vmatprep.subr.bf16.mxu0 0
      %3464 = vmatpush1.bf16.msra.mxu0 0
      %3465 = vmatprep.subr.bf16.mxu0 0
      %3466 = vmatpush1.bf16.msra.mxu0 0
      %3467 = vmatprep.subr.bf16.mxu0 0
      %3468 = vmatpush1.bf16.msra.mxu0 0
      %3469 = vmatprep.subr.bf16.mxu0 0
      %3470 = vmatpush1.bf16.msra.mxu0 0
      %3471 = vmatprep.subr.bf16.mxu0 0
      %3472 = vmatpush1.bf16.msra.mxu0 0
      %3473 = vmatprep.subr.bf16.mxu0 0
      %3474 = vmatpush1.bf16.msra.mxu0 0
      %3475 = vmatprep.subr.bf16.mxu0 0
      %3476 = vmatpush1.bf16.msra.mxu0 0
      %3477 = vmatprep.subr.bf16.mxu0 0
      %3478 = vmatpush1.bf16.msra.mxu0 0
      %3479 = vmatprep.subr.bf16.mxu0 0
      %3480 = vmatpush1.bf16.msra.mxu0 0
      %3481 = vmatprep.mubr.bf16.mxu0 0
      %3482 = vmatmul.mubr.bf16.gmra.mrb[0].mxu0 %v3441
      %v3483 = vpop.f32.mrb[0].mxu0
      %v3484 = vadd.f32 0.0, %v3483
      %v3485 = vpop.f32.mrb[0].mxu0
      %v3486 = vadd.f32 0.0, %v3485
      %v3487 = vpop.f32.mrb[0].mxu0
      %v3488 = vpop.f32.mrb[0].mxu0
      %3489 = vdwg.mxu0
      %v3490 = vadd.f32 %v3422, %v3484
      %v3491 = vadd.f32 %v3423, %v3486
      %3492 = vrot.lane.b32.xlu0 %v3280, 1
      %v3493 = vpop.permute.xlu0 %3492
      %3494 = vrot.lane.b32.xlu0 %v3281, 1
      %v3495 = vpop.permute.xlu0 %3494
      %3496 = vrot.lane.b32.xlu0 %v3282, 1
      %v3497 = vpop.permute.xlu0 %3496
      %v3498 = vsel %vm593, %v3493, %v3495
      %v3499 = vsel %vm593, %v3495, %v3497
      %v3502 = vsel %vm367, %v3498, 0.0
      %v3503 = vsel %vm368, %v3499, 0.0
      %v3504 = vpack.c.bf16 %v3502, %v3502
      %v3505 = vpack.c.bf16 %v3503, %v3503
      %3506 = vrot.lane.b32.xlu0 %v3358, 104
      %v3507 = vpop.permute.xlu0 %3506
      %v3509 = vsel %vm388, %v3507, 0
      %v3512 = vsel %vm392, %v3504, 0
      %v3515 = vsel %vm392, %v3505, 0
      %3517 = vmatprep.subr.bf16.mxu0 %v3515
      %3518 = vmatpush1.bf16.msra.mxu0 %v3512
      %3519 = vmatprep.subr.bf16.mxu0 0
      %3520 = vmatpush1.bf16.msra.mxu0 0
      %3521 = vmatprep.subr.bf16.mxu0 0
      %3522 = vmatpush1.bf16.msra.mxu0 0
      %3523 = vmatprep.subr.bf16.mxu0 0
      %3524 = vmatpush1.bf16.msra.mxu0 0
      %3525 = vmatprep.subr.bf16.mxu0 0
      %3526 = vmatpush1.bf16.msra.mxu0 0
      %3527 = vmatprep.subr.bf16.mxu0 0
      %3528 = vmatpush1.bf16.msra.mxu0 0
      %3529 = vmatprep.subr.bf16.mxu0 0
      %3530 = vmatpush1.bf16.msra.mxu0 0
      %3531 = vmatprep.subr.bf16.mxu0 0
      %3532 = vmatpush1.bf16.msra.mxu0 0
      %3533 = vmatprep.subr.bf16.mxu0 0
      %3534 = vmatpush1.bf16.msra.mxu0 0
      %3535 = vmatprep.subr.bf16.mxu0 0
      %3536 = vmatpush1.bf16.msra.mxu0 0
      %3537 = vmatprep.subr.bf16.mxu0 0
      %3538 = vmatpush1.bf16.msra.mxu0 0
      %3539 = vmatprep.subr.bf16.mxu0 0
      %3540 = vmatpush1.bf16.msra.mxu0 0
      %3541 = vmatprep.subr.bf16.mxu0 0
      %3542 = vmatpush1.bf16.msra.mxu0 0
      %3543 = vmatprep.subr.bf16.mxu0 0
      %3544 = vmatpush1.bf16.msra.mxu0 0
      %3545 = vmatprep.subr.bf16.mxu0 0
      %3546 = vmatpush1.bf16.msra.mxu0 0
      %3547 = vmatprep.subr.bf16.mxu0 0
      %3548 = vmatpush1.bf16.msra.mxu0 0
      %3549 = vmatprep.mubr.bf16.mxu0 0
      %3550 = vmatmul.mubr.bf16.gmra.mrb[0].mxu0 %v3509
      %v3551 = vpop.f32.mrb[0].mxu0
      %v3552 = vadd.f32 0.0, %v3551
      %v3553 = vpop.f32.mrb[0].mxu0
      %v3554 = vadd.f32 0.0, %v3553
      %v3555 = vpop.f32.mrb[0].mxu0
      %v3556 = vpop.f32.mrb[0].mxu0
      %3557 = vdwg.mxu0
      %v3558 = vadd.f32 %v3490, %v3552
      %v3559 = vadd.f32 %v3491, %v3554
      %3560 = vrot.lane.b32.xlu0 %v3358, 96
      %v3561 = vpop.permute.xlu0 %3560
      %v3563 = vsel %vm388, %v3561, 0
      %v3566 = vsel %vm392, %v3354, 0
      %v3569 = vsel %vm392, %v3355, 0
      %3571 = vmatprep.subr.bf16.mxu0 %v3569
      %3572 = vmatpush1.bf16.msra.mxu0 %v3566
      %3573 = vmatprep.subr.bf16.mxu0 0
      %3574 = vmatpush1.bf16.msra.mxu0 0
      %3575 = vmatprep.subr.bf16.mxu0 0
      %3576 = vmatpush1.bf16.msra.mxu0 0
      %3577 = vmatprep.subr.bf16.mxu0 0
      %3578 = vmatpush1.bf16.msra.mxu0 0
      %3579 = vmatprep.subr.bf16.mxu0 0
      %3580 = vmatpush1.bf16.msra.mxu0 0
      %3581 = vmatprep.subr.bf16.mxu0 0
      %3582 = vmatpush1.bf16.msra.mxu0 0
      %3583 = vmatprep.subr.bf16.mxu0 0
      %3584 = vmatpush1.bf16.msra.mxu0 0
      %3585 = vmatprep.subr.bf16.mxu0 0
      %3586 = vmatpush1.bf16.msra.mxu0 0
      %3587 = vmatprep.subr.bf16.mxu0 0
      %3588 = vmatpush1.bf16.msra.mxu0 0
      %3589 = vmatprep.subr.bf16.mxu0 0
      %3590 = vmatpush1.bf16.msra.mxu0 0
      %3591 = vmatprep.subr.bf16.mxu0 0
      %3592 = vmatpush1.bf16.msra.mxu0 0
      %3593 = vmatprep.subr.bf16.mxu0 0
      %3594 = vmatpush1.bf16.msra.mxu0 0
      %3595 = vmatprep.subr.bf16.mxu0 0
      %3596 = vmatpush1.bf16.msra.mxu0 0
      %3597 = vmatprep.subr.bf16.mxu0 0
      %3598 = vmatpush1.bf16.msra.mxu0 0
      %3599 = vmatprep.subr.bf16.mxu0 0
      %3600 = vmatpush1.bf16.msra.mxu0 0
      %3601 = vmatprep.subr.bf16.mxu0 0
      %3602 = vmatpush1.bf16.msra.mxu0 0
      %3603 = vmatprep.mubr.bf16.mxu0 0
      %3604 = vmatmul.mubr.bf16.gmra.mrb[0].mxu0 %v3563
      %v3605 = vpop.f32.mrb[0].mxu0
      %v3606 = vadd.f32 0.0, %v3605
      %v3607 = vpop.f32.mrb[0].mxu0
      %v3608 = vadd.f32 0.0, %v3607
      %v3609 = vpop.f32.mrb[0].mxu0
      %v3610 = vpop.f32.mrb[0].mxu0
      %3611 = vdwg.mxu0
      %v3612 = vadd.f32 %v3558, %v3606
      %v3613 = vadd.f32 %v3559, %v3608
      %v3614 = vld [vmem:[#allocation2 + $0x8] sm:$0xff]
      %v3615 = vld [vmem:[#allocation2 + $0x10] sm:$0xff]
      %v3616 = vld [vmem:[#allocation2 + $0x18] sm:$0xff]
      %3620 = vrot.lane.b32.xlu0 %v3614, 127
      %v3621 = vpop.permute.xlu0 %3620
      %3622 = vrot.lane.b32.xlu0 %v3615, 127
      %v3623 = vpop.permute.xlu0 %3622
      %3624 = vrot.lane.b32.xlu0 %v3616, 127
      %v3625 = vpop.permute.xlu0 %3624
      %v3626 = vsel %vm722, %v3621, %v3623
      %v3627 = vsel %vm722, %v3623, %v3625
      %v3630 = vsel %vm516, %v3626, 0.0
      %v3631 = vsel %vm517, %v3627, 0.0
      %v3632 = vpack.c.bf16 %v3630, %v3630
      %v3633 = vpack.c.bf16 %v3631, %v3631
      %3634 = vrot.lane.b32.xlu0 %v3358, 88
      %v3635 = vpop.permute.xlu0 %3634
      %v3637 = vsel %vm388, %v3635, 0
      %v3640 = vsel %vm392, %v3632, 0
      %v3643 = vsel %vm392, %v3633, 0
      %3645 = vmatprep.subr.bf16.mxu0 %v3643
      %3646 = vmatpush1.bf16.msra.mxu0 %v3640
      %3647 = vmatprep.subr.bf16.mxu0 0
      %3648 = vmatpush1.bf16.msra.mxu0 0
      %3649 = vmatprep.subr.bf16.mxu0 0
      %3650 = vmatpush1.bf16.msra.mxu0 0
      %3651 = vmatprep.subr.bf16.mxu0 0
      %3652 = vmatpush1.bf16.msra.mxu0 0
      %3653 = vmatprep.subr.bf16.mxu0 0
      %3654 = vmatpush1.bf16.msra.mxu0 0
      %3655 = vmatprep.subr.bf16.mxu0 0
      %3656 = vmatpush1.bf16.msra.mxu0 0
      %3657 = vmatprep.subr.bf16.mxu0 0
      %3658 = vmatpush1.bf16.msra.mxu0 0
      %3659 = vmatprep.subr.bf16.mxu0 0
      %3660 = vmatpush1.bf16.msra.mxu0 0
      %3661 = vmatprep.subr.bf16.mxu0 0
      %3662 = vmatpush1.bf16.msra.mxu0 0
      %3663 = vmatprep.subr.bf16.mxu0 0
      %3664 = vmatpush1.bf16.msra.mxu0 0
      %3665 = vmatprep.subr.bf16.mxu0 0
      %3666 = vmatpush1.bf16.msra.mxu0 0
      %3667 = vmatprep.subr.bf16.mxu0 0
      %3668 = vmatpush1.bf16.msra.mxu0 0
      %3669 = vmatprep.subr.bf16.mxu0 0
      %3670 = vmatpush1.bf16.msra.mxu0 0
      %3671 = vmatprep.subr.bf16.mxu0 0
      %3672 = vmatpush1.bf16.msra.mxu0 0
      %3673 = vmatprep.subr.bf16.mxu0 0
      %3674 = vmatpush1.bf16.msra.mxu0 0
      %3675 = vmatprep.subr.bf16.mxu0 0
      %3676 = vmatpush1.bf16.msra.mxu0 0
      %3677 = vmatprep.mubr.bf16.mxu0 0
      %3678 = vmatmul.mubr.bf16.gmra.mrb[0].mxu0 %v3637
      %v3679 = vpop.f32.mrb[0].mxu0
      %v3680 = vadd.f32 0.0, %v3679
      %v3681 = vpop.f32.mrb[0].mxu0
      %v3682 = vadd.f32 0.0, %v3681
      %v3683 = vpop.f32.mrb[0].mxu0
      %v3684 = vpop.f32.mrb[0].mxu0
      %3685 = vdwg.mxu0
      %v3686 = vadd.f32 %v3612, %v3680
      %v3687 = vadd.f32 %v3613, %v3682
      %3688 = vrot.lane.b32.xlu0 %v3614, 113
      %v3689 = vpop.permute.xlu0 %3688
      %3690 = vrot.lane.b32.xlu0 %v3615, 113
      %v3691 = vpop.permute.xlu0 %3690
      %3692 = vrot.lane.b32.xlu0 %v3616, 113
      %v3693 = vpop.permute.xlu0 %3692
      %v3694 = vsel %vm791, %v3689, %v3691
      %v3695 = vsel %vm791, %v3691, %v3693
      %v3698 = vsel %vm367, %v3694, 0.0
      %v3699 = vsel %vm368, %v3695, 0.0
      %v3700 = vpack.c.bf16 %v3698, %v3698
      %v3701 = vpack.c.bf16 %v3699, %v3699
      %3702 = vrot.lane.b32.xlu0 %v3358, 80
      %v3703 = vpop.permute.xlu0 %3702
      %v3705 = vsel %vm388, %v3703, 0
      %v3708 = vsel %vm392, %v3700, 0
      %v3711 = vsel %vm392, %v3701, 0
      %3713 = vmatprep.subr.bf16.mxu0 %v3711
      %3714 = vmatpush1.bf16.msra.mxu0 %v3708
      %3715 = vmatprep.subr.bf16.mxu0 0
      %3716 = vmatpush1.bf16.msra.mxu0 0
      %3717 = vmatprep.subr.bf16.mxu0 0
      %3718 = vmatpush1.bf16.msra.mxu0 0
      %3719 = vmatprep.subr.bf16.mxu0 0
      %3720 = vmatpush1.bf16.msra.mxu0 0
      %3721 = vmatprep.subr.bf16.mxu0 0
      %3722 = vmatpush1.bf16.msra.mxu0 0
      %3723 = vmatprep.subr.bf16.mxu0 0
      %3724 = vmatpush1.bf16.msra.mxu0 0
      %3725 = vmatprep.subr.bf16.mxu0 0
      %3726 = vmatpush1.bf16.msra.mxu0 0
      %3727 = vmatprep.subr.bf16.mxu0 0
      %3728 = vmatpush1.bf16.msra.mxu0 0
      %3729 = vmatprep.subr.bf16.mxu0 0
      %3730 = vmatpush1.bf16.msra.mxu0 0
      %3731 = vmatprep.subr.bf16.mxu0 0
      %3732 = vmatpush1.bf16.msra.mxu0 0
      %3733 = vmatprep.subr.bf16.mxu0 0
      %3734 = vmatpush1.bf16.msra.mxu0 0
      %3735 = vmatprep.subr.bf16.mxu0 0
      %3736 = vmatpush1.bf16.msra.mxu0 0
      %3737 = vmatprep.subr.bf16.mxu0 0
      %3738 = vmatpush1.bf16.msra.mxu0 0
      %3739 = vmatprep.subr.bf16.mxu0 0
      %3740 = vmatpush1.bf16.msra.mxu0 0
      %3741 = vmatprep.subr.bf16.mxu0 0
      %3742 = vmatpush1.bf16.msra.mxu0 0
      %3743 = vmatprep.subr.bf16.mxu0 0
      %3744 = vmatpush1.bf16.msra.mxu0 0
      %3745 = vmatprep.mubr.bf16.mxu0 0
      %3746 = vmatmul.mubr.bf16.gmra.mrb[0].mxu0 %v3705
      %v3747 = vpop.f32.mrb[0].mxu0
      %v3748 = vadd.f32 0.0, %v3747
      %v3749 = vpop.f32.mrb[0].mxu0
      %v3750 = vadd.f32 0.0, %v3749
      %v3751 = vpop.f32.mrb[0].mxu0
      %v3752 = vpop.f32.mrb[0].mxu0
      %3753 = vdwg.mxu0
      %v3754 = vadd.f32 %v3686, %v3748
      %v3755 = vadd.f32 %v3687, %v3750
      %v3756 = vpack.c.bf16 %v3614, %v3614
      %v3757 = vpack.c.bf16 %v3615, %v3615
      %v3758 = vpack.c.bf16 %v3616, %v3616
      %3759 = vrot.lane.b32.xlu0 %v3358, 72
      %v3760 = vpop.permute.xlu0 %3759
      %3764 = vrot.lane.b32.xlu0 %v3756, 112
      %v3765 = vpop.permute.xlu0 %3764
      %3766 = vrot.lane.b32.xlu0 %v3757, 112
      %v3767 = vpop.permute.xlu0 %3766
      %3768 = vrot.lane.b32.xlu0 %v3758, 112
      %v3769 = vpop.permute.xlu0 %3768
      %v3770 = vsel %vm868, %v3765, %v3767
      %v3771 = vsel %vm868, %v3767, %v3769
      %v3773 = vsel %vm388, %v3760, 0
      %v3776 = vsel %vm392, %v3770, 0
      %v3779 = vsel %vm392, %v3771, 0
      %3781 = vmatprep.subr.bf16.mxu0 %v3779
      %3782 = vmatpush1.bf16.msra.mxu0 %v3776
      %3783 = vmatprep.subr.bf16.mxu0 0
      %3784 = vmatpush1.bf16.msra.mxu0 0
      %3785 = vmatprep.subr.bf16.mxu0 0
      %3786 = vmatpush1.bf16.msra.mxu0 0
      %3787 = vmatprep.subr.bf16.mxu0 0
      %3788 = vmatpush1.bf16.msra.mxu0 0
      %3789 = vmatprep.subr.bf16.mxu0 0
      %3790 = vmatpush1.bf16.msra.mxu0 0
      %3791 = vmatprep.subr.bf16.mxu0 0
      %3792 = vmatpush1.bf16.msra.mxu0 0
      %3793 = vmatprep.subr.bf16.mxu0 0
      %3794 = vmatpush1.bf16.msra.mxu0 0
      %3795 = vmatprep.subr.bf16.mxu0 0
      %3796 = vmatpush1.bf16.msra.mxu0 0
      %3797 = vmatprep.subr.bf16.mxu0 0
      %3798 = vmatpush1.bf16.msra.mxu0 0
      %3799 = vmatprep.subr.bf16.mxu0 0
      %3800 = vmatpush1.bf16.msra.mxu0 0
      %3801 = vmatprep.subr.bf16.mxu0 0
      %3802 = vmatpush1.bf16.msra.mxu0 0
      %3803 = vmatprep.subr.bf16.mxu0 0
      %3804 = vmatpush1.bf16.msra.mxu0 0
      %3805 = vmatprep.subr.bf16.mxu0 0
      %3806 = vmatpush1.bf16.msra.mxu0 0
      %3807 = vmatprep.subr.bf16.mxu0 0
      %3808 = vmatpush1.bf16.msra.mxu0 0
      %3809 = vmatprep.subr.bf16.mxu0 0
      %3810 = vmatpush1.bf16.msra.mxu0 0
      %3811 = vmatprep.subr.bf16.mxu0 0
      %3812 = vmatpush1.bf16.msra.mxu0 0
      %3813 = vmatprep.mubr.bf16.mxu0 0
      %3814 = vmatmul.mubr.bf16.gmra.mrb[0].mxu0 %v3773
      %v3815 = vpop.f32.mrb[0].mxu0
      %v3816 = vadd.f32 0.0, %v3815
      %v3817 = vpop.f32.mrb[0].mxu0
      %v3818 = vadd.f32 0.0, %v3817
      %v3819 = vpop.f32.mrb[0].mxu0
      %v3820 = vpop.f32.mrb[0].mxu0
      %3821 = vdwg.mxu0
      %v3822 = vadd.f32 %v3754, %v3816
      %v3823 = vadd.f32 %v3755, %v3818
      %3824 = vrot.lane.b32.xlu0 %v3614, 111
      %v3825 = vpop.permute.xlu0 %3824
      %3826 = vrot.lane.b32.xlu0 %v3615, 111
      %v3827 = vpop.permute.xlu0 %3826
      %3828 = vrot.lane.b32.xlu0 %v3616, 111
      %v3829 = vpop.permute.xlu0 %3828
      %v3830 = vsel %vm929, %v3825, %v3827
      %v3831 = vsel %vm929, %v3827, %v3829
      %v3834 = vsel %vm516, %v3830, 0.0
      %v3835 = vsel %vm517, %v3831, 0.0
      %v3836 = vpack.c.bf16 %v3834, %v3834
      %v3837 = vpack.c.bf16 %v3835, %v3835
      %3838 = vrot.lane.b32.xlu0 %v3358, 64
      %v3839 = vpop.permute.xlu0 %3838
      %v3841 = vsel %vm388, %v3839, 0
      %v3844 = vsel %vm392, %v3836, 0
      %v3847 = vsel %vm392, %v3837, 0
      %3849 = vmatprep.subr.bf16.mxu0 %v3847
      %3850 = vmatpush1.bf16.msra.mxu0 %v3844
      %3851 = vmatprep.subr.bf16.mxu0 0
      %3852 = vmatpush1.bf16.msra.mxu0 0
      %3853 = vmatprep.subr.bf16.mxu0 0
      %3854 = vmatpush1.bf16.msra.mxu0 0
      %3855 = vmatprep.subr.bf16.mxu0 0
      %3856 = vmatpush1.bf16.msra.mxu0 0
      %3857 = vmatprep.subr.bf16.mxu0 0
      %3858 = vmatpush1.bf16.msra.mxu0 0
      %3859 = vmatprep.subr.bf16.mxu0 0
      %3860 = vmatpush1.bf16.msra.mxu0 0
      %3861 = vmatprep.subr.bf16.mxu0 0
      %3862 = vmatpush1.bf16.msra.mxu0 0
      %3863 = vmatprep.subr.bf16.mxu0 0
      %3864 = vmatpush1.bf16.msra.mxu0 0
      %3865 = vmatprep.subr.bf16.mxu0 0
      %3866 = vmatpush1.bf16.msra.mxu0 0
      %3867 = vmatprep.subr.bf16.mxu0 0
      %3868 = vmatpush1.bf16.msra.mxu0 0
      %3869 = vmatprep.subr.bf16.mxu0 0
      %3870 = vmatpush1.bf16.msra.mxu0 0
      %3871 = vmatprep.subr.bf16.mxu0 0
      %3872 = vmatpush1.bf16.msra.mxu0 0
      %3873 = vmatprep.subr.bf16.mxu0 0
      %3874 = vmatpush1.bf16.msra.mxu0 0
      %3875 = vmatprep.subr.bf16.mxu0 0
      %3876 = vmatpush1.bf16.msra.mxu0 0
      %3877 = vmatprep.subr.bf16.mxu0 0
      %3878 = vmatpush1.bf16.msra.mxu0 0
      %3879 = vmatprep.subr.bf16.mxu0 0
      %3880 = vmatpush1.bf16.msra.mxu0 0
      %3881 = vmatprep.mubr.bf16.mxu0 0
      %3882 = vmatmul.mubr.bf16.gmra.mrb[0].mxu0 %v3841
      %v3883 = vpop.f32.mrb[0].mxu0
      %v3884 = vadd.f32 0.0, %v3883
      %v3885 = vpop.f32.mrb[0].mxu0
      %v3886 = vadd.f32 0.0, %v3885
      %v3887 = vpop.f32.mrb[0].mxu0
      %v3888 = vpop.f32.mrb[0].mxu0
      %3889 = vdwg.mxu0
      %v3890 = vadd.f32 %v3822, %v3884
      %v3891 = vadd.f32 %v3823, %v3886
      %v3892 = vmax.f32 %v3890, 0.0
      %v3893 = vmax.f32 %v3891, 0.0
      %3894 = vst [vmem:[#allocation2 + $0x8] sm:$0xff] %v3892
      %3895 = vst [vmem:[#allocation2 + $0x10] sm:$0xff] %v3893
      %v3896 = vld [vmem:[#allocation2] sm:$0xff]
      %v3897 = vld [vmem:[#allocation2 + $0x8] sm:$0xff]
      %v3898 = vld [vmem:[#allocation2 + $0x10] sm:$0xff]
      %3902 = vrot.lane.b32.xlu0 %v3896, 17
      %v3903 = vpop.permute.xlu0 %3902
      %3904 = vrot.lane.b32.xlu0 %v3897, 17
      %v3905 = vpop.permute.xlu0 %3904
      %3906 = vrot.lane.b32.xlu0 %v3898, 17
      %v3907 = vpop.permute.xlu0 %3906
      %v3908 = vsel %vm378, %v3903, %v3905
      %v3909 = vsel %vm378, %v3905, %v3907
      %v3912 = vsel %vm367, %v3908, 0.0
      %v3913 = vsel %vm368, %v3909, 0.0
      %v3914 = vpack.c.bf16 %v3912, %v3912
      %v3915 = vpack.c.bf16 %v3913, %v3913
      %v3916 = vld [vmem:[%s3] sm:$0xf]
      %v3918 = vsel %vm388, %v3916, 0
      %v3921 = vsel %vm392, %v3914, 0
      %v3924 = vsel %vm392, %v3915, 0
      %3926 = vmatprep.subr.bf16.mxu0 %v3924
      %3927 = vmatpush1.bf16.msra.mxu0 %v3921
      %3928 = vmatprep.subr.bf16.mxu0 0
      %3929 = vmatpush1.bf16.msra.mxu0 0
      %3930 = vmatprep.subr.bf16.mxu0 0
      %3931 = vmatpush1.bf16.msra.mxu0 0
      %3932 = vmatprep.subr.bf16.mxu0 0
      %3933 = vmatpush1.bf16.msra.mxu0 0
      %3934 = vmatprep.subr.bf16.mxu0 0
      %3935 = vmatpush1.bf16.msra.mxu0 0
      %3936 = vmatprep.subr.bf16.mxu0 0
      %3937 = vmatpush1.bf16.msra.mxu0 0
      %3938 = vmatprep.subr.bf16.mxu0 0
      %3939 = vmatpush1.bf16.msra.mxu0 0
      %3940 = vmatprep.subr.bf16.mxu0 0
      %3941 = vmatpush1.bf16.msra.mxu0 0
      %3942 = vmatprep.subr.bf16.mxu0 0
      %3943 = vmatpush1.bf16.msra.mxu0 0
      %3944 = vmatprep.subr.bf16.mxu0 0
      %3945 = vmatpush1.bf16.msra.mxu0 0
      %3946 = vmatprep.subr.bf16.mxu0 0
      %3947 = vmatpush1.bf16.msra.mxu0 0
      %3948 = vmatprep.subr.bf16.mxu0 0
      %3949 = vmatpush1.bf16.msra.mxu0 0
      %3950 = vmatprep.subr.bf16.mxu0 0
      %3951 = vmatpush1.bf16.msra.mxu0 0
      %3952 = vmatprep.subr.bf16.mxu0 0
      %3953 = vmatpush1.bf16.msra.mxu0 0
      %3954 = vmatprep.subr.bf16.mxu0 0
      %3955 = vmatpush1.bf16.msra.mxu0 0
      %3956 = vmatprep.subr.bf16.mxu0 0
      %3957 = vmatpush1.bf16.msra.mxu0 0
      %3958 = vmatprep.mubr.bf16.mxu0 0
      %3959 = vmatmul.mubr.bf16.gmra.mrb[0].mxu0 %v3918
      %v3960 = vpop.f32.mrb[0].mxu0
      %v3961 = vadd.f32 0.0, %v3960
      %v3962 = vpop.f32.mrb[0].mxu0
      %v3963 = vadd.f32 0.0, %v3962
      %v3964 = vpop.f32.mrb[0].mxu0
      %v3965 = vpop.f32.mrb[0].mxu0
      %3966 = vdwg.mxu0
      %v3967 = vadd.f32 %v350, %v3961
      %v3968 = vadd.f32 %v350, %v3963
      %v3969 = vpack.c.bf16 %v3896, %v3896
      %v3970 = vpack.c.bf16 %v3897, %v3897
      %v3971 = vpack.c.bf16 %v3898, %v3898
      %v3973 = vunpack.c.l.b16 %v3916
      %v3974 = vpack.c.b16 %v3973, %v3973
      %3975 = vrot.lane.b32.xlu0 %v3974, 120
      %v3976 = vpop.permute.xlu0 %3975
      %3980 = vrot.lane.b32.xlu0 %v3969, 16
      %v3981 = vpop.permute.xlu0 %3980
      %3982 = vrot.lane.b32.xlu0 %v3970, 16
      %v3983 = vpop.permute.xlu0 %3982
      %3984 = vrot.lane.b32.xlu0 %v3971, 16
      %v3985 = vpop.permute.xlu0 %3984
      %v3986 = vsel %vm459, %v3981, %v3983
      %v3987 = vsel %vm459, %v3983, %v3985
      %v3989 = vsel %vm388, %v3976, 0
      %v3992 = vsel %vm392, %v3986, 0
      %v3995 = vsel %vm392, %v3987, 0
      %3997 = vmatprep.subr.bf16.mxu0 %v3995
      %3998 = vmatpush1.bf16.msra.mxu0 %v3992
      %3999 = vmatprep.subr.bf16.mxu0 0
      %4000 = vmatpush1.bf16.msra.mxu0 0
      %4001 = vmatprep.subr.bf16.mxu0 0
      %4002 = vmatpush1.bf16.msra.mxu0 0
      %4003 = vmatprep.subr.bf16.mxu0 0
      %4004 = vmatpush1.bf16.msra.mxu0 0
      %4005 = vmatprep.subr.bf16.mxu0 0
      %4006 = vmatpush1.bf16.msra.mxu0 0
      %4007 = vmatprep.subr.bf16.mxu0 0
      %4008 = vmatpush1.bf16.msra.mxu0 0
      %4009 = vmatprep.subr.bf16.mxu0 0
      %4010 = vmatpush1.bf16.msra.mxu0 0
      %4011 = vmatprep.subr.bf16.mxu0 0
      %4012 = vmatpush1.bf16.msra.mxu0 0
      %4013 = vmatprep.subr.bf16.mxu0 0
      %4014 = vmatpush1.bf16.msra.mxu0 0
      %4015 = vmatprep.subr.bf16.mxu0 0
      %4016 = vmatpush1.bf16.msra.mxu0 0
      %4017 = vmatprep.subr.bf16.mxu0 0
      %4018 = vmatpush1.bf16.msra.mxu0 0
      %4019 = vmatprep.subr.bf16.mxu0 0
      %4020 = vmatpush1.bf16.msra.mxu0 0
      %4021 = vmatprep.subr.bf16.mxu0 0
      %4022 = vmatpush1.bf16.msra.mxu0 0
      %4023 = vmatprep.subr.bf16.mxu0 0
      %4024 = vmatpush1.bf16.msra.mxu0 0
      %4025 = vmatprep.subr.bf16.mxu0 0
      %4026 = vmatpush1.bf16.msra.mxu0 0
      %4027 = vmatprep.subr.bf16.mxu0 0
      %4028 = vmatpush1.bf16.msra.mxu0 0
      %4029 = vmatprep.mubr.bf16.mxu0 0
      %4030 = vmatmul.mubr.bf16.gmra.mrb[0].mxu0 %v3989
      %v4031 = vpop.f32.mrb[0].mxu0
      %v4032 = vadd.f32 0.0, %v4031
      %v4033 = vpop.f32.mrb[0].mxu0
      %v4034 = vadd.f32 0.0, %v4033
      %v4035 = vpop.f32.mrb[0].mxu0
      %v4036 = vpop.f32.mrb[0].mxu0
      %4037 = vdwg.mxu0
      %v4038 = vadd.f32 %v3967, %v4032
      %v4039 = vadd.f32 %v3968, %v4034
      %4040 = vrot.lane.b32.xlu0 %v3896, 15
      %v4041 = vpop.permute.xlu0 %4040
      %4042 = vrot.lane.b32.xlu0 %v3897, 15
      %v4043 = vpop.permute.xlu0 %4042
      %4044 = vrot.lane.b32.xlu0 %v3898, 15
      %v4045 = vpop.permute.xlu0 %4044
      %v4046 = vsel %vm524, %v4041, %v4043
      %v4047 = vsel %vm524, %v4043, %v4045
      %v4050 = vsel %vm516, %v4046, 0.0
      %v4051 = vsel %vm517, %v4047, 0.0
      %v4052 = vpack.c.bf16 %v4050, %v4050
      %v4053 = vpack.c.bf16 %v4051, %v4051
      %4054 = vrot.lane.b32.xlu0 %v3974, 112
      %v4055 = vpop.permute.xlu0 %4054
      %v4057 = vsel %vm388, %v4055, 0
      %v4060 = vsel %vm392, %v4052, 0
      %v4063 = vsel %vm392, %v4053, 0
      %4065 = vmatprep.subr.bf16.mxu0 %v4063
      %4066 = vmatpush1.bf16.msra.mxu0 %v4060
      %4067 = vmatprep.subr.bf16.mxu0 0
      %4068 = vmatpush1.bf16.msra.mxu0 0
      %4069 = vmatprep.subr.bf16.mxu0 0
      %4070 = vmatpush1.bf16.msra.mxu0 0
      %4071 = vmatprep.subr.bf16.mxu0 0
      %4072 = vmatpush1.bf16.msra.mxu0 0
      %4073 = vmatprep.subr.bf16.mxu0 0
      %4074 = vmatpush1.bf16.msra.mxu0 0
      %4075 = vmatprep.subr.bf16.mxu0 0
      %4076 = vmatpush1.bf16.msra.mxu0 0
      %4077 = vmatprep.subr.bf16.mxu0 0
      %4078 = vmatpush1.bf16.msra.mxu0 0
      %4079 = vmatprep.subr.bf16.mxu0 0
      %4080 = vmatpush1.bf16.msra.mxu0 0
      %4081 = vmatprep.subr.bf16.mxu0 0
      %4082 = vmatpush1.bf16.msra.mxu0 0
      %4083 = vmatprep.subr.bf16.mxu0 0
      %4084 = vmatpush1.bf16.msra.mxu0 0
      %4085 = vmatprep.subr.bf16.mxu0 0
      %4086 = vmatpush1.bf16.msra.mxu0 0
      %4087 = vmatprep.subr.bf16.mxu0 0
      %4088 = vmatpush1.bf16.msra.mxu0 0
      %4089 = vmatprep.subr.bf16.mxu0 0
      %4090 = vmatpush1.bf16.msra.mxu0 0
      %4091 = vmatprep.subr.bf16.mxu0 0
      %4092 = vmatpush1.bf16.msra.mxu0 0
      %4093 = vmatprep.subr.bf16.mxu0 0
      %4094 = vmatpush1.bf16.msra.mxu0 0
      %4095 = vmatprep.subr.bf16.mxu0 0
      %4096 = vmatpush1.bf16.msra.mxu0 0
      %4097 = vmatprep.mubr.bf16.mxu0 0
      %4098 = vmatmul.mubr.bf16.gmra.mrb[0].mxu0 %v4057
      %v4099 = vpop.f32.mrb[0].mxu0
      %v4100 = vadd.f32 0.0, %v4099
      %v4101 = vpop.f32.mrb[0].mxu0
      %v4102 = vadd.f32 0.0, %v4101
      %v4103 = vpop.f32.mrb[0].mxu0
      %v4104 = vpop.f32.mrb[0].mxu0
      %4105 = vdwg.mxu0
      %v4106 = vadd.f32 %v4038, %v4100
      %v4107 = vadd.f32 %v4039, %v4102
      %4108 = vrot.lane.b32.xlu0 %v3896, 1
      %v4109 = vpop.permute.xlu0 %4108
      %4110 = vrot.lane.b32.xlu0 %v3897, 1
      %v4111 = vpop.permute.xlu0 %4110
      %4112 = vrot.lane.b32.xlu0 %v3898, 1
      %v4113 = vpop.permute.xlu0 %4112
      %v4114 = vsel %vm593, %v4109, %v4111
      %v4115 = vsel %vm593, %v4111, %v4113
      %v4118 = vsel %vm367, %v4114, 0.0
      %v4119 = vsel %vm368, %v4115, 0.0
      %v4120 = vpack.c.bf16 %v4118, %v4118
      %v4121 = vpack.c.bf16 %v4119, %v4119
      %4122 = vrot.lane.b32.xlu0 %v3974, 104
      %v4123 = vpop.permute.xlu0 %4122
      %v4125 = vsel %vm388, %v4123, 0
      %v4128 = vsel %vm392, %v4120, 0
      %v4131 = vsel %vm392, %v4121, 0
      %4133 = vmatprep.subr.bf16.mxu0 %v4131
      %4134 = vmatpush1.bf16.msra.mxu0 %v4128
      %4135 = vmatprep.subr.bf16.mxu0 0
      %4136 = vmatpush1.bf16.msra.mxu0 0
      %4137 = vmatprep.subr.bf16.mxu0 0
      %4138 = vmatpush1.bf16.msra.mxu0 0
      %4139 = vmatprep.subr.bf16.mxu0 0
      %4140 = vmatpush1.bf16.msra.mxu0 0
      %4141 = vmatprep.subr.bf16.mxu0 0
      %4142 = vmatpush1.bf16.msra.mxu0 0
      %4143 = vmatprep.subr.bf16.mxu0 0
      %4144 = vmatpush1.bf16.msra.mxu0 0
      %4145 = vmatprep.subr.bf16.mxu0 0
      %4146 = vmatpush1.bf16.msra.mxu0 0
      %4147 = vmatprep.subr.bf16.mxu0 0
      %4148 = vmatpush1.bf16.msra.mxu0 0
      %4149 = vmatprep.subr.bf16.mxu0 0
      %4150 = vmatpush1.bf16.msra.mxu0 0
      %4151 = vmatprep.subr.bf16.mxu0 0
      %4152 = vmatpush1.bf16.msra.mxu0 0
      %4153 = vmatprep.subr.bf16.mxu0 0
      %4154 = vmatpush1.bf16.msra.mxu0 0
      %4155 = vmatprep.subr.bf16.mxu0 0
      %4156 = vmatpush1.bf16.msra.mxu0 0
      %4157 = vmatprep.subr.bf16.mxu0 0
      %4158 = vmatpush1.bf16.msra.mxu0 0
      %4159 = vmatprep.subr.bf16.mxu0 0
      %4160 = vmatpush1.bf16.msra.mxu0 0
      %4161 = vmatprep.subr.bf16.mxu0 0
      %4162 = vmatpush1.bf16.msra.mxu0 0
      %4163 = vmatprep.subr.bf16.mxu0 0
      %4164 = vmatpush1.bf16.msra.mxu0 0
      %4165 = vmatprep.mubr.bf16.mxu0 0
      %4166 = vmatmul.mubr.bf16.gmra.mrb[0].mxu0 %v4125
      %v4167 = vpop.f32.mrb[0].mxu0
      %v4168 = vadd.f32 0.0, %v4167
      %v4169 = vpop.f32.mrb[0].mxu0
      %v4170 = vadd.f32 0.0, %v4169
      %v4171 = vpop.f32.mrb[0].mxu0
      %v4172 = vpop.f32.mrb[0].mxu0
      %4173 = vdwg.mxu0
      %v4174 = vadd.f32 %v4106, %v4168
      %v4175 = vadd.f32 %v4107, %v4170
      %4176 = vrot.lane.b32.xlu0 %v3974, 96
      %v4177 = vpop.permute.xlu0 %4176
      %v4179 = vsel %vm388, %v4177, 0
      %v4182 = vsel %vm392, %v3970, 0
      %v4185 = vsel %vm392, %v3971, 0
      %4187 = vmatprep.subr.bf16.mxu0 %v4185
      %4188 = vmatpush1.bf16.msra.mxu0 %v4182
      %4189 = vmatprep.subr.bf16.mxu0 0
      %4190 = vmatpush1.bf16.msra.mxu0 0
      %4191 = vmatprep.subr.bf16.mxu0 0
      %4192 = vmatpush1.bf16.msra.mxu0 0
      %4193 = vmatprep.subr.bf16.mxu0 0
      %4194 = vmatpush1.bf16.msra.mxu0 0
      %4195 = vmatprep.subr.bf16.mxu0 0
      %4196 = vmatpush1.bf16.msra.mxu0 0
      %4197 = vmatprep.subr.bf16.mxu0 0
      %4198 = vmatpush1.bf16.msra.mxu0 0
      %4199 = vmatprep.subr.bf16.mxu0 0
      %4200 = vmatpush1.bf16.msra.mxu0 0
      %4201 = vmatprep.subr.bf16.mxu0 0
      %4202 = vmatpush1.bf16.msra.mxu0 0
      %4203 = vmatprep.subr.bf16.mxu0 0
      %4204 = vmatpush1.bf16.msra.mxu0 0
      %4205 = vmatprep.subr.bf16.mxu0 0
      %4206 = vmatpush1.bf16.msra.mxu0 0
      %4207 = vmatprep.subr.bf16.mxu0 0
      %4208 = vmatpush1.bf16.msra.mxu0 0
      %4209 = vmatprep.subr.bf16.mxu0 0
      %4210 = vmatpush1.bf16.msra.mxu0 0
      %4211 = vmatprep.subr.bf16.mxu0 0
      %4212 = vmatpush1.bf16.msra.mxu0 0
      %4213 = vmatprep.subr.bf16.mxu0 0
      %4214 = vmatpush1.bf16.msra.mxu0 0
      %4215 = vmatprep.subr.bf16.mxu0 0
      %4216 = vmatpush1.bf16.msra.mxu0 0
      %4217 = vmatprep.subr.bf16.mxu0 0
      %4218 = vmatpush1.bf16.msra.mxu0 0
      %4219 = vmatprep.mubr.bf16.mxu0 0
      %4220 = vmatmul.mubr.bf16.gmra.mrb[0].mxu0 %v4179
      %v4221 = vpop.f32.mrb[0].mxu0
      %v4222 = vadd.f32 0.0, %v4221
      %v4223 = vpop.f32.mrb[0].mxu0
      %v4224 = vadd.f32 0.0, %v4223
      %v4225 = vpop.f32.mrb[0].mxu0
      %v4226 = vpop.f32.mrb[0].mxu0
      %4227 = vdwg.mxu0
      %v4228 = vadd.f32 %v4174, %v4222
      %v4229 = vadd.f32 %v4175, %v4224
      %v4230 = vld [vmem:[#allocation2 + $0x8] sm:$0xff]
      %v4231 = vld [vmem:[#allocation2 + $0x10] sm:$0xff]
      %v4232 = vld [vmem:[#allocation2 + $0x18] sm:$0xff]
      %4236 = vrot.lane.b32.xlu0 %v4230, 127
      %v4237 = vpop.permute.xlu0 %4236
      %4238 = vrot.lane.b32.xlu0 %v4231, 127
      %v4239 = vpop.permute.xlu0 %4238
      %4240 = vrot.lane.b32.xlu0 %v4232, 127
      %v4241 = vpop.permute.xlu0 %4240
      %v4242 = vsel %vm722, %v4237, %v4239
      %v4243 = vsel %vm722, %v4239, %v4241
      %v4246 = vsel %vm516, %v4242, 0.0
      %v4247 = vsel %vm517, %v4243, 0.0
      %v4248 = vpack.c.bf16 %v4246, %v4246
      %v4249 = vpack.c.bf16 %v4247, %v4247
      %4250 = vrot.lane.b32.xlu0 %v3974, 88
      %v4251 = vpop.permute.xlu0 %4250
      %v4253 = vsel %vm388, %v4251, 0
      %v4256 = vsel %vm392, %v4248, 0
      %v4259 = vsel %vm392, %v4249, 0
      %4261 = vmatprep.subr.bf16.mxu0 %v4259
      %4262 = vmatpush1.bf16.msra.mxu0 %v4256
      %4263 = vmatprep.subr.bf16.mxu0 0
      %4264 = vmatpush1.bf16.msra.mxu0 0
      %4265 = vmatprep.subr.bf16.mxu0 0
      %4266 = vmatpush1.bf16.msra.mxu0 0
      %4267 = vmatprep.subr.bf16.mxu0 0
      %4268 = vmatpush1.bf16.msra.mxu0 0
      %4269 = vmatprep.subr.bf16.mxu0 0
      %4270 = vmatpush1.bf16.msra.mxu0 0
      %4271 = vmatprep.subr.bf16.mxu0 0
      %4272 = vmatpush1.bf16.msra.mxu0 0
      %4273 = vmatprep.subr.bf16.mxu0 0
      %4274 = vmatpush1.bf16.msra.mxu0 0
      %4275 = vmatprep.subr.bf16.mxu0 0
      %4276 = vmatpush1.bf16.msra.mxu0 0
      %4277 = vmatprep.subr.bf16.mxu0 0
      %4278 = vmatpush1.bf16.msra.mxu0 0
      %4279 = vmatprep.subr.bf16.mxu0 0
      %4280 = vmatpush1.bf16.msra.mxu0 0
      %4281 = vmatprep.subr.bf16.mxu0 0
      %4282 = vmatpush1.bf16.msra.mxu0 0
      %4283 = vmatprep.subr.bf16.mxu0 0
      %4284 = vmatpush1.bf16.msra.mxu0 0
      %4285 = vmatprep.subr.bf16.mxu0 0
      %4286 = vmatpush1.bf16.msra.mxu0 0
      %4287 = vmatprep.subr.bf16.mxu0 0
      %4288 = vmatpush1.bf16.msra.mxu0 0
      %4289 = vmatprep.subr.bf16.mxu0 0
      %4290 = vmatpush1.bf16.msra.mxu0 0
      %4291 = vmatprep.subr.bf16.mxu0 0
      %4292 = vmatpush1.bf16.msra.mxu0 0
      %4293 = vmatprep.mubr.bf16.mxu0 0
      %4294 = vmatmul.mubr.bf16.gmra.mrb[0].mxu0 %v4253
      %v4295 = vpop.f32.mrb[0].mxu0
      %v4296 = vadd.f32 0.0, %v4295
      %v4297 = vpop.f32.mrb[0].mxu0
      %v4298 = vadd.f32 0.0, %v4297
      %v4299 = vpop.f32.mrb[0].mxu0
      %v4300 = vpop.f32.mrb[0].mxu0
      %4301 = vdwg.mxu0
      %v4302 = vadd.f32 %v4228, %v4296
      %v4303 = vadd.f32 %v4229, %v4298
      %4304 = vrot.lane.b32.xlu0 %v4230, 113
      %v4305 = vpop.permute.xlu0 %4304
      %4306 = vrot.lane.b32.xlu0 %v4231, 113
      %v4307 = vpop.permute.xlu0 %4306
      %4308 = vrot.lane.b32.xlu0 %v4232, 113
      %v4309 = vpop.permute.xlu0 %4308
      %v4310 = vsel %vm791, %v4305, %v4307
      %v4311 = vsel %vm791, %v4307, %v4309
      %v4314 = vsel %vm367, %v4310, 0.0
      %v4315 = vsel %vm368, %v4311, 0.0
      %v4316 = vpack.c.bf16 %v4314, %v4314
      %v4317 = vpack.c.bf16 %v4315, %v4315
      %4318 = vrot.lane.b32.xlu0 %v3974, 80
      %v4319 = vpop.permute.xlu0 %4318
      %v4321 = vsel %vm388, %v4319, 0
      %v4324 = vsel %vm392, %v4316, 0
      %v4327 = vsel %vm392, %v4317, 0
      %4329 = vmatprep.subr.bf16.mxu0 %v4327
      %4330 = vmatpush1.bf16.msra.mxu0 %v4324
      %4331 = vmatprep.subr.bf16.mxu0 0
      %4332 = vmatpush1.bf16.msra.mxu0 0
      %4333 = vmatprep.subr.bf16.mxu0 0
      %4334 = vmatpush1.bf16.msra.mxu0 0
      %4335 = vmatprep.subr.bf16.mxu0 0
      %4336 = vmatpush1.bf16.msra.mxu0 0
      %4337 = vmatprep.subr.bf16.mxu0 0
      %4338 = vmatpush1.bf16.msra.mxu0 0
      %4339 = vmatprep.subr.bf16.mxu0 0
      %4340 = vmatpush1.bf16.msra.mxu0 0
      %4341 = vmatprep.subr.bf16.mxu0 0
      %4342 = vmatpush1.bf16.msra.mxu0 0
      %4343 = vmatprep.subr.bf16.mxu0 0
      %4344 = vmatpush1.bf16.msra.mxu0 0
      %4345 = vmatprep.subr.bf16.mxu0 0
      %4346 = vmatpush1.bf16.msra.mxu0 0
      %4347 = vmatprep.subr.bf16.mxu0 0
      %4348 = vmatpush1.bf16.msra.mxu0 0
      %4349 = vmatprep.subr.bf16.mxu0 0
      %4350 = vmatpush1.bf16.msra.mxu0 0
      %4351 = vmatprep.subr.bf16.mxu0 0
      %4352 = vmatpush1.bf16.msra.mxu0 0
      %4353 = vmatprep.subr.bf16.mxu0 0
      %4354 = vmatpush1.bf16.msra.mxu0 0
      %4355 = vmatprep.subr.bf16.mxu0 0
      %4356 = vmatpush1.bf16.msra.mxu0 0
      %4357 = vmatprep.subr.bf16.mxu0 0
      %4358 = vmatpush1.bf16.msra.mxu0 0
      %4359 = vmatprep.subr.bf16.mxu0 0
      %4360 = vmatpush1.bf16.msra.mxu0 0
      %4361 = vmatprep.mubr.bf16.mxu0 0
      %4362 = vmatmul.mubr.bf16.gmra.mrb[0].mxu0 %v4321
      %v4363 = vpop.f32.mrb[0].mxu0
      %v4364 = vadd.f32 0.0, %v4363
      %v4365 = vpop.f32.mrb[0].mxu0
      %v4366 = vadd.f32 0.0, %v4365
      %v4367 = vpop.f32.mrb[0].mxu0
      %v4368 = vpop.f32.mrb[0].mxu0
      %4369 = vdwg.mxu0
      %v4370 = vadd.f32 %v4302, %v4364
      %v4371 = vadd.f32 %v4303, %v4366
      %v4372 = vpack.c.bf16 %v4230, %v4230
      %v4373 = vpack.c.bf16 %v4231, %v4231
      %v4374 = vpack.c.bf16 %v4232, %v4232
      %4375 = vrot.lane.b32.xlu0 %v3974, 72
      %v4376 = vpop.permute.xlu0 %4375
      %4380 = vrot.lane.b32.xlu0 %v4372, 112
      %v4381 = vpop.permute.xlu0 %4380
      %4382 = vrot.lane.b32.xlu0 %v4373, 112
      %v4383 = vpop.permute.xlu0 %4382
      %4384 = vrot.lane.b32.xlu0 %v4374, 112
      %v4385 = vpop.permute.xlu0 %4384
      %v4386 = vsel %vm868, %v4381, %v4383
      %v4387 = vsel %vm868, %v4383, %v4385
      %v4389 = vsel %vm388, %v4376, 0
      %v4392 = vsel %vm392, %v4386, 0
      %v4395 = vsel %vm392, %v4387, 0
      %4397 = vmatprep.subr.bf16.mxu0 %v4395
      %4398 = vmatpush1.bf16.msra.mxu0 %v4392
      %4399 = vmatprep.subr.bf16.mxu0 0
      %4400 = vmatpush1.bf16.msra.mxu0 0
      %4401 = vmatprep.subr.bf16.mxu0 0
      %4402 = vmatpush1.bf16.msra.mxu0 0
      %4403 = vmatprep.subr.bf16.mxu0 0
      %4404 = vmatpush1.bf16.msra.mxu0 0
      %4405 = vmatprep.subr.bf16.mxu0 0
      %4406 = vmatpush1.bf16.msra.mxu0 0
      %4407 = vmatprep.subr.bf16.mxu0 0
      %4408 = vmatpush1.bf16.msra.mxu0 0
      %4409 = vmatprep.subr.bf16.mxu0 0
      %4410 = vmatpush1.bf16.msra.mxu0 0
      %4411 = vmatprep.subr.bf16.mxu0 0
      %4412 = vmatpush1.bf16.msra.mxu0 0
      %4413 = vmatprep.subr.bf16.mxu0 0
      %4414 = vmatpush1.bf16.msra.mxu0 0
      %4415 = vmatprep.subr.bf16.mxu0 0
      %4416 = vmatpush1.bf16.msra.mxu0 0
      %4417 = vmatprep.subr.bf16.mxu0 0
      %4418 = vmatpush1.bf16.msra.mxu0 0
      %4419 = vmatprep.subr.bf16.mxu0 0
      %4420 = vmatpush1.bf16.msra.mxu0 0
      %4421 = vmatprep.subr.bf16.mxu0 0
      %4422 = vmatpush1.bf16.msra.mxu0 0
      %4423 = vmatprep.subr.bf16.mxu0 0
      %4424 = vmatpush1.bf16.msra.mxu0 0
      %4425 = vmatprep.subr.bf16.mxu0 0
      %4426 = vmatpush1.bf16.msra.mxu0 0
      %4427 = vmatprep.subr.bf16.mxu0 0
      %4428 = vmatpush1.bf16.msra.mxu0 0
      %4429 = vmatprep.mubr.bf16.mxu0 0
      %4430 = vmatmul.mubr.bf16.gmra.mrb[0].mxu0 %v4389
      %v4431 = vpop.f32.mrb[0].mxu0
      %v4432 = vadd.f32 0.0, %v4431
      %v4433 = vpop.f32.mrb[0].mxu0
      %v4434 = vadd.f32 0.0, %v4433
      %v4435 = vpop.f32.mrb[0].mxu0
      %v4436 = vpop.f32.mrb[0].mxu0
      %4437 = vdwg.mxu0
      %v4438 = vadd.f32 %v4370, %v4432
      %v4439 = vadd.f32 %v4371, %v4434
      %4440 = vrot.lane.b32.xlu0 %v4230, 111
      %v4441 = vpop.permute.xlu0 %4440
      %4442 = vrot.lane.b32.xlu0 %v4231, 111
      %v4443 = vpop.permute.xlu0 %4442
      %4444 = vrot.lane.b32.xlu0 %v4232, 111
      %v4445 = vpop.permute.xlu0 %4444
      %v4446 = vsel %vm929, %v4441, %v4443
      %v4447 = vsel %vm929, %v4443, %v4445
      %v4450 = vsel %vm516, %v4446, 0.0
      %v4451 = vsel %vm517, %v4447, 0.0
      %v4452 = vpack.c.bf16 %v4450, %v4450
      %v4453 = vpack.c.bf16 %v4451, %v4451
      %4454 = vrot.lane.b32.xlu0 %v3974, 64
      %v4455 = vpop.permute.xlu0 %4454
      %v4457 = vsel %vm388, %v4455, 0
      %v4460 = vsel %vm392, %v4452, 0
      %v4463 = vsel %vm392, %v4453, 0
      %4465 = vmatprep.subr.bf16.mxu0 %v4463
      %4466 = vmatpush1.bf16.msra.mxu0 %v4460
      %4467 = vmatprep.subr.bf16.mxu0 0
      %4468 = vmatpush1.bf16.msra.mxu0 0
      %4469 = vmatprep.subr.bf16.mxu0 0
      %4470 = vmatpush1.bf16.msra.mxu0 0
      %4471 = vmatprep.subr.bf16.mxu0 0
      %4472 = vmatpush1.bf16.msra.mxu0 0
      %4473 = vmatprep.subr.bf16.mxu0 0
      %4474 = vmatpush1.bf16.msra.mxu0 0
      %4475 = vmatprep.subr.bf16.mxu0 0
      %4476 = vmatpush1.bf16.msra.mxu0 0
      %4477 = vmatprep.subr.bf16.mxu0 0
      %4478 = vmatpush1.bf16.msra.mxu0 0
      %4479 = vmatprep.subr.bf16.mxu0 0
      %4480 = vmatpush1.bf16.msra.mxu0 0
      %4481 = vmatprep.subr.bf16.mxu0 0
      %4482 = vmatpush1.bf16.msra.mxu0 0
      %4483 = vmatprep.subr.bf16.mxu0 0
      %4484 = vmatpush1.bf16.msra.mxu0 0
      %4485 = vmatprep.subr.bf16.mxu0 0
      %4486 = vmatpush1.bf16.msra.mxu0 0
      %4487 = vmatprep.subr.bf16.mxu0 0
      %4488 = vmatpush1.bf16.msra.mxu0 0
      %4489 = vmatprep.subr.bf16.mxu0 0
      %4490 = vmatpush1.bf16.msra.mxu0 0
      %4491 = vmatprep.subr.bf16.mxu0 0
      %4492 = vmatpush1.bf16.msra.mxu0 0
      %4493 = vmatprep.subr.bf16.mxu0 0
      %4494 = vmatpush1.bf16.msra.mxu0 0
      %4495 = vmatprep.subr.bf16.mxu0 0
      %4496 = vmatpush1.bf16.msra.mxu0 0
      %4497 = vmatprep.mubr.bf16.mxu0 0
      %4498 = vmatmul.mubr.bf16.gmra.mrb[0].mxu0 %v4457
      %v4499 = vpop.f32.mrb[0].mxu0
      %v4500 = vadd.f32 0.0, %v4499
      %v4501 = vpop.f32.mrb[0].mxu0
      %v4502 = vadd.f32 0.0, %v4501
      %v4503 = vpop.f32.mrb[0].mxu0
      %v4504 = vpop.f32.mrb[0].mxu0
      %4505 = vdwg.mxu0
      %v4506 = vadd.f32 %v4438, %v4500
      %v4507 = vadd.f32 %v4439, %v4502
      %v4508 = vmax.f32 %v4506, 0.0
      %v4509 = vmax.f32 %v4507, 0.0
      %4510 = vst [vmem:[%s305] sm:$0xff] %v4508
      %4511 = vst [vmem:[%s305 + $0x8] sm:$0xff] %v4509
      %p4512 = scmp.lt.s32.totalorder %s19, 1
      %s4513 = scalar_select %p4512, %s19, 1
      %s4514 = smul.addr %s4513, 2
      %s4515 = smul.addr %s4514, 8
      %s4516 = scalar_lea.vmem %s8, %s4515
      // Predicated region
      $region53: #{bottleneck_forward.1} parent=51 // pred_check
        %p4517 = pneg %p210
      $region54: #{bottleneck_forward.1} parent=51 // pred_check_branch
        %4519 = sbr.rel (%p4517) target = $region56
      $region55: #{bottleneck_forward.1} parent=51 // pred_region
        _
      $region56: #{bottleneck_forward.1} parent=51 // pred_fallthru
        _
    $region52: #{bottleneck_forward.1} parent=5 // pred_fallthru
      _
    %p4520 = scmp.le.s32.totalorder 2, %s14
    // Predicated region
    $region57: #{bottleneck_forward.1} parent=5 // pred_check
      %p4521 = pneg %p4520
    $region58: #{bottleneck_forward.1} parent=5 // pred_check_branch
      %4523 = sbr.rel (%p4521) target = $region60
    $region59: #{bottleneck_forward.1} parent=5 // pred_region
      %s4524 = ssub.s32 %s14, 2
      // Predicated region
      $region61: #{bottleneck_forward.1} parent=59 // pred_check
        %p4525 = pneg %p216
      $region62: #{bottleneck_forward.1} parent=59 // pred_check_branch
        %4527 = sbr.rel (%p4525) target = $region64
      $region63: #{bottleneck_forward.1} parent=59 // pred_region
        %p4528 = scmp.lt.s32.totalorder %s20, 1
        %s4529 = scalar_select %p4528, %s20, 1
        %s4530 = smul.addr %s4529, 2
        %s4531 = smul.addr %s4530, 8
        %s4532 = scalar_lea.vmem %s8, %s4531
      $region64: #{bottleneck_forward.1} parent=59 // pred_fallthru
        _
    $region60: #{bottleneck_forward.1} parent=5 // pred_fallthru
      _
  $region6: #{bottleneck_forward.1} parent=0 // loop_footer
    %s18 = sadd.s32 1, %s14
  $region7: #{bottleneck_forward.1} parent=0 // loop_footer_branch
    %13 = sbr.rel target = $region3
  $region8: #{bottleneck_forward.1} parent=0 // loop_exit
    _

</llo_original>
